<compile_context>
chip_gen: v7x
topology: tpu7x:2x2x1
jax: 0.10.0
libtpu: 0.0.40
codegen_flags: <defaults>
</compile_context>

<pallas_src>
import jax
import jax.numpy as jnp
from jax.experimental import pallas as pl
from jax.experimental.pallas import tpu as pltpu


def _round_up(x, m):
    return (x + m - 1) // m * m


def _decoder_kernel(z_ref, y_ref, w1z_ref, w1y_ref, b1_ref, w2_ref, b2_ref,
                    out_ref):
    # z_ref: (bm, Z) f32, y_ref: (bm, Y) f32
    # w1z_ref: (Z, Hp), w1y_ref: (Y, Hp)  (matmul dtype, hidden lane-padded)
    # b1_ref: (1, Hp) f32, w2_ref: (Hp, O), b2_ref: (1, O) f32
    # out_ref: (bm, O)
    mm_dtype = w1z_ref.dtype

    # fc1 on concat([z, y]) split algebraically: z @ W1[:Z] + y @ W1[Z:]
    # (the (B, Z+Y) concat is never materialized in HBM).
    h = jnp.dot(z_ref[...].astype(mm_dtype), w1z_ref[...],
                preferred_element_type=jnp.float32)
    h = h + jnp.dot(y_ref[...].astype(mm_dtype), w1y_ref[...],
                    preferred_element_type=jnp.float32)
    h = h + b1_ref[...]
    # Numerically stable softplus in f32 (VPU + EUP).
    h = jnp.maximum(h, 0.0) + jnp.log1p(jnp.exp(-jnp.abs(h)))

    # fc2 + sigmoid.  Padded hidden lanes carry softplus(0)=log2 but multiply
    # zero W2 rows, so they contribute exactly zero.
    o = jnp.dot(h.astype(w2_ref.dtype), w2_ref[...],
                preferred_element_type=jnp.float32)
    o = o + b2_ref[...]
    out_ref[...] = jax.nn.sigmoid(o).astype(out_ref.dtype)


def init_decoder_params(w1, b1, w2, b2, z_dim, *, matmul_dtype=jnp.bfloat16):
    """One-time weight preparation (do this at module init, not per forward).

    Parameter layout (transposed vs. PyTorch nn.Linear):
      w1: (z_dim + y_dim, h_sz), b1: (h_sz,), w2: (h_sz, out_sz), b2: (out_sz,)
    """
    f32 = jnp.float32
    in_sz, h_sz = w1.shape
    h_sz2, out_sz = w2.shape
    assert h_sz == h_sz2 and 0 < z_dim < in_sz

    hp = _round_up(h_sz, 128)                       # lane-pad hidden dim
    w1p = jnp.pad(w1, ((0, 0), (0, hp - h_sz))).astype(matmul_dtype)
    b1p = jnp.pad(b1.astype(f32).reshape(1, h_sz), ((0, 0), (0, hp - h_sz)))
    w2p = jnp.pad(w2, ((0, hp - h_sz), (0, 0))).astype(matmul_dtype)
    b2p = b2.astype(f32).reshape(1, out_sz)

    return dict(
        w1z=w1p[:z_dim], w1y=w1p[z_dim:], b1=b1p, w2=w2p, b2=b2p,
        z_dim=z_dim, y_dim=in_sz - z_dim, h_pad=hp, out_sz=out_sz,
    )


def decoder_forward(params, z, y, *, block_m=512, out_dtype=jnp.float32):
    """Pallas implementation of Decoder.forward(z, y) using prepared params."""
    B, Z = z.shape
    By, Y = y.shape
    assert B == By, "z and y must share the batch dimension"
    assert Z == params["z_dim"] and Y == params["y_dim"]
    hp, out_sz = params["h_pad"], params["out_sz"]

    # Single grid step for small batches (no duplicate W2 push, no per-step
    # overhead); tile over M only when the batch is large.
    block_m = max(8, min(block_m, _round_up(B, 8)))
    bp = _round_up(B, block_m)
    zc, yc = z, y
    if bp != B:
        zc = jnp.pad(zc, ((0, bp - B), (0, 0)))
        yc = jnp.pad(yc, ((0, bp - B), (0, 0)))
    grid = (bp // block_m,)

    out = pl.pallas_call(
        _decoder_kernel,
        out_shape=jax.ShapeDtypeStruct((bp, out_sz), out_dtype),
        grid=grid,
        in_specs=[
            pl.BlockSpec((block_m, Z), lambda i: (i, 0)),   # z tile (streamed)
            pl.BlockSpec((block_m, Y), lambda i: (i, 0)),   # y tile (streamed)
            pl.BlockSpec((Z, hp), lambda i: (0, 0)),        # W1[:Z] (resident)
            pl.BlockSpec((Y, hp), lambda i: (0, 0)),        # W1[Z:] (resident)
            pl.BlockSpec((1, hp), lambda i: (0, 0)),        # b1     (resident)
            pl.BlockSpec((hp, out_sz), lambda i: (0, 0)),   # W2     (resident)
            pl.BlockSpec((1, out_sz), lambda i: (0, 0)),    # b2     (resident)
        ],
        out_specs=pl.BlockSpec((block_m, out_sz), lambda i: (i, 0)),
        compiler_params=pltpu.CompilerParams(
            dimension_semantics=("parallel",)),
    )(zc, yc, params["w1z"], params["w1y"], params["b1"], params["w2"],
      params["b2"])

    return out if bp == B else out[:B]


def decoder_reference(z, y, w1, b1, w2, b2):
    inp = jnp.concatenate([z, y], axis=1)
    h = jax.nn.softplus(inp @ w1 + b1)
    return jax.nn.sigmoid(h @ w2 + b2)


if __name__ == "__main__":
    # Module-default feature sizes (z_dim=50, y_dim=10, h=500, out=784),
    # small batch -> grid=(1,).
    B, Z_DIM, Y_DIM, H_SZ, OUT_SZ = 128, 50, 10, 500, 784
    IN_SZ = Z_DIM + Y_DIM

    key = jax.random.PRNGKey(0)
    kz, ky, kw1, kb1, kw2, kb2 = jax.random.split(key, 6)

    z = jax.random.normal(kz, (B, Z_DIM), dtype=jnp.float32)
    y = jax.random.normal(ky, (B, Y_DIM), dtype=jnp.float32)

    s1 = 1.0 / (IN_SZ ** 0.5)
    s2 = 1.0 / (H_SZ ** 0.5)
    w1 = jax.random.normal(kw1, (IN_SZ, H_SZ), dtype=jnp.float32) * s1
    b1 = jax.random.normal(kb1, (H_SZ,), dtype=jnp.float32) * s1
    w2 = jax.random.normal(kw2, (H_SZ, OUT_SZ), dtype=jnp.float32) * s2
    b2 = jax.random.normal(kb2, (OUT_SZ,), dtype=jnp.float32) * s2

    ref = decoder_reference(z, y, w1, b1, w2, b2)

    # Default path: persistent bf16 weights (MXU-native), f32 epilogue/output.
    params_bf16 = init_decoder_params(w1, b1, w2, b2, Z_DIM)
    out = jax.block_until_ready(decoder_forward(params_bf16, z, y))
    assert out.shape == (B, OUT_SZ)
    assert jnp.allclose(out, ref, atol=5e-2, rtol=5e-2), "bf16 path mismatch"

    # f32-stored-weights path (note: MXU still runs at default precision).
    params_f32 = init_decoder_params(w1, b1, w2, b2, Z_DIM,
                                     matmul_dtype=jnp.float32)
    out_f32 = jax.block_until_ready(decoder_forward(params_f32, z, y))
    assert out_f32.shape == (B, OUT_SZ)
    assert jnp.allclose(out_f32, ref, atol=2e-3, rtol=2e-3), "f32 path mismatch"

    print("KERNEL_OK")
</pallas_src>

<mosaic_0001>
module attributes {stable_mosaic.version = 11 : i64} {
  func.func @_decoder_kernel(%arg0: i32, %arg1: memref<128x50xf32, #tpu.memory_space<vmem>>, %arg2: memref<128x10xf32, #tpu.memory_space<vmem>>, %arg3: memref<50x512xbf16, #tpu.memory_space<vmem>>, %arg4: memref<10x512xbf16, #tpu.memory_space<vmem>>, %arg5: memref<1x512xf32, #tpu.memory_space<vmem>>, %arg6: memref<512x784xbf16, #tpu.memory_space<vmem>>, %arg7: memref<1x784xf32, #tpu.memory_space<vmem>>, %arg8: memref<128x784xf32, #tpu.memory_space<vmem>>) attributes {dimension_semantics = [#tpu.dimension_semantics<parallel>], iteration_bounds = array<i64: 1>, scalar_prefetch = 0 : i64, scratch_operands = 0 : i64, tpu.core_type = #tpu.core_type<tc>, window_params = [{transform_indices = @transform_0, window_bounds = array<i64: 128, 50>}, {transform_indices = @transform_1, window_bounds = array<i64: 128, 10>}, {pipeline_mode = #tpu.pipeline_mode<synchronous>, transform_indices = @transform_2, window_bounds = array<i64: 50, 512>}, {pipeline_mode = #tpu.pipeline_mode<synchronous>, transform_indices = @transform_3, window_bounds = array<i64: 10, 512>}, {pipeline_mode = #tpu.pipeline_mode<synchronous>, transform_indices = @transform_4, window_bounds = array<i64: 1, 512>}, {pipeline_mode = #tpu.pipeline_mode<synchronous>, transform_indices = @transform_5, window_bounds = array<i64: 512, 784>}, {pipeline_mode = #tpu.pipeline_mode<synchronous>, transform_indices = @transform_6, window_bounds = array<i64: 1, 784>}, {transform_indices = @transform_7, window_bounds = array<i64: 128, 784>}]} {
    %c0 = arith.constant 0 : index
    %c0_0 = arith.constant 0 : index
    %0 = vector.load %arg1[%c0, %c0_0] : memref<128x50xf32, #tpu.memory_space<vmem>>, vector<128x50xf32>
    %1 = arith.truncf %0 : vector<128x50xf32> to vector<128x50xbf16>
    %c0_1 = arith.constant 0 : index
    %c0_2 = arith.constant 0 : index
    %2 = vector.load %arg3[%c0_1, %c0_2] : memref<50x512xbf16, #tpu.memory_space<vmem>>, vector<50x512xbf16>
    %cst = arith.constant dense<0.000000e+00> : vector<128x512xf32>
    %3 = tpu.matmul %1, %2, %cst {dimension_numbers = #tpu.dot_dimension_numbers<[1], [0], [0], [1], [0, 0, 1, 1], [], []>} : vector<128x50xbf16>, vector<50x512xbf16>, vector<128x512xf32> -> vector<128x512xf32>
    %c0_3 = arith.constant 0 : index
    %c0_4 = arith.constant 0 : index
    %4 = vector.load %arg2[%c0_3, %c0_4] : memref<128x10xf32, #tpu.memory_space<vmem>>, vector<128x10xf32>
    %5 = arith.truncf %4 : vector<128x10xf32> to vector<128x10xbf16>
    %c0_5 = arith.constant 0 : index
    %c0_6 = arith.constant 0 : index
    %6 = vector.load %arg4[%c0_5, %c0_6] : memref<10x512xbf16, #tpu.memory_space<vmem>>, vector<10x512xbf16>
    %cst_7 = arith.constant dense<0.000000e+00> : vector<128x512xf32>
    %7 = tpu.matmul %5, %6, %cst_7 {dimension_numbers = #tpu.dot_dimension_numbers<[1], [0], [0], [1], [0, 0, 1, 1], [], []>} : vector<128x10xbf16>, vector<10x512xbf16>, vector<128x512xf32> -> vector<128x512xf32>
    %8 = arith.addf %3, %7 : vector<128x512xf32>
    %c0_8 = arith.constant 0 : index
    %c0_9 = arith.constant 0 : index
    %9 = vector.load %arg5[%c0_8, %c0_9] : memref<1x512xf32, #tpu.memory_space<vmem>>, vector<1x512xf32>
    %10 = vector.broadcast %9 : vector<1x512xf32> to vector<128x512xf32>
    %11 = arith.addf %8, %10 : vector<128x512xf32>
    %cst_10 = arith.constant 0.000000e+00 : f32
    %12 = vector.broadcast %cst_10 : f32 to vector<128x512xf32>
    %13 = arith.maximumf %11, %12 : vector<128x512xf32>
    %14 = math.absf %11 : vector<128x512xf32>
    %cst_11 = arith.constant 0.000000e+00 : f32
    %15 = vector.broadcast %cst_11 : f32 to vector<128x512xf32>
    %16 = arith.subf %15, %14 : vector<128x512xf32>
    %17 = math.exp %16 : vector<128x512xf32>
    %18 = math.log1p %17 : vector<128x512xf32>
    %19 = arith.addf %13, %18 : vector<128x512xf32>
    %20 = arith.truncf %19 : vector<128x512xf32> to vector<128x512xbf16>
    %c0_12 = arith.constant 0 : index
    %c0_13 = arith.constant 0 : index
    %21 = vector.load %arg6[%c0_12, %c0_13] : memref<512x784xbf16, #tpu.memory_space<vmem>>, vector<512x784xbf16>
    %cst_14 = arith.constant dense<0.000000e+00> : vector<128x784xf32>
    %22 = tpu.matmul %20, %21, %cst_14 {dimension_numbers = #tpu.dot_dimension_numbers<[1], [0], [0], [1], [0, 0, 1, 1], [], []>} : vector<128x512xbf16>, vector<512x784xbf16>, vector<128x784xf32> -> vector<128x784xf32>
    %c0_15 = arith.constant 0 : index
    %c0_16 = arith.constant 0 : index
    %23 = vector.load %arg7[%c0_15, %c0_16] : memref<1x784xf32, #tpu.memory_space<vmem>>, vector<1x784xf32>
    %24 = vector.broadcast %23 : vector<1x784xf32> to vector<128x784xf32>
    %25 = arith.addf %22, %24 : vector<128x784xf32>
    %26 = arith.negf %25 : vector<128x784xf32>
    %27 = math.exp %26 : vector<128x784xf32>
    %cst_17 = arith.constant 1.000000e+00 : f32
    %28 = vector.broadcast %cst_17 : f32 to vector<128x784xf32>
    %29 = arith.addf %28, %27 : vector<128x784xf32>
    %30 = arith.divf %28, %29 : vector<128x784xf32>
    %c0_18 = arith.constant 0 : index
    %c0_19 = arith.constant 0 : index
    %31 = vector.load %arg8[%c0_18, %c0_19] : memref<128x784xf32, #tpu.memory_space<vmem>>, vector<128x784xf32>
    tpu.vector_store %arg8[%c0_18, %c0_19], %30 {strides = array<i32>} : memref<128x784xf32, #tpu.memory_space<vmem>>, vector<128x784xf32>,
    return
  }
  func.func @transform_0(%arg0: i32) -> (i32, i32) {
    %c0_i32 = arith.constant 0 : i32
    %c0_i32_0 = arith.constant 0 : i32
    return %arg0, %c0_i32 : i32, i32
  }
  func.func @transform_1(%arg0: i32) -> (i32, i32) {
    %c0_i32 = arith.constant 0 : i32
    %c0_i32_0 = arith.constant 0 : i32
    return %arg0, %c0_i32 : i32, i32
  }
  func.func @transform_2(%arg0: i32) -> (i32, i32) {
    %c0_i32 = arith.constant 0 : i32
    %c0_i32_0 = arith.constant 0 : i32
    %c0_i32_1 = arith.constant 0 : i32
    return %c0_i32, %c0_i32_0 : i32, i32
  }
  func.func @transform_3(%arg0: i32) -> (i32, i32) {
    %c0_i32 = arith.constant 0 : i32
    %c0_i32_0 = arith.constant 0 : i32
    %c0_i32_1 = arith.constant 0 : i32
    return %c0_i32, %c0_i32_0 : i32, i32
  }
  func.func @transform_4(%arg0: i32) -> (i32, i32) {
    %c0_i32 = arith.constant 0 : i32
    %c0_i32_0 = arith.constant 0 : i32
    %c0_i32_1 = arith.constant 0 : i32
    return %c0_i32, %c0_i32_0 : i32, i32
  }
  func.func @transform_5(%arg0: i32) -> (i32, i32) {
    %c0_i32 = arith.constant 0 : i32
    %c0_i32_0 = arith.constant 0 : i32
    %c0_i32_1 = arith.constant 0 : i32
    return %c0_i32, %c0_i32_0 : i32, i32
  }
  func.func @transform_6(%arg0: i32) -> (i32, i32) {
    %c0_i32 = arith.constant 0 : i32
    %c0_i32_0 = arith.constant 0 : i32
    %c0_i32_1 = arith.constant 0 : i32
    return %c0_i32, %c0_i32_0 : i32, i32
  }
  func.func @transform_7(%arg0: i32) -> (i32, i32) {
    %c0_i32 = arith.constant 0 : i32
    %c0_i32_0 = arith.constant 0 : i32
    return %arg0, %c0_i32 : i32, i32
  }
}

</mosaic_0001>

<llo_original>
// kernel: tpu_custom_call.1
$region0: #{tpu_custom_call.1}
  #allocation0 [shape = 'u32[]', space=smem, size = 0x4, offset = 0x4, fixed_abs, tag = 'smem constant byte address 0x4 - core index']
  #allocation1 [shape = 'u32[144,128]{1,0:T(1,128)}', space=vmem, size = 0x12000, scoped, tag = 'internal scratch']
  %s0 = inlined_call_operand.vmem [shape: f32[128,50], index: 0, kind: input, shape index: {}]
  %s1 = inlined_call_operand.vmem [shape: f32[128,10], index: 1, kind: input, shape index: {}]
  %s2 = inlined_call_operand.vmem [shape: bf16[50,512], index: 2, kind: input, shape index: {}]
  %s3 = inlined_call_operand.vmem [shape: bf16[10,512], index: 3, kind: input, shape index: {}]
  %s4 = inlined_call_operand.vmem [shape: f32[1,512], index: 4, kind: input, shape index: {}]
  %s5 = inlined_call_operand.vmem [shape: bf16[512,784], index: 5, kind: input, shape index: {}]
  %s6 = inlined_call_operand.vmem [shape: f32[1,784], index: 6, kind: input, shape index: {}]
  %s7 = inlined_call_operand.vmem [shape: f32[128,784], index: 7, kind: output, shape index: {}]
  %s8 = sld [smem:[#allocation0]]
  $region38: #{tpu_custom_call.1} parent=0
    _
  %s10 = ssub.s32 1, %s8
  %s11 = scalar_select 0, %s10, %s8
  // Predicated region
  $region2: #{tpu_custom_call.1} parent=0 // pred_check
    _
  $region3: #{tpu_custom_call.1} parent=0 // pred_check_branch
    %13 = sbr.rel (0) target = $region5
  $region4: #{tpu_custom_call.1} parent=0 // pred_region
    _
  $region5: #{tpu_custom_call.1} parent=0 // pred_fallthru
    _
  // Predicated region
  $region6: #{tpu_custom_call.1} parent=0 // pred_check
    _
  $region7: #{tpu_custom_call.1} parent=0 // pred_check_branch
    %15 = sbr.rel (0) target = $region9
  $region8: #{tpu_custom_call.1} parent=0 // pred_region
    _
  $region9: #{tpu_custom_call.1} parent=0 // pred_fallthru
    _
  // Predicated region
  $region10: #{tpu_custom_call.1} parent=0 // pred_check
    _
  $region11: #{tpu_custom_call.1} parent=0 // pred_check_branch
    %17 = sbr.rel (0) target = $region13
  $region12: #{tpu_custom_call.1} parent=0 // pred_region
    _
  $region13: #{tpu_custom_call.1} parent=0 // pred_fallthru
    _
  // Predicated region
  $region14: #{tpu_custom_call.1} parent=0 // pred_check
    _
  $region15: #{tpu_custom_call.1} parent=0 // pred_check_branch
    %19 = sbr.rel (0) target = $region17
  $region16: #{tpu_custom_call.1} parent=0 // pred_region
    _
  $region17: #{tpu_custom_call.1} parent=0 // pred_fallthru
    _
  // Predicated region
  $region18: #{tpu_custom_call.1} parent=0 // pred_check
    _
  $region19: #{tpu_custom_call.1} parent=0 // pred_check_branch
    %21 = sbr.rel (0) target = $region21
  $region20: #{tpu_custom_call.1} parent=0 // pred_region
    _
  $region21: #{tpu_custom_call.1} parent=0 // pred_fallthru
    _
  // Predicated region
  $region22: #{tpu_custom_call.1} parent=0 // pred_check
    _
  $region23: #{tpu_custom_call.1} parent=0 // pred_check_branch
    %23 = sbr.rel (0) target = $region25
  $region24: #{tpu_custom_call.1} parent=0 // pred_region
    _
  $region25: #{tpu_custom_call.1} parent=0 // pred_fallthru
    _
  // Predicated region
  $region26: #{tpu_custom_call.1} parent=0 // pred_check
    _
  $region27: #{tpu_custom_call.1} parent=0 // pred_check_branch
    %25 = sbr.rel (0) target = $region29
  $region28: #{tpu_custom_call.1} parent=0 // pred_region
    _
  $region29: #{tpu_custom_call.1} parent=0 // pred_fallthru
    _
  %v27 = vld [vmem:[%s0] sm:$0xff]
  %v28 = vld [vmem:[%s0 + $0x8] sm:$0xff]
  %v29 = vld [vmem:[%s0 + $0x10] sm:$0xff]
  %v30 = vld [vmem:[%s0 + $0x18] sm:$0xff]
  %v31 = vld [vmem:[%s0 + $0x20] sm:$0xff]
  %v32 = vld [vmem:[%s0 + $0x28] sm:$0xff]
  %v33 = vld [vmem:[%s0 + $0x30] sm:$0xff]
  %v34 = vld [vmem:[%s0 + $0x38] sm:$0xff]
  %v35 = vld [vmem:[%s0 + $0x40] sm:$0xff]
  %v36 = vld [vmem:[%s0 + $0x48] sm:$0xff]
  %v37 = vld [vmem:[%s0 + $0x50] sm:$0xff]
  %v38 = vld [vmem:[%s0 + $0x58] sm:$0xff]
  %v39 = vld [vmem:[%s0 + $0x60] sm:$0xff]
  %v40 = vld [vmem:[%s0 + $0x68] sm:$0xff]
  %v41 = vld [vmem:[%s0 + $0x70] sm:$0xff]
  %v42 = vld [vmem:[%s0 + $0x78] sm:$0xff]
  %v43 = vpack.c.bf16 %v28, %v27
  %v44 = vpack.c.bf16 %v30, %v29
  %v45 = vpack.c.bf16 %v32, %v31
  %v46 = vpack.c.bf16 %v34, %v33
  %v47 = vpack.c.bf16 %v36, %v35
  %v48 = vpack.c.bf16 %v38, %v37
  %v49 = vpack.c.bf16 %v40, %v39
  %v50 = vpack.c.bf16 %v42, %v41
  %v51 = vld [vmem:[%s2] sm:$0xff]
  %v52 = vld [vmem:[%s2 + $0x8] sm:$0xff]
  %v53 = vld [vmem:[%s2 + $0x10] sm:$0xff]
  %v54 = vld [vmem:[%s2 + $0x18] sm:$0xff]
  %v55 = vld [vmem:[%s2 + $0x20] sm:$0xff]
  %v56 = vld [vmem:[%s2 + $0x28] sm:$0xff]
  %v57 = vld [vmem:[%s2 + $0x30] sm:$0xff]
  %v58 = vld [vmem:[%s2 + $0x38] sm:$0xff]
  %v59 = vld [vmem:[%s2 + $0x40] sm:$0xff]
  %v60 = vld [vmem:[%s2 + $0x48] sm:$0xff]
  %v61 = vld [vmem:[%s2 + $0x50] sm:$0xff]
  %v62 = vld [vmem:[%s2 + $0x58] sm:$0xff]
  %v63 = vld [vmem:[%s2 + $0x60] sm:$0x11]
  %v64 = vld [vmem:[%s2 + $0x68] sm:$0x11]
  %v65 = vld [vmem:[%s1] sm:$0xff]
  %v66 = vld [vmem:[%s1 + $0x8] sm:$0xff]
  %v67 = vld [vmem:[%s1 + $0x10] sm:$0xff]
  %v68 = vld [vmem:[%s1 + $0x18] sm:$0xff]
  %v69 = vld [vmem:[%s1 + $0x20] sm:$0xff]
  %v70 = vld [vmem:[%s1 + $0x28] sm:$0xff]
  %v71 = vld [vmem:[%s1 + $0x30] sm:$0xff]
  %v72 = vld [vmem:[%s1 + $0x38] sm:$0xff]
  %v73 = vld [vmem:[%s1 + $0x40] sm:$0xff]
  %v74 = vld [vmem:[%s1 + $0x48] sm:$0xff]
  %v75 = vld [vmem:[%s1 + $0x50] sm:$0xff]
  %v76 = vld [vmem:[%s1 + $0x58] sm:$0xff]
  %v77 = vld [vmem:[%s1 + $0x60] sm:$0xff]
  %v78 = vld [vmem:[%s1 + $0x68] sm:$0xff]
  %v79 = vld [vmem:[%s1 + $0x70] sm:$0xff]
  %v80 = vld [vmem:[%s1 + $0x78] sm:$0xff]
  %v81 = vpack.c.bf16 %v66, %v65
  %v82 = vpack.c.bf16 %v68, %v67
  %v83 = vpack.c.bf16 %v70, %v69
  %v84 = vpack.c.bf16 %v72, %v71
  %v85 = vpack.c.bf16 %v74, %v73
  %v86 = vpack.c.bf16 %v76, %v75
  %v87 = vpack.c.bf16 %v78, %v77
  %v88 = vpack.c.bf16 %v80, %v79
  %v89 = vld [vmem:[%s3] sm:$0xff]
  %v90 = vld [vmem:[%s3 + $0x8] sm:$0xff]
  %v91 = vld [vmem:[%s3 + $0x10] sm:$0x11]
  %v92 = vld [vmem:[%s3 + $0x18] sm:$0x11]
  %v97 = vunpack.c.l.b16 %v89
  %v98 = vunpack.c.h.b16 %v89
  %v99 = vunpack.c.l.b16 %v90
  %v100 = vunpack.c.h.b16 %v90
  %v101 = vunpack.c.l.b16 %v91
  %v102 = vunpack.c.h.b16 %v91
  %v103 = vunpack.c.l.b16 %v92
  %v104 = vunpack.c.h.b16 %v92
  %v105 = vpack.c.b16 %v101, %v97
  %v106 = vpack.c.b16 %v102, %v98
  %v107 = vpack.c.b16 %v103, %v99
  %v108 = vpack.c.b16 %v104, %v100
  %vm109 = vcmask 80896
  %v111 = vsel %vm109, %v81, 0
  %v114 = vsel %vm109, %v82, 0
  %v117 = vsel %vm109, %v83, 0
  %v120 = vsel %vm109, %v84, 0
  %v123 = vsel %vm109, %v85, 0
  %v126 = vsel %vm109, %v86, 0
  %v129 = vsel %vm109, %v87, 0
  %v132 = vsel %vm109, %v88, 0
  %vm134 = vcmask 1044480
  %v136 = vsel %vm134, %v105, 0
  %v139 = vsel %vm134, %v106, 0
  %v142 = vsel %vm134, %v107, 0
  %v145 = vsel %vm134, %v108, 0
  %147 = vmatprep.subr.bf16.mxu0 %v139
  %148 = vmatpush1.bf16.msra.mxu0 %v136
  %149 = vmatprep.subr.bf16.mxu0 0
  %150 = vmatpush1.bf16.msra.mxu0 0
  %151 = vmatprep.subr.bf16.mxu0 0
  %152 = vmatpush1.bf16.msra.mxu0 0
  %153 = vmatprep.subr.bf16.mxu0 0
  %154 = vmatpush1.bf16.msra.mxu0 0
  %155 = vmatprep.subr.bf16.mxu0 0
  %156 = vmatpush1.bf16.msra.mxu0 0
  %157 = vmatprep.subr.bf16.mxu0 0
  %158 = vmatpush1.bf16.msra.mxu0 0
  %159 = vmatprep.subr.bf16.mxu0 0
  %160 = vmatpush1.bf16.msra.mxu0 0
  %161 = vmatprep.subr.bf16.mxu0 0
  %162 = vmatpush1.bf16.msra.mxu0 0
  %163 = vmatprep.subr.bf16.mxu0 0
  %164 = vmatpush1.bf16.msra.mxu0 0
  %165 = vmatprep.subr.bf16.mxu0 0
  %166 = vmatpush1.bf16.msra.mxu0 0
  %167 = vmatprep.subr.bf16.mxu0 0
  %168 = vmatpush1.bf16.msra.mxu0 0
  %169 = vmatprep.subr.bf16.mxu0 0
  %170 = vmatpush1.bf16.msra.mxu0 0
  %171 = vmatprep.subr.bf16.mxu0 0
  %172 = vmatpush1.bf16.msra.mxu0 0
  %173 = vmatprep.subr.bf16.mxu0 0
  %174 = vmatpush1.bf16.msra.mxu0 0
  %175 = vmatprep.subr.bf16.mxu0 0
  %176 = vmatpush1.bf16.msra.mxu0 0
  %177 = vmatprep.subr.bf16.mxu0 0
  %178 = vmatpush1.bf16.msra.mxu0 0
  %179 = vmatprep.mubr.bf16.mxu0 0
  %180 = vmatmul.mubr.bf16.gmra.mrb[0].mxu0 %v111
  %v181 = vpop.f32.mrb[0].mxu0
  %v182 = vadd.f32 0.0, %v181
  %v183 = vpop.f32.mrb[0].mxu0
  %v184 = vadd.f32 0.0, %v183
  %v185 = vpop.f32.mrb[0].mxu0
  %v186 = vadd.f32 0.0, %v185
  %v187 = vpop.f32.mrb[0].mxu0
  %v188 = vadd.f32 0.0, %v187
  %189 = vmatprep.mubr.bf16.mxu0 0
  %190 = vmatmul.mubr.bf16.gmra.mrb[0].mxu0 %v114
  %v191 = vpop.f32.mrb[0].mxu0
  %v192 = vadd.f32 0.0, %v191
  %v193 = vpop.f32.mrb[0].mxu0
  %v194 = vadd.f32 0.0, %v193
  %v195 = vpop.f32.mrb[0].mxu0
  %v196 = vadd.f32 0.0, %v195
  %v197 = vpop.f32.mrb[0].mxu0
  %v198 = vadd.f32 0.0, %v197
  %199 = vmatprep.mubr.bf16.mxu0 0
  %200 = vmatmul.mubr.bf16.gmra.mrb[0].mxu0 %v117
  %v201 = vpop.f32.mrb[0].mxu0
  %v202 = vadd.f32 0.0, %v201
  %v203 = vpop.f32.mrb[0].mxu0
  %v204 = vadd.f32 0.0, %v203
  %v205 = vpop.f32.mrb[0].mxu0
  %v206 = vadd.f32 0.0, %v205
  %v207 = vpop.f32.mrb[0].mxu0
  %v208 = vadd.f32 0.0, %v207
  %209 = vmatprep.mubr.bf16.mxu0 0
  %210 = vmatmul.mubr.bf16.gmra.mrb[0].mxu0 %v120
  %v211 = vpop.f32.mrb[0].mxu0
  %v212 = vadd.f32 0.0, %v211
  %v213 = vpop.f32.mrb[0].mxu0
  %v214 = vadd.f32 0.0, %v213
  %v215 = vpop.f32.mrb[0].mxu0
  %v216 = vadd.f32 0.0, %v215
  %v217 = vpop.f32.mrb[0].mxu0
  %v218 = vadd.f32 0.0, %v217
  %219 = vmatprep.mubr.bf16.mxu0 0
  %220 = vmatmul.mubr.bf16.gmra.mrb[0].mxu0 %v123
  %v221 = vpop.f32.mrb[0].mxu0
  %v222 = vadd.f32 0.0, %v221
  %v223 = vpop.f32.mrb[0].mxu0
  %v224 = vadd.f32 0.0, %v223
  %v225 = vpop.f32.mrb[0].mxu0
  %v226 = vadd.f32 0.0, %v225
  %v227 = vpop.f32.mrb[0].mxu0
  %v228 = vadd.f32 0.0, %v227
  %229 = vmatprep.mubr.bf16.mxu0 0
  %230 = vmatmul.mubr.bf16.gmra.mrb[0].mxu0 %v126
  %v231 = vpop.f32.mrb[0].mxu0
  %v232 = vadd.f32 0.0, %v231
  %v233 = vpop.f32.mrb[0].mxu0
  %v234 = vadd.f32 0.0, %v233
  %v235 = vpop.f32.mrb[0].mxu0
  %v236 = vadd.f32 0.0, %v235
  %v237 = vpop.f32.mrb[0].mxu0
  %v238 = vadd.f32 0.0, %v237
  %239 = vmatprep.mubr.bf16.mxu0 0
  %240 = vmatmul.mubr.bf16.gmra.mrb[0].mxu0 %v129
  %v241 = vpop.f32.mrb[0].mxu0
  %v242 = vadd.f32 0.0, %v241
  %v243 = vpop.f32.mrb[0].mxu0
  %v244 = vadd.f32 0.0, %v243
  %v245 = vpop.f32.mrb[0].mxu0
  %v246 = vadd.f32 0.0, %v245
  %v247 = vpop.f32.mrb[0].mxu0
  %v248 = vadd.f32 0.0, %v247
  %249 = vmatprep.mubr.bf16.mxu0 0
  %250 = vmatmul.mubr.bf16.gmra.mrb[0].mxu0 %v132
  %v251 = vpop.f32.mrb[0].mxu0
  %v252 = vadd.f32 0.0, %v251
  %v253 = vpop.f32.mrb[0].mxu0
  %v254 = vadd.f32 0.0, %v253
  %v255 = vpop.f32.mrb[0].mxu0
  %v256 = vadd.f32 0.0, %v255
  %v257 = vpop.f32.mrb[0].mxu0
  %v258 = vadd.f32 0.0, %v257
  %259 = vdwg.mxu0
  %260 = vmatprep.subr.bf16.mxu0 %v145
  %261 = vmatpush1.bf16.msra.mxu0 %v142
  %262 = vmatprep.subr.bf16.mxu0 0
  %263 = vmatpush1.bf16.msra.mxu0 0
  %264 = vmatprep.subr.bf16.mxu0 0
  %265 = vmatpush1.bf16.msra.mxu0 0
  %266 = vmatprep.subr.bf16.mxu0 0
  %267 = vmatpush1.bf16.msra.mxu0 0
  %268 = vmatprep.subr.bf16.mxu0 0
  %269 = vmatpush1.bf16.msra.mxu0 0
  %270 = vmatprep.subr.bf16.mxu0 0
  %271 = vmatpush1.bf16.msra.mxu0 0
  %272 = vmatprep.subr.bf16.mxu0 0
  %273 = vmatpush1.bf16.msra.mxu0 0
  %274 = vmatprep.subr.bf16.mxu0 0
  %275 = vmatpush1.bf16.msra.mxu0 0
  %276 = vmatprep.subr.bf16.mxu0 0
  %277 = vmatpush1.bf16.msra.mxu0 0
  %278 = vmatprep.subr.bf16.mxu0 0
  %279 = vmatpush1.bf16.msra.mxu0 0
  %280 = vmatprep.subr.bf16.mxu0 0
  %281 = vmatpush1.bf16.msra.mxu0 0
  %282 = vmatprep.subr.bf16.mxu0 0
  %283 = vmatpush1.bf16.msra.mxu0 0
  %284 = vmatprep.subr.bf16.mxu0 0
  %285 = vmatpush1.bf16.msra.mxu0 0
  %286 = vmatprep.subr.bf16.mxu0 0
  %287 = vmatpush1.bf16.msra.mxu0 0
  %288 = vmatprep.subr.bf16.mxu0 0
  %289 = vmatpush1.bf16.msra.mxu0 0
  %290 = vmatprep.subr.bf16.mxu0 0
  %291 = vmatpush1.bf16.msra.mxu0 0
  %292 = vmatprep.mubr.bf16.mxu0 0
  %293 = vmatmul.mubr.bf16.gmra.mrb[0].mxu0 %v111
  %v294 = vpop.f32.mrb[0].mxu0
  %v295 = vadd.f32 0.0, %v294
  %v296 = vpop.f32.mrb[0].mxu0
  %v297 = vadd.f32 0.0, %v296
  %v298 = vpop.f32.mrb[0].mxu0
  %v299 = vadd.f32 0.0, %v298
  %v300 = vpop.f32.mrb[0].mxu0
  %v301 = vadd.f32 0.0, %v300
  %302 = vmatprep.mubr.bf16.mxu0 0
  %303 = vmatmul.mubr.bf16.gmra.mrb[0].mxu0 %v114
  %v304 = vpop.f32.mrb[0].mxu0
  %v305 = vadd.f32 0.0, %v304
  %v306 = vpop.f32.mrb[0].mxu0
  %v307 = vadd.f32 0.0, %v306
  %v308 = vpop.f32.mrb[0].mxu0
  %v309 = vadd.f32 0.0, %v308
  %v310 = vpop.f32.mrb[0].mxu0
  %v311 = vadd.f32 0.0, %v310
  %312 = vmatprep.mubr.bf16.mxu0 0
  %313 = vmatmul.mubr.bf16.gmra.mrb[0].mxu0 %v117
  %v314 = vpop.f32.mrb[0].mxu0
  %v315 = vadd.f32 0.0, %v314
  %v316 = vpop.f32.mrb[0].mxu0
  %v317 = vadd.f32 0.0, %v316
  %v318 = vpop.f32.mrb[0].mxu0
  %v319 = vadd.f32 0.0, %v318
  %v320 = vpop.f32.mrb[0].mxu0
  %v321 = vadd.f32 0.0, %v320
  %322 = vmatprep.mubr.bf16.mxu0 0
  %323 = vmatmul.mubr.bf16.gmra.mrb[0].mxu0 %v120
  %v324 = vpop.f32.mrb[0].mxu0
  %v325 = vadd.f32 0.0, %v324
  %v326 = vpop.f32.mrb[0].mxu0
  %v327 = vadd.f32 0.0, %v326
  %v328 = vpop.f32.mrb[0].mxu0
  %v329 = vadd.f32 0.0, %v328
  %v330 = vpop.f32.mrb[0].mxu0
  %v331 = vadd.f32 0.0, %v330
  %332 = vmatprep.mubr.bf16.mxu0 0
  %333 = vmatmul.mubr.bf16.gmra.mrb[0].mxu0 %v123
  %v334 = vpop.f32.mrb[0].mxu0
  %v335 = vadd.f32 0.0, %v334
  %v336 = vpop.f32.mrb[0].mxu0
  %v337 = vadd.f32 0.0, %v336
  %v338 = vpop.f32.mrb[0].mxu0
  %v339 = vadd.f32 0.0, %v338
  %v340 = vpop.f32.mrb[0].mxu0
  %v341 = vadd.f32 0.0, %v340
  %342 = vmatprep.mubr.bf16.mxu0 0
  %343 = vmatmul.mubr.bf16.gmra.mrb[0].mxu0 %v126
  %v344 = vpop.f32.mrb[0].mxu0
  %v345 = vadd.f32 0.0, %v344
  %v346 = vpop.f32.mrb[0].mxu0
  %v347 = vadd.f32 0.0, %v346
  %v348 = vpop.f32.mrb[0].mxu0
  %v349 = vadd.f32 0.0, %v348
  %v350 = vpop.f32.mrb[0].mxu0
  %v351 = vadd.f32 0.0, %v350
  %352 = vmatprep.mubr.bf16.mxu0 0
  %353 = vmatmul.mubr.bf16.gmra.mrb[0].mxu0 %v129
  %v354 = vpop.f32.mrb[0].mxu0
  %v355 = vadd.f32 0.0, %v354
  %v356 = vpop.f32.mrb[0].mxu0
  %v357 = vadd.f32 0.0, %v356
  %v358 = vpop.f32.mrb[0].mxu0
  %v359 = vadd.f32 0.0, %v358
  %v360 = vpop.f32.mrb[0].mxu0
  %v361 = vadd.f32 0.0, %v360
  %362 = vmatprep.mubr.bf16.mxu0 0
  %363 = vmatmul.mubr.bf16.gmra.mrb[0].mxu0 %v132
  %v364 = vpop.f32.mrb[0].mxu0
  %v365 = vadd.f32 0.0, %v364
  %v366 = vpop.f32.mrb[0].mxu0
  %v367 = vadd.f32 0.0, %v366
  %v368 = vpop.f32.mrb[0].mxu0
  %v369 = vadd.f32 0.0, %v368
  %v370 = vpop.f32.mrb[0].mxu0
  %v371 = vadd.f32 0.0, %v370
  %372 = vdwg.mxu0
  %v387 = vunpack.c.l.b16 %v51
  %v388 = vunpack.c.h.b16 %v51
  %v389 = vunpack.c.l.b16 %v52
  %v390 = vunpack.c.h.b16 %v52
  %v391 = vunpack.c.l.b16 %v53
  %v392 = vunpack.c.h.b16 %v53
  %v393 = vunpack.c.l.b16 %v54
  %v394 = vunpack.c.h.b16 %v54
  %v395 = vunpack.c.l.b16 %v55
  %v396 = vunpack.c.h.b16 %v55
  %v397 = vunpack.c.l.b16 %v56
  %v398 = vunpack.c.h.b16 %v56
  %v399 = vunpack.c.l.b16 %v57
  %v400 = vunpack.c.h.b16 %v57
  %v401 = vunpack.c.l.b16 %v58
  %v402 = vunpack.c.h.b16 %v58
  %v403 = vunpack.c.l.b16 %v59
  %v404 = vunpack.c.h.b16 %v59
  %v405 = vunpack.c.l.b16 %v60
  %v406 = vunpack.c.h.b16 %v60
  %v407 = vunpack.c.l.b16 %v61
  %v408 = vunpack.c.h.b16 %v61
  %v409 = vunpack.c.l.b16 %v62
  %v410 = vunpack.c.h.b16 %v62
  %v411 = vunpack.c.l.b16 %v63
  %v412 = vunpack.c.h.b16 %v63
  %v413 = vunpack.c.l.b16 %v64
  %v414 = vunpack.c.h.b16 %v64
  %v415 = vpack.c.b16 %v391, %v387
  %v416 = vpack.c.b16 %v392, %v388
  %v417 = vpack.c.b16 %v393, %v389
  %v418 = vpack.c.b16 %v394, %v390
  %v419 = vpack.c.b16 %v399, %v395
  %v420 = vpack.c.b16 %v400, %v396
  %v421 = vpack.c.b16 %v401, %v397
  %v422 = vpack.c.b16 %v402, %v398
  %v423 = vpack.c.b16 %v407, %v403
  %v424 = vpack.c.b16 %v408, %v404
  %v425 = vpack.c.b16 %v409, %v405
  %v426 = vpack.c.b16 %v410, %v406
  %v427 = vpack.c.b16 %v411, %v411
  %v428 = vpack.c.b16 %v412, %v412
  %v429 = vpack.c.b16 %v413, %v413
  %v430 = vpack.c.b16 %v414, %v414
  %vm443 = vcmask 408576
  %v445 = vsel %vm443, %v43, 0
  %v448 = vsel %vm443, %v44, 0
  %v451 = vsel %vm443, %v45, 0
  %v454 = vsel %vm443, %v46, 0
  %v457 = vsel %vm443, %v47, 0
  %v460 = vsel %vm443, %v48, 0
  %v463 = vsel %vm443, %v49, 0
  %v466 = vsel %vm443, %v50, 0
  %vm468 = vcmask 1040384
  %v470 = vsel %vm468, %v427, 0
  %v473 = vsel %vm468, %v428, 0
  %v476 = vsel %vm468, %v429, 0
  %v479 = vsel %vm468, %v430, 0
  %481 = vmatprep.subr.bf16.mxu0 %v416
  %482 = vmatpush1.bf16.msra.mxu0 %v415
  %483 = vmatprep.subr.bf16.mxu0 %v420
  %484 = vmatpush1.bf16.msra.mxu0 %v419
  %485 = vmatprep.subr.bf16.mxu0 %v424
  %486 = vmatpush1.bf16.msra.mxu0 %v423
  %487 = vmatprep.subr.bf16.mxu0 %v473
  %488 = vmatpush1.bf16.msra.mxu0 %v470
  %489 = vmatprep.subr.bf16.mxu0 0
  %490 = vmatpush1.bf16.msra.mxu0 0
  %491 = vmatprep.subr.bf16.mxu0 0
  %492 = vmatpush1.bf16.msra.mxu0 0
  %493 = vmatprep.subr.bf16.mxu0 0
  %494 = vmatpush1.bf16.msra.mxu0 0
  %495 = vmatprep.subr.bf16.mxu0 0
  %496 = vmatpush1.bf16.msra.mxu0 0
  %497 = vmatprep.subr.bf16.mxu0 0
  %498 = vmatpush1.bf16.msra.mxu0 0
  %499 = vmatprep.subr.bf16.mxu0 0
  %500 = vmatpush1.bf16.msra.mxu0 0
  %501 = vmatprep.subr.bf16.mxu0 0
  %502 = vmatpush1.bf16.msra.mxu0 0
  %503 = vmatprep.subr.bf16.mxu0 0
  %504 = vmatpush1.bf16.msra.mxu0 0
  %505 = vmatprep.subr.bf16.mxu0 0
  %506 = vmatpush1.bf16.msra.mxu0 0
  %507 = vmatprep.subr.bf16.mxu0 0
  %508 = vmatpush1.bf16.msra.mxu0 0
  %509 = vmatprep.subr.bf16.mxu0 0
  %510 = vmatpush1.bf16.msra.mxu0 0
  %511 = vmatprep.subr.bf16.mxu0 0
  %512 = vmatpush1.bf16.msra.mxu0 0
  %513 = vmatprep.mubr.bf16.mxu0 0
  %514 = vmatmul.mubr.bf16.gmra.mrb[0].mxu0 %v445
  %v515 = vpop.f32.mrb[0].mxu0
  %v516 = vadd.f32 %v182, %v515
  %v517 = vpop.f32.mrb[0].mxu0
  %v518 = vadd.f32 %v184, %v517
  %v519 = vpop.f32.mrb[0].mxu0
  %v520 = vadd.f32 %v186, %v519
  %v521 = vpop.f32.mrb[0].mxu0
  %v522 = vadd.f32 %v188, %v521
  %523 = vmatprep.mubr.bf16.mxu0 0
  %524 = vmatmul.mubr.bf16.gmra.mrb[0].mxu0 %v448
  %v525 = vpop.f32.mrb[0].mxu0
  %v526 = vadd.f32 %v192, %v525
  %v527 = vpop.f32.mrb[0].mxu0
  %v528 = vadd.f32 %v194, %v527
  %v529 = vpop.f32.mrb[0].mxu0
  %v530 = vadd.f32 %v196, %v529
  %v531 = vpop.f32.mrb[0].mxu0
  %v532 = vadd.f32 %v198, %v531
  %533 = vmatprep.mubr.bf16.mxu0 0
  %534 = vmatmul.mubr.bf16.gmra.mrb[0].mxu0 %v451
  %v535 = vpop.f32.mrb[0].mxu0
  %v536 = vadd.f32 %v202, %v535
  %v537 = vpop.f32.mrb[0].mxu0
  %v538 = vadd.f32 %v204, %v537
  %v539 = vpop.f32.mrb[0].mxu0
  %v540 = vadd.f32 %v206, %v539
  %v541 = vpop.f32.mrb[0].mxu0
  %v542 = vadd.f32 %v208, %v541
  %543 = vmatprep.mubr.bf16.mxu0 0
  %544 = vmatmul.mubr.bf16.gmra.mrb[0].mxu0 %v454
  %v545 = vpop.f32.mrb[0].mxu0
  %v546 = vadd.f32 %v212, %v545
  %v547 = vpop.f32.mrb[0].mxu0
  %v548 = vadd.f32 %v214, %v547
  %v549 = vpop.f32.mrb[0].mxu0
  %v550 = vadd.f32 %v216, %v549
  %v551 = vpop.f32.mrb[0].mxu0
  %v552 = vadd.f32 %v218, %v551
  %553 = vmatprep.mubr.bf16.mxu0 0
  %554 = vmatmul.mubr.bf16.gmra.mrb[0].mxu0 %v457
  %v555 = vpop.f32.mrb[0].mxu0
  %v556 = vadd.f32 %v222, %v555
  %v557 = vpop.f32.mrb[0].mxu0
  %v558 = vadd.f32 %v224, %v557
  %v559 = vpop.f32.mrb[0].mxu0
  %v560 = vadd.f32 %v226, %v559
  %v561 = vpop.f32.mrb[0].mxu0
  %v562 = vadd.f32 %v228, %v561
  %563 = vmatprep.mubr.bf16.mxu0 0
  %564 = vmatmul.mubr.bf16.gmra.mrb[0].mxu0 %v460
  %v565 = vpop.f32.mrb[0].mxu0
  %v566 = vadd.f32 %v232, %v565
  %v567 = vpop.f32.mrb[0].mxu0
  %v568 = vadd.f32 %v234, %v567
  %v569 = vpop.f32.mrb[0].mxu0
  %v570 = vadd.f32 %v236, %v569
  %v571 = vpop.f32.mrb[0].mxu0
  %v572 = vadd.f32 %v238, %v571
  %573 = vmatprep.mubr.bf16.mxu0 0
  %574 = vmatmul.mubr.bf16.gmra.mrb[0].mxu0 %v463
  %v575 = vpop.f32.mrb[0].mxu0
  %v576 = vadd.f32 %v242, %v575
  %v577 = vpop.f32.mrb[0].mxu0
  %v578 = vadd.f32 %v244, %v577
  %v579 = vpop.f32.mrb[0].mxu0
  %v580 = vadd.f32 %v246, %v579
  %v581 = vpop.f32.mrb[0].mxu0
  %v582 = vadd.f32 %v248, %v581
  %583 = vmatprep.mubr.bf16.mxu0 0
  %584 = vmatmul.mubr.bf16.gmra.mrb[0].mxu0 %v466
  %v585 = vpop.f32.mrb[0].mxu0
  %v586 = vadd.f32 %v252, %v585
  %v587 = vpop.f32.mrb[0].mxu0
  %v588 = vadd.f32 %v254, %v587
  %v589 = vpop.f32.mrb[0].mxu0
  %v590 = vadd.f32 %v256, %v589
  %v591 = vpop.f32.mrb[0].mxu0
  %v592 = vadd.f32 %v258, %v591
  %593 = vdwg.mxu0
  %594 = vmatprep.subr.bf16.mxu0 %v418
  %595 = vmatpush1.bf16.msra.mxu0 %v417
  %596 = vmatprep.subr.bf16.mxu0 %v422
  %597 = vmatpush1.bf16.msra.mxu0 %v421
  %598 = vmatprep.subr.bf16.mxu0 %v426
  %599 = vmatpush1.bf16.msra.mxu0 %v425
  %600 = vmatprep.subr.bf16.mxu0 %v479
  %601 = vmatpush1.bf16.msra.mxu0 %v476
  %602 = vmatprep.subr.bf16.mxu0 0
  %603 = vmatpush1.bf16.msra.mxu0 0
  %604 = vmatprep.subr.bf16.mxu0 0
  %605 = vmatpush1.bf16.msra.mxu0 0
  %606 = vmatprep.subr.bf16.mxu0 0
  %607 = vmatpush1.bf16.msra.mxu0 0
  %608 = vmatprep.subr.bf16.mxu0 0
  %609 = vmatpush1.bf16.msra.mxu0 0
  %610 = vmatprep.subr.bf16.mxu0 0
  %611 = vmatpush1.bf16.msra.mxu0 0
  %612 = vmatprep.subr.bf16.mxu0 0
  %613 = vmatpush1.bf16.msra.mxu0 0
  %614 = vmatprep.subr.bf16.mxu0 0
  %615 = vmatpush1.bf16.msra.mxu0 0
  %616 = vmatprep.subr.bf16.mxu0 0
  %617 = vmatpush1.bf16.msra.mxu0 0
  %618 = vmatprep.subr.bf16.mxu0 0
  %619 = vmatpush1.bf16.msra.mxu0 0
  %620 = vmatprep.subr.bf16.mxu0 0
  %621 = vmatpush1.bf16.msra.mxu0 0
  %622 = vmatprep.subr.bf16.mxu0 0
  %623 = vmatpush1.bf16.msra.mxu0 0
  %624 = vmatprep.subr.bf16.mxu0 0
  %625 = vmatpush1.bf16.msra.mxu0 0
  %626 = vmatprep.mubr.bf16.mxu0 0
  %627 = vmatmul.mubr.bf16.gmra.mrb[0].mxu0 %v445
  %v628 = vpop.f32.mrb[0].mxu0
  %v629 = vadd.f32 %v295, %v628
  %v630 = vpop.f32.mrb[0].mxu0
  %v631 = vadd.f32 %v297, %v630
  %v632 = vpop.f32.mrb[0].mxu0
  %v633 = vadd.f32 %v299, %v632
  %v634 = vpop.f32.mrb[0].mxu0
  %v635 = vadd.f32 %v301, %v634
  %636 = vmatprep.mubr.bf16.mxu0 0
  %637 = vmatmul.mubr.bf16.gmra.mrb[0].mxu0 %v448
  %v638 = vpop.f32.mrb[0].mxu0
  %v639 = vadd.f32 %v305, %v638
  %v640 = vpop.f32.mrb[0].mxu0
  %v641 = vadd.f32 %v307, %v640
  %v642 = vpop.f32.mrb[0].mxu0
  %v643 = vadd.f32 %v309, %v642
  %v644 = vpop.f32.mrb[0].mxu0
  %v645 = vadd.f32 %v311, %v644
  %646 = vmatprep.mubr.bf16.mxu0 0
  %647 = vmatmul.mubr.bf16.gmra.mrb[0].mxu0 %v451
  %v648 = vpop.f32.mrb[0].mxu0
  %v649 = vadd.f32 %v315, %v648
  %v650 = vpop.f32.mrb[0].mxu0
  %v651 = vadd.f32 %v317, %v650
  %v652 = vpop.f32.mrb[0].mxu0
  %v653 = vadd.f32 %v319, %v652
  %v654 = vpop.f32.mrb[0].mxu0
  %v655 = vadd.f32 %v321, %v654
  %656 = vmatprep.mubr.bf16.mxu0 0
  %657 = vmatmul.mubr.bf16.gmra.mrb[0].mxu0 %v454
  %v658 = vpop.f32.mrb[0].mxu0
  %v659 = vadd.f32 %v325, %v658
  %v660 = vpop.f32.mrb[0].mxu0
  %v661 = vadd.f32 %v327, %v660
  %v662 = vpop.f32.mrb[0].mxu0
  %v663 = vadd.f32 %v329, %v662
  %v664 = vpop.f32.mrb[0].mxu0
  %v665 = vadd.f32 %v331, %v664
  %666 = vmatprep.mubr.bf16.mxu0 0
  %667 = vmatmul.mubr.bf16.gmra.mrb[0].mxu0 %v457
  %v668 = vpop.f32.mrb[0].mxu0
  %v669 = vadd.f32 %v335, %v668
  %v670 = vpop.f32.mrb[0].mxu0
  %v671 = vadd.f32 %v337, %v670
  %v672 = vpop.f32.mrb[0].mxu0
  %v673 = vadd.f32 %v339, %v672
  %v674 = vpop.f32.mrb[0].mxu0
  %v675 = vadd.f32 %v341, %v674
  %676 = vmatprep.mubr.bf16.mxu0 0
  %677 = vmatmul.mubr.bf16.gmra.mrb[0].mxu0 %v460
  %v678 = vpop.f32.mrb[0].mxu0
  %v679 = vadd.f32 %v345, %v678
  %v680 = vpop.f32.mrb[0].mxu0
  %v681 = vadd.f32 %v347, %v680
  %v682 = vpop.f32.mrb[0].mxu0
  %v683 = vadd.f32 %v349, %v682
  %v684 = vpop.f32.mrb[0].mxu0
  %v685 = vadd.f32 %v351, %v684
  %686 = vmatprep.mubr.bf16.mxu0 0
  %687 = vmatmul.mubr.bf16.gmra.mrb[0].mxu0 %v463
  %v688 = vpop.f32.mrb[0].mxu0
  %v689 = vadd.f32 %v355, %v688
  %v690 = vpop.f32.mrb[0].mxu0
  %v691 = vadd.f32 %v357, %v690
  %v692 = vpop.f32.mrb[0].mxu0
  %v693 = vadd.f32 %v359, %v692
  %v694 = vpop.f32.mrb[0].mxu0
  %v695 = vadd.f32 %v361, %v694
  %696 = vmatprep.mubr.bf16.mxu0 0
  %697 = vmatmul.mubr.bf16.gmra.mrb[0].mxu0 %v466
  %v698 = vpop.f32.mrb[0].mxu0
  %v699 = vadd.f32 %v365, %v698
  %v700 = vpop.f32.mrb[0].mxu0
  %v701 = vadd.f32 %v367, %v700
  %v702 = vpop.f32.mrb[0].mxu0
  %v703 = vadd.f32 %v369, %v702
  %v704 = vpop.f32.mrb[0].mxu0
  %v705 = vadd.f32 %v371, %v704
  %706 = vdwg.mxu0
  %v707 = vld [vmem:[%s4] sm:$0xf]
  %v709 = vlaneseq
  %v710 = vshrl.u32 %v709, 7
  %v711 = vsub.s32 0, %v710
  %v712 = vrot.slane %v707, %v711
  %v713 = vlaneseq
  %v714 = vshrl.u32 %v713, 7
  %v715 = vsub.s32 1, %v714
  %v716 = vrot.slane %v707, %v715
  %v717 = vlaneseq
  %v718 = vshrl.u32 %v717, 7
  %v719 = vsub.s32 2, %v718
  %v720 = vrot.slane %v707, %v719
  %v721 = vlaneseq
  %v722 = vshrl.u32 %v721, 7
  %v723 = vsub.s32 3, %v722
  %v724 = vrot.slane %v707, %v723
  %v729 = vadd.f32 %v516, %v712
  %v730 = vadd.f32 %v518, %v716
  %v731 = vadd.f32 %v629, %v720
  %v732 = vadd.f32 %v631, %v724
  %v733 = vadd.f32 %v520, %v712
  %v734 = vadd.f32 %v522, %v716
  %v735 = vadd.f32 %v633, %v720
  %v736 = vadd.f32 %v635, %v724
  %v737 = vadd.f32 %v526, %v712
  %v738 = vadd.f32 %v528, %v716
  %v739 = vadd.f32 %v639, %v720
  %v740 = vadd.f32 %v641, %v724
  %v741 = vadd.f32 %v530, %v712
  %v742 = vadd.f32 %v532, %v716
  %v743 = vadd.f32 %v643, %v720
  %v744 = vadd.f32 %v645, %v724
  %v745 = vadd.f32 %v536, %v712
  %v746 = vadd.f32 %v538, %v716
  %v747 = vadd.f32 %v649, %v720
  %v748 = vadd.f32 %v651, %v724
  %v749 = vadd.f32 %v540, %v712
  %v750 = vadd.f32 %v542, %v716
  %v751 = vadd.f32 %v653, %v720
  %v752 = vadd.f32 %v655, %v724
  %v753 = vadd.f32 %v546, %v712
  %v754 = vadd.f32 %v548, %v716
  %v755 = vadd.f32 %v659, %v720
  %v756 = vadd.f32 %v661, %v724
  %v757 = vadd.f32 %v550, %v712
  %v758 = vadd.f32 %v552, %v716
  %v759 = vadd.f32 %v663, %v720
  %v760 = vadd.f32 %v665, %v724
  %v761 = vadd.f32 %v556, %v712
  %v762 = vadd.f32 %v558, %v716
  %v763 = vadd.f32 %v669, %v720
  %v764 = vadd.f32 %v671, %v724
  %v765 = vadd.f32 %v560, %v712
  %v766 = vadd.f32 %v562, %v716
  %v767 = vadd.f32 %v673, %v720
  %v768 = vadd.f32 %v675, %v724
  %v769 = vadd.f32 %v566, %v712
  %v770 = vadd.f32 %v568, %v716
  %v771 = vadd.f32 %v679, %v720
  %v772 = vadd.f32 %v681, %v724
  %v773 = vadd.f32 %v570, %v712
  %v774 = vadd.f32 %v572, %v716
  %v775 = vadd.f32 %v683, %v720
  %v776 = vadd.f32 %v685, %v724
  %v777 = vadd.f32 %v576, %v712
  %v778 = vadd.f32 %v578, %v716
  %v779 = vadd.f32 %v689, %v720
  %v780 = vadd.f32 %v691, %v724
  %v781 = vadd.f32 %v580, %v712
  %v782 = vadd.f32 %v582, %v716
  %v783 = vadd.f32 %v693, %v720
  %v784 = vadd.f32 %v695, %v724
  %v785 = vadd.f32 %v586, %v712
  %v786 = vadd.f32 %v588, %v716
  %v787 = vadd.f32 %v699, %v720
  %v788 = vadd.f32 %v701, %v724
  %v789 = vadd.f32 %v590, %v712
  %v790 = vadd.f32 %v592, %v716
  %v791 = vadd.f32 %v703, %v720
  %v792 = vadd.f32 %v705, %v724
  %v793 = vmax.f32 %v729, 0.0
  %v794 = vmax.f32 %v730, 0.0
  %v795 = vmax.f32 %v731, 0.0
  %v796 = vmax.f32 %v732, 0.0
  %v797 = vmax.f32 %v733, 0.0
  %v798 = vmax.f32 %v734, 0.0
  %v799 = vmax.f32 %v735, 0.0
  %v800 = vmax.f32 %v736, 0.0
  %v801 = vmax.f32 %v737, 0.0
  %v802 = vmax.f32 %v738, 0.0
  %v803 = vmax.f32 %v739, 0.0
  %v804 = vmax.f32 %v740, 0.0
  %v805 = vmax.f32 %v741, 0.0
  %v806 = vmax.f32 %v742, 0.0
  %v807 = vmax.f32 %v743, 0.0
  %v808 = vmax.f32 %v744, 0.0
  %v809 = vmax.f32 %v745, 0.0
  %v810 = vmax.f32 %v746, 0.0
  %v811 = vmax.f32 %v747, 0.0
  %v812 = vmax.f32 %v748, 0.0
  %v813 = vmax.f32 %v749, 0.0
  %v814 = vmax.f32 %v750, 0.0
  %v815 = vmax.f32 %v751, 0.0
  %v816 = vmax.f32 %v752, 0.0
  %v817 = vmax.f32 %v753, 0.0
  %v818 = vmax.f32 %v754, 0.0
  %v819 = vmax.f32 %v755, 0.0
  %v820 = vmax.f32 %v756, 0.0
  %v821 = vmax.f32 %v757, 0.0
  %v822 = vmax.f32 %v758, 0.0
  %v823 = vmax.f32 %v759, 0.0
  %v824 = vmax.f32 %v760, 0.0
  %v825 = vmax.f32 %v761, 0.0
  %v826 = vmax.f32 %v762, 0.0
  %v827 = vmax.f32 %v763, 0.0
  %v828 = vmax.f32 %v764, 0.0
  %v829 = vmax.f32 %v765, 0.0
  %v830 = vmax.f32 %v766, 0.0
  %v831 = vmax.f32 %v767, 0.0
  %v832 = vmax.f32 %v768, 0.0
  %v833 = vmax.f32 %v769, 0.0
  %v834 = vmax.f32 %v770, 0.0
  %v835 = vmax.f32 %v771, 0.0
  %v836 = vmax.f32 %v772, 0.0
  %v837 = vmax.f32 %v773, 0.0
  %v838 = vmax.f32 %v774, 0.0
  %v839 = vmax.f32 %v775, 0.0
  %v840 = vmax.f32 %v776, 0.0
  %v841 = vmax.f32 %v777, 0.0
  %v842 = vmax.f32 %v778, 0.0
  %v843 = vmax.f32 %v779, 0.0
  %v844 = vmax.f32 %v780, 0.0
  %v845 = vmax.f32 %v781, 0.0
  %v846 = vmax.f32 %v782, 0.0
  %v847 = vmax.f32 %v783, 0.0
  %v848 = vmax.f32 %v784, 0.0
  %v849 = vmax.f32 %v785, 0.0
  %v850 = vmax.f32 %v786, 0.0
  %v851 = vmax.f32 %v787, 0.0
  %v852 = vmax.f32 %v788, 0.0
  %v853 = vmax.f32 %v789, 0.0
  %v854 = vmax.f32 %v790, 0.0
  %v855 = vmax.f32 %v791, 0.0
  %v856 = vmax.f32 %v792, 0.0
  %v857 = vand.u32 2147483647, %v729
  %v858 = vand.u32 2147483647, %v730
  %v859 = vand.u32 2147483647, %v731
  %v860 = vand.u32 2147483647, %v732
  %v861 = vand.u32 2147483647, %v733
  %v862 = vand.u32 2147483647, %v734
  %v863 = vand.u32 2147483647, %v735
  %v864 = vand.u32 2147483647, %v736
  %v865 = vand.u32 2147483647, %v737
  %v866 = vand.u32 2147483647, %v738
  %v867 = vand.u32 2147483647, %v739
  %v868 = vand.u32 2147483647, %v740
  %v869 = vand.u32 2147483647, %v741
  %v870 = vand.u32 2147483647, %v742
  %v871 = vand.u32 2147483647, %v743
  %v872 = vand.u32 2147483647, %v744
  %v873 = vand.u32 2147483647, %v745
  %v874 = vand.u32 2147483647, %v746
  %v875 = vand.u32 2147483647, %v747
  %v876 = vand.u32 2147483647, %v748
  %v877 = vand.u32 2147483647, %v749
  %v878 = vand.u32 2147483647, %v750
  %v879 = vand.u32 2147483647, %v751
  %v880 = vand.u32 2147483647, %v752
  %v881 = vand.u32 2147483647, %v753
  %v882 = vand.u32 2147483647, %v754
  %v883 = vand.u32 2147483647, %v755
  %v884 = vand.u32 2147483647, %v756
  %v885 = vand.u32 2147483647, %v757
  %v886 = vand.u32 2147483647, %v758
  %v887 = vand.u32 2147483647, %v759
  %v888 = vand.u32 2147483647, %v760
  %v889 = vand.u32 2147483647, %v761
  %v890 = vand.u32 2147483647, %v762
  %v891 = vand.u32 2147483647, %v763
  %v892 = vand.u32 2147483647, %v764
  %v893 = vand.u32 2147483647, %v765
  %v894 = vand.u32 2147483647, %v766
  %v895 = vand.u32 2147483647, %v767
  %v896 = vand.u32 2147483647, %v768
  %v897 = vand.u32 2147483647, %v769
  %v898 = vand.u32 2147483647, %v770
  %v899 = vand.u32 2147483647, %v771
  %v900 = vand.u32 2147483647, %v772
  %v901 = vand.u32 2147483647, %v773
  %v902 = vand.u32 2147483647, %v774
  %v903 = vand.u32 2147483647, %v775
  %v904 = vand.u32 2147483647, %v776
  %v905 = vand.u32 2147483647, %v777
  %v906 = vand.u32 2147483647, %v778
  %v907 = vand.u32 2147483647, %v779
  %v908 = vand.u32 2147483647, %v780
  %v909 = vand.u32 2147483647, %v781
  %v910 = vand.u32 2147483647, %v782
  %v911 = vand.u32 2147483647, %v783
  %v912 = vand.u32 2147483647, %v784
  %v913 = vand.u32 2147483647, %v785
  %v914 = vand.u32 2147483647, %v786
  %v915 = vand.u32 2147483647, %v787
  %v916 = vand.u32 2147483647, %v788
  %v917 = vand.u32 2147483647, %v789
  %v918 = vand.u32 2147483647, %v790
  %v919 = vand.u32 2147483647, %v791
  %v920 = vand.u32 2147483647, %v792
  %v921 = vsub.f32 0.0, %v857
  %v922 = vsub.f32 0.0, %v858
  %v923 = vsub.f32 0.0, %v859
  %v924 = vsub.f32 0.0, %v860
  %v925 = vsub.f32 0.0, %v861
  %v926 = vsub.f32 0.0, %v862
  %v927 = vsub.f32 0.0, %v863
  %v928 = vsub.f32 0.0, %v864
  %v929 = vsub.f32 0.0, %v865
  %v930 = vsub.f32 0.0, %v866
  %v931 = vsub.f32 0.0, %v867
  %v932 = vsub.f32 0.0, %v868
  %v933 = vsub.f32 0.0, %v869
  %v934 = vsub.f32 0.0, %v870
  %v935 = vsub.f32 0.0, %v871
  %v936 = vsub.f32 0.0, %v872
  %v937 = vsub.f32 0.0, %v873
  %v938 = vsub.f32 0.0, %v874
  %v939 = vsub.f32 0.0, %v875
  %v940 = vsub.f32 0.0, %v876
  %v941 = vsub.f32 0.0, %v877
  %v942 = vsub.f32 0.0, %v878
  %v943 = vsub.f32 0.0, %v879
  %v944 = vsub.f32 0.0, %v880
  %v945 = vsub.f32 0.0, %v881
  %v946 = vsub.f32 0.0, %v882
  %v947 = vsub.f32 0.0, %v883
  %v948 = vsub.f32 0.0, %v884
  %v949 = vsub.f32 0.0, %v885
  %v950 = vsub.f32 0.0, %v886
  %v951 = vsub.f32 0.0, %v887
  %v952 = vsub.f32 0.0, %v888
  %v953 = vsub.f32 0.0, %v889
  %v954 = vsub.f32 0.0, %v890
  %v955 = vsub.f32 0.0, %v891
  %v956 = vsub.f32 0.0, %v892
  %v957 = vsub.f32 0.0, %v893
  %v958 = vsub.f32 0.0, %v894
  %v959 = vsub.f32 0.0, %v895
  %v960 = vsub.f32 0.0, %v896
  %v961 = vsub.f32 0.0, %v897
  %v962 = vsub.f32 0.0, %v898
  %v963 = vsub.f32 0.0, %v899
  %v964 = vsub.f32 0.0, %v900
  %v965 = vsub.f32 0.0, %v901
  %v966 = vsub.f32 0.0, %v902
  %v967 = vsub.f32 0.0, %v903
  %v968 = vsub.f32 0.0, %v904
  %v969 = vsub.f32 0.0, %v905
  %v970 = vsub.f32 0.0, %v906
  %v971 = vsub.f32 0.0, %v907
  %v972 = vsub.f32 0.0, %v908
  %v973 = vsub.f32 0.0, %v909
  %v974 = vsub.f32 0.0, %v910
  %v975 = vsub.f32 0.0, %v911
  %v976 = vsub.f32 0.0, %v912
  %v977 = vsub.f32 0.0, %v913
  %v978 = vsub.f32 0.0, %v914
  %v979 = vsub.f32 0.0, %v915
  %v980 = vsub.f32 0.0, %v916
  %v981 = vsub.f32 0.0, %v917
  %v982 = vsub.f32 0.0, %v918
  %v983 = vsub.f32 0.0, %v919
  %v984 = vsub.f32 0.0, %v920
  %v985 = vmul.f32 %v921, 1.442695
  %v986 = vpow.pop %v985
  %v987 = vmul.f32 %v922, 1.442695
  %v988 = vpow.pop %v987
  %v989 = vmul.f32 %v923, 1.442695
  %v990 = vpow.pop %v989
  %v991 = vmul.f32 %v924, 1.442695
  %v992 = vpow.pop %v991
  %v993 = vmul.f32 %v925, 1.442695
  %v994 = vpow.pop %v993
  %v995 = vmul.f32 %v926, 1.442695
  %v996 = vpow.pop %v995
  %v997 = vmul.f32 %v927, 1.442695
  %v998 = vpow.pop %v997
  %v999 = vmul.f32 %v928, 1.442695
  %v1000 = vpow.pop %v999
  %v1001 = vmul.f32 %v929, 1.442695
  %v1002 = vpow.pop %v1001
  %v1003 = vmul.f32 %v930, 1.442695
  %v1004 = vpow.pop %v1003
  %v1005 = vmul.f32 %v931, 1.442695
  %v1006 = vpow.pop %v1005
  %v1007 = vmul.f32 %v932, 1.442695
  %v1008 = vpow.pop %v1007
  %v1009 = vmul.f32 %v933, 1.442695
  %v1010 = vpow.pop %v1009
  %v1011 = vmul.f32 %v934, 1.442695
  %v1012 = vpow.pop %v1011
  %v1013 = vmul.f32 %v935, 1.442695
  %v1014 = vpow.pop %v1013
  %v1015 = vmul.f32 %v936, 1.442695
  %v1016 = vpow.pop %v1015
  %v1017 = vmul.f32 %v937, 1.442695
  %v1018 = vpow.pop %v1017
  %v1019 = vmul.f32 %v938, 1.442695
  %v1020 = vpow.pop %v1019
  %v1021 = vmul.f32 %v939, 1.442695
  %v1022 = vpow.pop %v1021
  %v1023 = vmul.f32 %v940, 1.442695
  %v1024 = vpow.pop %v1023
  %v1025 = vmul.f32 %v941, 1.442695
  %v1026 = vpow.pop %v1025
  %v1027 = vmul.f32 %v942, 1.442695
  %v1028 = vpow.pop %v1027
  %v1029 = vmul.f32 %v943, 1.442695
  %v1030 = vpow.pop %v1029
  %v1031 = vmul.f32 %v944, 1.442695
  %v1032 = vpow.pop %v1031
  %v1033 = vmul.f32 %v945, 1.442695
  %v1034 = vpow.pop %v1033
  %v1035 = vmul.f32 %v946, 1.442695
  %v1036 = vpow.pop %v1035
  %v1037 = vmul.f32 %v947, 1.442695
  %v1038 = vpow.pop %v1037
  %v1039 = vmul.f32 %v948, 1.442695
  %v1040 = vpow.pop %v1039
  %v1041 = vmul.f32 %v949, 1.442695
  %v1042 = vpow.pop %v1041
  %v1043 = vmul.f32 %v950, 1.442695
  %v1044 = vpow.pop %v1043
  %v1045 = vmul.f32 %v951, 1.442695
  %v1046 = vpow.pop %v1045
  %v1047 = vmul.f32 %v952, 1.442695
  %v1048 = vpow.pop %v1047
  %v1049 = vmul.f32 %v953, 1.442695
  %v1050 = vpow.pop %v1049
  %v1051 = vmul.f32 %v954, 1.442695
  %v1052 = vpow.pop %v1051
  %v1053 = vmul.f32 %v955, 1.442695
  %v1054 = vpow.pop %v1053
  %v1055 = vmul.f32 %v956, 1.442695
  %v1056 = vpow.pop %v1055
  %v1057 = vmul.f32 %v957, 1.442695
  %v1058 = vpow.pop %v1057
  %v1059 = vmul.f32 %v958, 1.442695
  %v1060 = vpow.pop %v1059
  %v1061 = vmul.f32 %v959, 1.442695
  %v1062 = vpow.pop %v1061
  %v1063 = vmul.f32 %v960, 1.442695
  %v1064 = vpow.pop %v1063
  %v1065 = vmul.f32 %v961, 1.442695
  %v1066 = vpow.pop %v1065
  %v1067 = vmul.f32 %v962, 1.442695
  %v1068 = vpow.pop %v1067
  %v1069 = vmul.f32 %v963, 1.442695
  %v1070 = vpow.pop %v1069
  %v1071 = vmul.f32 %v964, 1.442695
  %v1072 = vpow.pop %v1071
  %v1073 = vmul.f32 %v965, 1.442695
  %v1074 = vpow.pop %v1073
  %v1075 = vmul.f32 %v966, 1.442695
  %v1076 = vpow.pop %v1075
  %v1077 = vmul.f32 %v967, 1.442695
  %v1078 = vpow.pop %v1077
  %v1079 = vmul.f32 %v968, 1.442695
  %v1080 = vpow.pop %v1079
  %v1081 = vmul.f32 %v969, 1.442695
  %v1082 = vpow.pop %v1081
  %v1083 = vmul.f32 %v970, 1.442695
  %v1084 = vpow.pop %v1083
  %v1085 = vmul.f32 %v971, 1.442695
  %v1086 = vpow.pop %v1085
  %v1087 = vmul.f32 %v972, 1.442695
  %v1088 = vpow.pop %v1087
  %v1089 = vmul.f32 %v973, 1.442695
  %v1090 = vpow.pop %v1089
  %v1091 = vmul.f32 %v974, 1.442695
  %v1092 = vpow.pop %v1091
  %v1093 = vmul.f32 %v975, 1.442695
  %v1094 = vpow.pop %v1093
  %v1095 = vmul.f32 %v976, 1.442695
  %v1096 = vpow.pop %v1095
  %v1097 = vmul.f32 %v977, 1.442695
  %v1098 = vpow.pop %v1097
  %v1099 = vmul.f32 %v978, 1.442695
  %v1100 = vpow.pop %v1099
  %v1101 = vmul.f32 %v979, 1.442695
  %v1102 = vpow.pop %v1101
  %v1103 = vmul.f32 %v980, 1.442695
  %v1104 = vpow.pop %v1103
  %v1105 = vmul.f32 %v981, 1.442695
  %v1106 = vpow.pop %v1105
  %v1107 = vmul.f32 %v982, 1.442695
  %v1108 = vpow.pop %v1107
  %v1109 = vmul.f32 %v983, 1.442695
  %v1110 = vpow.pop %v1109
  %v1111 = vmul.f32 %v984, 1.442695
  %v1112 = vpow.pop %v1111
  %v1113 = vadd.f32 %v986, 1.0
  %v1114 = vlog2.pop %v1113
  %v1115 = vmul.f32 %v1114, 0.6931472
  %v1116 = vmul.f32 -0.5, %v986
  %v1117 = vadd.f32 %v1116, 1.0
  %v1118 = vmul.f32 %v1117, %v986
  %v1119 = vand.u32 2147483647, %v986
  %vm1120 = vcmp.lt.f32.partialorder %v1119, 0.0004427343
  %v1121 = vsel %vm1120, %v1118, %v1115
  %v1122 = vadd.f32 %v988, 1.0
  %v1123 = vlog2.pop %v1122
  %v1124 = vmul.f32 %v1123, 0.6931472
  %v1125 = vmul.f32 -0.5, %v988
  %v1126 = vadd.f32 %v1125, 1.0
  %v1127 = vmul.f32 %v1126, %v988
  %v1128 = vand.u32 2147483647, %v988
  %vm1129 = vcmp.lt.f32.partialorder %v1128, 0.0004427343
  %v1130 = vsel %vm1129, %v1127, %v1124
  %v1131 = vadd.f32 %v990, 1.0
  %v1132 = vlog2.pop %v1131
  %v1133 = vmul.f32 %v1132, 0.6931472
  %v1134 = vmul.f32 -0.5, %v990
  %v1135 = vadd.f32 %v1134, 1.0
  %v1136 = vmul.f32 %v1135, %v990
  %v1137 = vand.u32 2147483647, %v990
  %vm1138 = vcmp.lt.f32.partialorder %v1137, 0.0004427343
  %v1139 = vsel %vm1138, %v1136, %v1133
  %v1140 = vadd.f32 %v992, 1.0
  %v1141 = vlog2.pop %v1140
  %v1142 = vmul.f32 %v1141, 0.6931472
  %v1143 = vmul.f32 -0.5, %v992
  %v1144 = vadd.f32 %v1143, 1.0
  %v1145 = vmul.f32 %v1144, %v992
  %v1146 = vand.u32 2147483647, %v992
  %vm1147 = vcmp.lt.f32.partialorder %v1146, 0.0004427343
  %v1148 = vsel %vm1147, %v1145, %v1142
  %v1149 = vadd.f32 %v994, 1.0
  %v1150 = vlog2.pop %v1149
  %v1151 = vmul.f32 %v1150, 0.6931472
  %v1152 = vmul.f32 -0.5, %v994
  %v1153 = vadd.f32 %v1152, 1.0
  %v1154 = vmul.f32 %v1153, %v994
  %v1155 = vand.u32 2147483647, %v994
  %vm1156 = vcmp.lt.f32.partialorder %v1155, 0.0004427343
  %v1157 = vsel %vm1156, %v1154, %v1151
  %v1158 = vadd.f32 %v996, 1.0
  %v1159 = vlog2.pop %v1158
  %v1160 = vmul.f32 %v1159, 0.6931472
  %v1161 = vmul.f32 -0.5, %v996
  %v1162 = vadd.f32 %v1161, 1.0
  %v1163 = vmul.f32 %v1162, %v996
  %v1164 = vand.u32 2147483647, %v996
  %vm1165 = vcmp.lt.f32.partialorder %v1164, 0.0004427343
  %v1166 = vsel %vm1165, %v1163, %v1160
  %v1167 = vadd.f32 %v998, 1.0
  %v1168 = vlog2.pop %v1167
  %v1169 = vmul.f32 %v1168, 0.6931472
  %v1170 = vmul.f32 -0.5, %v998
  %v1171 = vadd.f32 %v1170, 1.0
  %v1172 = vmul.f32 %v1171, %v998
  %v1173 = vand.u32 2147483647, %v998
  %vm1174 = vcmp.lt.f32.partialorder %v1173, 0.0004427343
  %v1175 = vsel %vm1174, %v1172, %v1169
  %v1176 = vadd.f32 %v1000, 1.0
  %v1177 = vlog2.pop %v1176
  %v1178 = vmul.f32 %v1177, 0.6931472
  %v1179 = vmul.f32 -0.5, %v1000
  %v1180 = vadd.f32 %v1179, 1.0
  %v1181 = vmul.f32 %v1180, %v1000
  %v1182 = vand.u32 2147483647, %v1000
  %vm1183 = vcmp.lt.f32.partialorder %v1182, 0.0004427343
  %v1184 = vsel %vm1183, %v1181, %v1178
  %v1185 = vadd.f32 %v1002, 1.0
  %v1186 = vlog2.pop %v1185
  %v1187 = vmul.f32 %v1186, 0.6931472
  %v1188 = vmul.f32 -0.5, %v1002
  %v1189 = vadd.f32 %v1188, 1.0
  %v1190 = vmul.f32 %v1189, %v1002
  %v1191 = vand.u32 2147483647, %v1002
  %vm1192 = vcmp.lt.f32.partialorder %v1191, 0.0004427343
  %v1193 = vsel %vm1192, %v1190, %v1187
  %v1194 = vadd.f32 %v1004, 1.0
  %v1195 = vlog2.pop %v1194
  %v1196 = vmul.f32 %v1195, 0.6931472
  %v1197 = vmul.f32 -0.5, %v1004
  %v1198 = vadd.f32 %v1197, 1.0
  %v1199 = vmul.f32 %v1198, %v1004
  %v1200 = vand.u32 2147483647, %v1004
  %vm1201 = vcmp.lt.f32.partialorder %v1200, 0.0004427343
  %v1202 = vsel %vm1201, %v1199, %v1196
  %v1203 = vadd.f32 %v1006, 1.0
  %v1204 = vlog2.pop %v1203
  %v1205 = vmul.f32 %v1204, 0.6931472
  %v1206 = vmul.f32 -0.5, %v1006
  %v1207 = vadd.f32 %v1206, 1.0
  %v1208 = vmul.f32 %v1207, %v1006
  %v1209 = vand.u32 2147483647, %v1006
  %vm1210 = vcmp.lt.f32.partialorder %v1209, 0.0004427343
  %v1211 = vsel %vm1210, %v1208, %v1205
  %v1212 = vadd.f32 %v1008, 1.0
  %v1213 = vlog2.pop %v1212
  %v1214 = vmul.f32 %v1213, 0.6931472
  %v1215 = vmul.f32 -0.5, %v1008
  %v1216 = vadd.f32 %v1215, 1.0
  %v1217 = vmul.f32 %v1216, %v1008
  %v1218 = vand.u32 2147483647, %v1008
  %vm1219 = vcmp.lt.f32.partialorder %v1218, 0.0004427343
  %v1220 = vsel %vm1219, %v1217, %v1214
  %v1221 = vadd.f32 %v1010, 1.0
  %v1222 = vlog2.pop %v1221
  %v1223 = vmul.f32 %v1222, 0.6931472
  %v1224 = vmul.f32 -0.5, %v1010
  %v1225 = vadd.f32 %v1224, 1.0
  %v1226 = vmul.f32 %v1225, %v1010
  %v1227 = vand.u32 2147483647, %v1010
  %vm1228 = vcmp.lt.f32.partialorder %v1227, 0.0004427343
  %v1229 = vsel %vm1228, %v1226, %v1223
  %v1230 = vadd.f32 %v1012, 1.0
  %v1231 = vlog2.pop %v1230
  %v1232 = vmul.f32 %v1231, 0.6931472
  %v1233 = vmul.f32 -0.5, %v1012
  %v1234 = vadd.f32 %v1233, 1.0
  %v1235 = vmul.f32 %v1234, %v1012
  %v1236 = vand.u32 2147483647, %v1012
  %vm1237 = vcmp.lt.f32.partialorder %v1236, 0.0004427343
  %v1238 = vsel %vm1237, %v1235, %v1232
  %v1239 = vadd.f32 %v1014, 1.0
  %v1240 = vlog2.pop %v1239
  %v1241 = vmul.f32 %v1240, 0.6931472
  %v1242 = vmul.f32 -0.5, %v1014
  %v1243 = vadd.f32 %v1242, 1.0
  %v1244 = vmul.f32 %v1243, %v1014
  %v1245 = vand.u32 2147483647, %v1014
  %vm1246 = vcmp.lt.f32.partialorder %v1245, 0.0004427343
  %v1247 = vsel %vm1246, %v1244, %v1241
  %v1248 = vadd.f32 %v1016, 1.0
  %v1249 = vlog2.pop %v1248
  %v1250 = vmul.f32 %v1249, 0.6931472
  %v1251 = vmul.f32 -0.5, %v1016
  %v1252 = vadd.f32 %v1251, 1.0
  %v1253 = vmul.f32 %v1252, %v1016
  %v1254 = vand.u32 2147483647, %v1016
  %vm1255 = vcmp.lt.f32.partialorder %v1254, 0.0004427343
  %v1256 = vsel %vm1255, %v1253, %v1250
  %v1257 = vadd.f32 %v1018, 1.0
  %v1258 = vlog2.pop %v1257
  %v1259 = vmul.f32 %v1258, 0.6931472
  %v1260 = vmul.f32 -0.5, %v1018
  %v1261 = vadd.f32 %v1260, 1.0
  %v1262 = vmul.f32 %v1261, %v1018
  %v1263 = vand.u32 2147483647, %v1018
  %vm1264 = vcmp.lt.f32.partialorder %v1263, 0.0004427343
  %v1265 = vsel %vm1264, %v1262, %v1259
  %v1266 = vadd.f32 %v1020, 1.0
  %v1267 = vlog2.pop %v1266
  %v1268 = vmul.f32 %v1267, 0.6931472
  %v1269 = vmul.f32 -0.5, %v1020
  %v1270 = vadd.f32 %v1269, 1.0
  %v1271 = vmul.f32 %v1270, %v1020
  %v1272 = vand.u32 2147483647, %v1020
  %vm1273 = vcmp.lt.f32.partialorder %v1272, 0.0004427343
  %v1274 = vsel %vm1273, %v1271, %v1268
  %v1275 = vadd.f32 %v1022, 1.0
  %v1276 = vlog2.pop %v1275
  %v1277 = vmul.f32 %v1276, 0.6931472
  %v1278 = vmul.f32 -0.5, %v1022
  %v1279 = vadd.f32 %v1278, 1.0
  %v1280 = vmul.f32 %v1279, %v1022
  %v1281 = vand.u32 2147483647, %v1022
  %vm1282 = vcmp.lt.f32.partialorder %v1281, 0.0004427343
  %v1283 = vsel %vm1282, %v1280, %v1277
  %v1284 = vadd.f32 %v1024, 1.0
  %v1285 = vlog2.pop %v1284
  %v1286 = vmul.f32 %v1285, 0.6931472
  %v1287 = vmul.f32 -0.5, %v1024
  %v1288 = vadd.f32 %v1287, 1.0
  %v1289 = vmul.f32 %v1288, %v1024
  %v1290 = vand.u32 2147483647, %v1024
  %vm1291 = vcmp.lt.f32.partialorder %v1290, 0.0004427343
  %v1292 = vsel %vm1291, %v1289, %v1286
  %v1293 = vadd.f32 %v1026, 1.0
  %v1294 = vlog2.pop %v1293
  %v1295 = vmul.f32 %v1294, 0.6931472
  %v1296 = vmul.f32 -0.5, %v1026
  %v1297 = vadd.f32 %v1296, 1.0
  %v1298 = vmul.f32 %v1297, %v1026
  %v1299 = vand.u32 2147483647, %v1026
  %vm1300 = vcmp.lt.f32.partialorder %v1299, 0.0004427343
  %v1301 = vsel %vm1300, %v1298, %v1295
  %v1302 = vadd.f32 %v1028, 1.0
  %v1303 = vlog2.pop %v1302
  %v1304 = vmul.f32 %v1303, 0.6931472
  %v1305 = vmul.f32 -0.5, %v1028
  %v1306 = vadd.f32 %v1305, 1.0
  %v1307 = vmul.f32 %v1306, %v1028
  %v1308 = vand.u32 2147483647, %v1028
  %vm1309 = vcmp.lt.f32.partialorder %v1308, 0.0004427343
  %v1310 = vsel %vm1309, %v1307, %v1304
  %v1311 = vadd.f32 %v1030, 1.0
  %v1312 = vlog2.pop %v1311
  %v1313 = vmul.f32 %v1312, 0.6931472
  %v1314 = vmul.f32 -0.5, %v1030
  %v1315 = vadd.f32 %v1314, 1.0
  %v1316 = vmul.f32 %v1315, %v1030
  %v1317 = vand.u32 2147483647, %v1030
  %vm1318 = vcmp.lt.f32.partialorder %v1317, 0.0004427343
  %v1319 = vsel %vm1318, %v1316, %v1313
  %v1320 = vadd.f32 %v1032, 1.0
  %v1321 = vlog2.pop %v1320
  %v1322 = vmul.f32 %v1321, 0.6931472
  %v1323 = vmul.f32 -0.5, %v1032
  %v1324 = vadd.f32 %v1323, 1.0
  %v1325 = vmul.f32 %v1324, %v1032
  %v1326 = vand.u32 2147483647, %v1032
  %vm1327 = vcmp.lt.f32.partialorder %v1326, 0.0004427343
  %v1328 = vsel %vm1327, %v1325, %v1322
  %v1329 = vadd.f32 %v1034, 1.0
  %v1330 = vlog2.pop %v1329
  %v1331 = vmul.f32 %v1330, 0.6931472
  %v1332 = vmul.f32 -0.5, %v1034
  %v1333 = vadd.f32 %v1332, 1.0
  %v1334 = vmul.f32 %v1333, %v1034
  %v1335 = vand.u32 2147483647, %v1034
  %vm1336 = vcmp.lt.f32.partialorder %v1335, 0.0004427343
  %v1337 = vsel %vm1336, %v1334, %v1331
  %v1338 = vadd.f32 %v1036, 1.0
  %v1339 = vlog2.pop %v1338
  %v1340 = vmul.f32 %v1339, 0.6931472
  %v1341 = vmul.f32 -0.5, %v1036
  %v1342 = vadd.f32 %v1341, 1.0
  %v1343 = vmul.f32 %v1342, %v1036
  %v1344 = vand.u32 2147483647, %v1036
  %vm1345 = vcmp.lt.f32.partialorder %v1344, 0.0004427343
  %v1346 = vsel %vm1345, %v1343, %v1340
  %v1347 = vadd.f32 %v1038, 1.0
  %v1348 = vlog2.pop %v1347
  %v1349 = vmul.f32 %v1348, 0.6931472
  %v1350 = vmul.f32 -0.5, %v1038
  %v1351 = vadd.f32 %v1350, 1.0
  %v1352 = vmul.f32 %v1351, %v1038
  %v1353 = vand.u32 2147483647, %v1038
  %vm1354 = vcmp.lt.f32.partialorder %v1353, 0.0004427343
  %v1355 = vsel %vm1354, %v1352, %v1349
  %v1356 = vadd.f32 %v1040, 1.0
  %v1357 = vlog2.pop %v1356
  %v1358 = vmul.f32 %v1357, 0.6931472
  %v1359 = vmul.f32 -0.5, %v1040
  %v1360 = vadd.f32 %v1359, 1.0
  %v1361 = vmul.f32 %v1360, %v1040
  %v1362 = vand.u32 2147483647, %v1040
  %vm1363 = vcmp.lt.f32.partialorder %v1362, 0.0004427343
  %v1364 = vsel %vm1363, %v1361, %v1358
  %v1365 = vadd.f32 %v1042, 1.0
  %v1366 = vlog2.pop %v1365
  %v1367 = vmul.f32 %v1366, 0.6931472
  %v1368 = vmul.f32 -0.5, %v1042
  %v1369 = vadd.f32 %v1368, 1.0
  %v1370 = vmul.f32 %v1369, %v1042
  %v1371 = vand.u32 2147483647, %v1042
  %vm1372 = vcmp.lt.f32.partialorder %v1371, 0.0004427343
  %v1373 = vsel %vm1372, %v1370, %v1367
  %v1374 = vadd.f32 %v1044, 1.0
  %v1375 = vlog2.pop %v1374
  %v1376 = vmul.f32 %v1375, 0.6931472
  %v1377 = vmul.f32 -0.5, %v1044
  %v1378 = vadd.f32 %v1377, 1.0
  %v1379 = vmul.f32 %v1378, %v1044
  %v1380 = vand.u32 2147483647, %v1044
  %vm1381 = vcmp.lt.f32.partialorder %v1380, 0.0004427343
  %v1382 = vsel %vm1381, %v1379, %v1376
  %v1383 = vadd.f32 %v1046, 1.0
  %v1384 = vlog2.pop %v1383
  %v1385 = vmul.f32 %v1384, 0.6931472
  %v1386 = vmul.f32 -0.5, %v1046
  %v1387 = vadd.f32 %v1386, 1.0
  %v1388 = vmul.f32 %v1387, %v1046
  %v1389 = vand.u32 2147483647, %v1046
  %vm1390 = vcmp.lt.f32.partialorder %v1389, 0.0004427343
  %v1391 = vsel %vm1390, %v1388, %v1385
  %v1392 = vadd.f32 %v1048, 1.0
  %v1393 = vlog2.pop %v1392
  %v1394 = vmul.f32 %v1393, 0.6931472
  %v1395 = vmul.f32 -0.5, %v1048
  %v1396 = vadd.f32 %v1395, 1.0
  %v1397 = vmul.f32 %v1396, %v1048
  %v1398 = vand.u32 2147483647, %v1048
  %vm1399 = vcmp.lt.f32.partialorder %v1398, 0.0004427343
  %v1400 = vsel %vm1399, %v1397, %v1394
  %v1401 = vadd.f32 %v1050, 1.0
  %v1402 = vlog2.pop %v1401
  %v1403 = vmul.f32 %v1402, 0.6931472
  %v1404 = vmul.f32 -0.5, %v1050
  %v1405 = vadd.f32 %v1404, 1.0
  %v1406 = vmul.f32 %v1405, %v1050
  %v1407 = vand.u32 2147483647, %v1050
  %vm1408 = vcmp.lt.f32.partialorder %v1407, 0.0004427343
  %v1409 = vsel %vm1408, %v1406, %v1403
  %v1410 = vadd.f32 %v1052, 1.0
  %v1411 = vlog2.pop %v1410
  %v1412 = vmul.f32 %v1411, 0.6931472
  %v1413 = vmul.f32 -0.5, %v1052
  %v1414 = vadd.f32 %v1413, 1.0
  %v1415 = vmul.f32 %v1414, %v1052
  %v1416 = vand.u32 2147483647, %v1052
  %vm1417 = vcmp.lt.f32.partialorder %v1416, 0.0004427343
  %v1418 = vsel %vm1417, %v1415, %v1412
  %v1419 = vadd.f32 %v1054, 1.0
  %v1420 = vlog2.pop %v1419
  %v1421 = vmul.f32 %v1420, 0.6931472
  %v1422 = vmul.f32 -0.5, %v1054
  %v1423 = vadd.f32 %v1422, 1.0
  %v1424 = vmul.f32 %v1423, %v1054
  %v1425 = vand.u32 2147483647, %v1054
  %vm1426 = vcmp.lt.f32.partialorder %v1425, 0.0004427343
  %v1427 = vsel %vm1426, %v1424, %v1421
  %v1428 = vadd.f32 %v1056, 1.0
  %v1429 = vlog2.pop %v1428
  %v1430 = vmul.f32 %v1429, 0.6931472
  %v1431 = vmul.f32 -0.5, %v1056
  %v1432 = vadd.f32 %v1431, 1.0
  %v1433 = vmul.f32 %v1432, %v1056
  %v1434 = vand.u32 2147483647, %v1056
  %vm1435 = vcmp.lt.f32.partialorder %v1434, 0.0004427343
  %v1436 = vsel %vm1435, %v1433, %v1430
  %v1437 = vadd.f32 %v1058, 1.0
  %v1438 = vlog2.pop %v1437
  %v1439 = vmul.f32 %v1438, 0.6931472
  %v1440 = vmul.f32 -0.5, %v1058
  %v1441 = vadd.f32 %v1440, 1.0
  %v1442 = vmul.f32 %v1441, %v1058
  %v1443 = vand.u32 2147483647, %v1058
  %vm1444 = vcmp.lt.f32.partialorder %v1443, 0.0004427343
  %v1445 = vsel %vm1444, %v1442, %v1439
  %v1446 = vadd.f32 %v1060, 1.0
  %v1447 = vlog2.pop %v1446
  %v1448 = vmul.f32 %v1447, 0.6931472
  %v1449 = vmul.f32 -0.5, %v1060
  %v1450 = vadd.f32 %v1449, 1.0
  %v1451 = vmul.f32 %v1450, %v1060
  %v1452 = vand.u32 2147483647, %v1060
  %vm1453 = vcmp.lt.f32.partialorder %v1452, 0.0004427343
  %v1454 = vsel %vm1453, %v1451, %v1448
  %v1455 = vadd.f32 %v1062, 1.0
  %v1456 = vlog2.pop %v1455
  %v1457 = vmul.f32 %v1456, 0.6931472
  %v1458 = vmul.f32 -0.5, %v1062
  %v1459 = vadd.f32 %v1458, 1.0
  %v1460 = vmul.f32 %v1459, %v1062
  %v1461 = vand.u32 2147483647, %v1062
  %vm1462 = vcmp.lt.f32.partialorder %v1461, 0.0004427343
  %v1463 = vsel %vm1462, %v1460, %v1457
  %v1464 = vadd.f32 %v1064, 1.0
  %v1465 = vlog2.pop %v1464
  %v1466 = vmul.f32 %v1465, 0.6931472
  %v1467 = vmul.f32 -0.5, %v1064
  %v1468 = vadd.f32 %v1467, 1.0
  %v1469 = vmul.f32 %v1468, %v1064
  %v1470 = vand.u32 2147483647, %v1064
  %vm1471 = vcmp.lt.f32.partialorder %v1470, 0.0004427343
  %v1472 = vsel %vm1471, %v1469, %v1466
  %v1473 = vadd.f32 %v1066, 1.0
  %v1474 = vlog2.pop %v1473
  %v1475 = vmul.f32 %v1474, 0.6931472
  %v1476 = vmul.f32 -0.5, %v1066
  %v1477 = vadd.f32 %v1476, 1.0
  %v1478 = vmul.f32 %v1477, %v1066
  %v1479 = vand.u32 2147483647, %v1066
  %vm1480 = vcmp.lt.f32.partialorder %v1479, 0.0004427343
  %v1481 = vsel %vm1480, %v1478, %v1475
  %v1482 = vadd.f32 %v1068, 1.0
  %v1483 = vlog2.pop %v1482
  %v1484 = vmul.f32 %v1483, 0.6931472
  %v1485 = vmul.f32 -0.5, %v1068
  %v1486 = vadd.f32 %v1485, 1.0
  %v1487 = vmul.f32 %v1486, %v1068
  %v1488 = vand.u32 2147483647, %v1068
  %vm1489 = vcmp.lt.f32.partialorder %v1488, 0.0004427343
  %v1490 = vsel %vm1489, %v1487, %v1484
  %v1491 = vadd.f32 %v1070, 1.0
  %v1492 = vlog2.pop %v1491
  %v1493 = vmul.f32 %v1492, 0.6931472
  %v1494 = vmul.f32 -0.5, %v1070
  %v1495 = vadd.f32 %v1494, 1.0
  %v1496 = vmul.f32 %v1495, %v1070
  %v1497 = vand.u32 2147483647, %v1070
  %vm1498 = vcmp.lt.f32.partialorder %v1497, 0.0004427343
  %v1499 = vsel %vm1498, %v1496, %v1493
  %v1500 = vadd.f32 %v1072, 1.0
  %v1501 = vlog2.pop %v1500
  %v1502 = vmul.f32 %v1501, 0.6931472
  %v1503 = vmul.f32 -0.5, %v1072
  %v1504 = vadd.f32 %v1503, 1.0
  %v1505 = vmul.f32 %v1504, %v1072
  %v1506 = vand.u32 2147483647, %v1072
  %vm1507 = vcmp.lt.f32.partialorder %v1506, 0.0004427343
  %v1508 = vsel %vm1507, %v1505, %v1502
  %v1509 = vadd.f32 %v1074, 1.0
  %v1510 = vlog2.pop %v1509
  %v1511 = vmul.f32 %v1510, 0.6931472
  %v1512 = vmul.f32 -0.5, %v1074
  %v1513 = vadd.f32 %v1512, 1.0
  %v1514 = vmul.f32 %v1513, %v1074
  %v1515 = vand.u32 2147483647, %v1074
  %vm1516 = vcmp.lt.f32.partialorder %v1515, 0.0004427343
  %v1517 = vsel %vm1516, %v1514, %v1511
  %v1518 = vadd.f32 %v1076, 1.0
  %v1519 = vlog2.pop %v1518
  %v1520 = vmul.f32 %v1519, 0.6931472
  %v1521 = vmul.f32 -0.5, %v1076
  %v1522 = vadd.f32 %v1521, 1.0
  %v1523 = vmul.f32 %v1522, %v1076
  %v1524 = vand.u32 2147483647, %v1076
  %vm1525 = vcmp.lt.f32.partialorder %v1524, 0.0004427343
  %v1526 = vsel %vm1525, %v1523, %v1520
  %v1527 = vadd.f32 %v1078, 1.0
  %v1528 = vlog2.pop %v1527
  %v1529 = vmul.f32 %v1528, 0.6931472
  %v1530 = vmul.f32 -0.5, %v1078
  %v1531 = vadd.f32 %v1530, 1.0
  %v1532 = vmul.f32 %v1531, %v1078
  %v1533 = vand.u32 2147483647, %v1078
  %vm1534 = vcmp.lt.f32.partialorder %v1533, 0.0004427343
  %v1535 = vsel %vm1534, %v1532, %v1529
  %v1536 = vadd.f32 %v1080, 1.0
  %v1537 = vlog2.pop %v1536
  %v1538 = vmul.f32 %v1537, 0.6931472
  %v1539 = vmul.f32 -0.5, %v1080
  %v1540 = vadd.f32 %v1539, 1.0
  %v1541 = vmul.f32 %v1540, %v1080
  %v1542 = vand.u32 2147483647, %v1080
  %vm1543 = vcmp.lt.f32.partialorder %v1542, 0.0004427343
  %v1544 = vsel %vm1543, %v1541, %v1538
  %v1545 = vadd.f32 %v1082, 1.0
  %v1546 = vlog2.pop %v1545
  %v1547 = vmul.f32 %v1546, 0.6931472
  %v1548 = vmul.f32 -0.5, %v1082
  %v1549 = vadd.f32 %v1548, 1.0
  %v1550 = vmul.f32 %v1549, %v1082
  %v1551 = vand.u32 2147483647, %v1082
  %vm1552 = vcmp.lt.f32.partialorder %v1551, 0.0004427343
  %v1553 = vsel %vm1552, %v1550, %v1547
  %v1554 = vadd.f32 %v1084, 1.0
  %v1555 = vlog2.pop %v1554
  %v1556 = vmul.f32 %v1555, 0.6931472
  %v1557 = vmul.f32 -0.5, %v1084
  %v1558 = vadd.f32 %v1557, 1.0
  %v1559 = vmul.f32 %v1558, %v1084
  %v1560 = vand.u32 2147483647, %v1084
  %vm1561 = vcmp.lt.f32.partialorder %v1560, 0.0004427343
  %v1562 = vsel %vm1561, %v1559, %v1556
  %v1563 = vadd.f32 %v1086, 1.0
  %v1564 = vlog2.pop %v1563
  %v1565 = vmul.f32 %v1564, 0.6931472
  %v1566 = vmul.f32 -0.5, %v1086
  %v1567 = vadd.f32 %v1566, 1.0
  %v1568 = vmul.f32 %v1567, %v1086
  %v1569 = vand.u32 2147483647, %v1086
  %vm1570 = vcmp.lt.f32.partialorder %v1569, 0.0004427343
  %v1571 = vsel %vm1570, %v1568, %v1565
  %v1572 = vadd.f32 %v1088, 1.0
  %v1573 = vlog2.pop %v1572
  %v1574 = vmul.f32 %v1573, 0.6931472
  %v1575 = vmul.f32 -0.5, %v1088
  %v1576 = vadd.f32 %v1575, 1.0
  %v1577 = vmul.f32 %v1576, %v1088
  %v1578 = vand.u32 2147483647, %v1088
  %vm1579 = vcmp.lt.f32.partialorder %v1578, 0.0004427343
  %v1580 = vsel %vm1579, %v1577, %v1574
  %v1581 = vadd.f32 %v1090, 1.0
  %v1582 = vlog2.pop %v1581
  %v1583 = vmul.f32 %v1582, 0.6931472
  %v1584 = vmul.f32 -0.5, %v1090
  %v1585 = vadd.f32 %v1584, 1.0
  %v1586 = vmul.f32 %v1585, %v1090
  %v1587 = vand.u32 2147483647, %v1090
  %vm1588 = vcmp.lt.f32.partialorder %v1587, 0.0004427343
  %v1589 = vsel %vm1588, %v1586, %v1583
  %v1590 = vadd.f32 %v1092, 1.0
  %v1591 = vlog2.pop %v1590
  %v1592 = vmul.f32 %v1591, 0.6931472
  %v1593 = vmul.f32 -0.5, %v1092
  %v1594 = vadd.f32 %v1593, 1.0
  %v1595 = vmul.f32 %v1594, %v1092
  %v1596 = vand.u32 2147483647, %v1092
  %vm1597 = vcmp.lt.f32.partialorder %v1596, 0.0004427343
  %v1598 = vsel %vm1597, %v1595, %v1592
  %v1599 = vadd.f32 %v1094, 1.0
  %v1600 = vlog2.pop %v1599
  %v1601 = vmul.f32 %v1600, 0.6931472
  %v1602 = vmul.f32 -0.5, %v1094
  %v1603 = vadd.f32 %v1602, 1.0
  %v1604 = vmul.f32 %v1603, %v1094
  %v1605 = vand.u32 2147483647, %v1094
  %vm1606 = vcmp.lt.f32.partialorder %v1605, 0.0004427343
  %v1607 = vsel %vm1606, %v1604, %v1601
  %v1608 = vadd.f32 %v1096, 1.0
  %v1609 = vlog2.pop %v1608
  %v1610 = vmul.f32 %v1609, 0.6931472
  %v1611 = vmul.f32 -0.5, %v1096
  %v1612 = vadd.f32 %v1611, 1.0
  %v1613 = vmul.f32 %v1612, %v1096
  %v1614 = vand.u32 2147483647, %v1096
  %vm1615 = vcmp.lt.f32.partialorder %v1614, 0.0004427343
  %v1616 = vsel %vm1615, %v1613, %v1610
  %v1617 = vadd.f32 %v1098, 1.0
  %v1618 = vlog2.pop %v1617
  %v1619 = vmul.f32 %v1618, 0.6931472
  %v1620 = vmul.f32 -0.5, %v1098
  %v1621 = vadd.f32 %v1620, 1.0
  %v1622 = vmul.f32 %v1621, %v1098
  %v1623 = vand.u32 2147483647, %v1098
  %vm1624 = vcmp.lt.f32.partialorder %v1623, 0.0004427343
  %v1625 = vsel %vm1624, %v1622, %v1619
  %v1626 = vadd.f32 %v1100, 1.0
  %v1627 = vlog2.pop %v1626
  %v1628 = vmul.f32 %v1627, 0.6931472
  %v1629 = vmul.f32 -0.5, %v1100
  %v1630 = vadd.f32 %v1629, 1.0
  %v1631 = vmul.f32 %v1630, %v1100
  %v1632 = vand.u32 2147483647, %v1100
  %vm1633 = vcmp.lt.f32.partialorder %v1632, 0.0004427343
  %v1634 = vsel %vm1633, %v1631, %v1628
  %v1635 = vadd.f32 %v1102, 1.0
  %v1636 = vlog2.pop %v1635
  %v1637 = vmul.f32 %v1636, 0.6931472
  %v1638 = vmul.f32 -0.5, %v1102
  %v1639 = vadd.f32 %v1638, 1.0
  %v1640 = vmul.f32 %v1639, %v1102
  %v1641 = vand.u32 2147483647, %v1102
  %vm1642 = vcmp.lt.f32.partialorder %v1641, 0.0004427343
  %v1643 = vsel %vm1642, %v1640, %v1637
  %v1644 = vadd.f32 %v1104, 1.0
  %v1645 = vlog2.pop %v1644
  %v1646 = vmul.f32 %v1645, 0.6931472
  %v1647 = vmul.f32 -0.5, %v1104
  %v1648 = vadd.f32 %v1647, 1.0
  %v1649 = vmul.f32 %v1648, %v1104
  %v1650 = vand.u32 2147483647, %v1104
  %vm1651 = vcmp.lt.f32.partialorder %v1650, 0.0004427343
  %v1652 = vsel %vm1651, %v1649, %v1646
  %v1653 = vadd.f32 %v1106, 1.0
  %v1654 = vlog2.pop %v1653
  %v1655 = vmul.f32 %v1654, 0.6931472
  %v1656 = vmul.f32 -0.5, %v1106
  %v1657 = vadd.f32 %v1656, 1.0
  %v1658 = vmul.f32 %v1657, %v1106
  %v1659 = vand.u32 2147483647, %v1106
  %vm1660 = vcmp.lt.f32.partialorder %v1659, 0.0004427343
  %v1661 = vsel %vm1660, %v1658, %v1655
  %v1662 = vadd.f32 %v1108, 1.0
  %v1663 = vlog2.pop %v1662
  %v1664 = vmul.f32 %v1663, 0.6931472
  %v1665 = vmul.f32 -0.5, %v1108
  %v1666 = vadd.f32 %v1665, 1.0
  %v1667 = vmul.f32 %v1666, %v1108
  %v1668 = vand.u32 2147483647, %v1108
  %vm1669 = vcmp.lt.f32.partialorder %v1668, 0.0004427343
  %v1670 = vsel %vm1669, %v1667, %v1664
  %v1671 = vadd.f32 %v1110, 1.0
  %v1672 = vlog2.pop %v1671
  %v1673 = vmul.f32 %v1672, 0.6931472
  %v1674 = vmul.f32 -0.5, %v1110
  %v1675 = vadd.f32 %v1674, 1.0
  %v1676 = vmul.f32 %v1675, %v1110
  %v1677 = vand.u32 2147483647, %v1110
  %vm1678 = vcmp.lt.f32.partialorder %v1677, 0.0004427343
  %v1679 = vsel %vm1678, %v1676, %v1673
  %v1680 = vadd.f32 %v1112, 1.0
  %v1681 = vlog2.pop %v1680
  %v1682 = vmul.f32 %v1681, 0.6931472
  %v1683 = vmul.f32 -0.5, %v1112
  %v1684 = vadd.f32 %v1683, 1.0
  %v1685 = vmul.f32 %v1684, %v1112
  %v1686 = vand.u32 2147483647, %v1112
  %vm1687 = vcmp.lt.f32.partialorder %v1686, 0.0004427343
  %v1688 = vsel %vm1687, %v1685, %v1682
  %v1689 = vadd.f32 %v793, %v1121
  %v1690 = vadd.f32 %v794, %v1130
  %v1691 = vadd.f32 %v795, %v1139
  %v1692 = vadd.f32 %v796, %v1148
  %v1693 = vadd.f32 %v797, %v1157
  %v1694 = vadd.f32 %v798, %v1166
  %v1695 = vadd.f32 %v799, %v1175
  %v1696 = vadd.f32 %v800, %v1184
  %v1697 = vadd.f32 %v801, %v1193
  %v1698 = vadd.f32 %v802, %v1202
  %v1699 = vadd.f32 %v803, %v1211
  %v1700 = vadd.f32 %v804, %v1220
  %v1701 = vadd.f32 %v805, %v1229
  %v1702 = vadd.f32 %v806, %v1238
  %v1703 = vadd.f32 %v807, %v1247
  %v1704 = vadd.f32 %v808, %v1256
  %v1705 = vadd.f32 %v809, %v1265
  %v1706 = vadd.f32 %v810, %v1274
  %v1707 = vadd.f32 %v811, %v1283
  %v1708 = vadd.f32 %v812, %v1292
  %v1709 = vadd.f32 %v813, %v1301
  %v1710 = vadd.f32 %v814, %v1310
  %v1711 = vadd.f32 %v815, %v1319
  %v1712 = vadd.f32 %v816, %v1328
  %v1713 = vadd.f32 %v817, %v1337
  %v1714 = vadd.f32 %v818, %v1346
  %v1715 = vadd.f32 %v819, %v1355
  %v1716 = vadd.f32 %v820, %v1364
  %v1717 = vadd.f32 %v821, %v1373
  %v1718 = vadd.f32 %v822, %v1382
  %v1719 = vadd.f32 %v823, %v1391
  %v1720 = vadd.f32 %v824, %v1400
  %v1721 = vadd.f32 %v825, %v1409
  %v1722 = vadd.f32 %v826, %v1418
  %v1723 = vadd.f32 %v827, %v1427
  %v1724 = vadd.f32 %v828, %v1436
  %v1725 = vadd.f32 %v829, %v1445
  %v1726 = vadd.f32 %v830, %v1454
  %v1727 = vadd.f32 %v831, %v1463
  %v1728 = vadd.f32 %v832, %v1472
  %v1729 = vadd.f32 %v833, %v1481
  %v1730 = vadd.f32 %v834, %v1490
  %v1731 = vadd.f32 %v835, %v1499
  %v1732 = vadd.f32 %v836, %v1508
  %v1733 = vadd.f32 %v837, %v1517
  %v1734 = vadd.f32 %v838, %v1526
  %v1735 = vadd.f32 %v839, %v1535
  %v1736 = vadd.f32 %v840, %v1544
  %v1737 = vadd.f32 %v841, %v1553
  %v1738 = vadd.f32 %v842, %v1562
  %v1739 = vadd.f32 %v843, %v1571
  %v1740 = vadd.f32 %v844, %v1580
  %v1741 = vadd.f32 %v845, %v1589
  %v1742 = vadd.f32 %v846, %v1598
  %v1743 = vadd.f32 %v847, %v1607
  %v1744 = vadd.f32 %v848, %v1616
  %v1745 = vadd.f32 %v849, %v1625
  %v1746 = vadd.f32 %v850, %v1634
  %v1747 = vadd.f32 %v851, %v1643
  %v1748 = vadd.f32 %v852, %v1652
  %v1749 = vadd.f32 %v853, %v1661
  %v1750 = vadd.f32 %v854, %v1670
  %v1751 = vadd.f32 %v855, %v1679
  %v1752 = vadd.f32 %v856, %v1688
  %v1753 = vpack.c.bf16 %v1693, %v1689
  %v1754 = vpack.c.bf16 %v1694, %v1690
  %v1755 = vpack.c.bf16 %v1695, %v1691
  %v1756 = vpack.c.bf16 %v1696, %v1692
  %v1757 = vpack.c.bf16 %v1701, %v1697
  %v1758 = vpack.c.bf16 %v1702, %v1698
  %v1759 = vpack.c.bf16 %v1703, %v1699
  %v1760 = vpack.c.bf16 %v1704, %v1700
  %v1761 = vpack.c.bf16 %v1709, %v1705
  %v1762 = vpack.c.bf16 %v1710, %v1706
  %v1763 = vpack.c.bf16 %v1711, %v1707
  %v1764 = vpack.c.bf16 %v1712, %v1708
  %v1765 = vpack.c.bf16 %v1717, %v1713
  %v1766 = vpack.c.bf16 %v1718, %v1714
  %v1767 = vpack.c.bf16 %v1719, %v1715
  %v1768 = vpack.c.bf16 %v1720, %v1716
  %v1769 = vpack.c.bf16 %v1725, %v1721
  %v1770 = vpack.c.bf16 %v1726, %v1722
  %v1771 = vpack.c.bf16 %v1727, %v1723
  %v1772 = vpack.c.bf16 %v1728, %v1724
  %v1773 = vpack.c.bf16 %v1733, %v1729
  %v1774 = vpack.c.bf16 %v1734, %v1730
  %v1775 = vpack.c.bf16 %v1735, %v1731
  %v1776 = vpack.c.bf16 %v1736, %v1732
  %v1777 = vpack.c.bf16 %v1741, %v1737
  %v1778 = vpack.c.bf16 %v1742, %v1738
  %v1779 = vpack.c.bf16 %v1743, %v1739
  %v1780 = vpack.c.bf16 %v1744, %v1740
  %v1781 = vpack.c.bf16 %v1749, %v1745
  %v1782 = vpack.c.bf16 %v1750, %v1746
  %v1783 = vpack.c.bf16 %v1751, %v1747
  %v1784 = vpack.c.bf16 %v1752, %v1748
  %v1785 = vld [vmem:[%s5] sm:$0xff]
  %v1786 = vld [vmem:[%s5 + $0x8] sm:$0xff]
  %v1787 = vld [vmem:[%s5 + $0x10] sm:$0xff]
  %v1788 = vld [vmem:[%s5 + $0x18] sm:$0xf]
  %v1789 = vld [vmem:[%s5 + $0x1c] sm:$0xff]
  %v1790 = vld [vmem:[%s5 + $0x24] sm:$0xff]
  %v1791 = vld [vmem:[%s5 + $0x2c] sm:$0xff]
  %v1792 = vld [vmem:[%s5 + $0x34] sm:$0xf]
  %v1793 = vld [vmem:[%s5 + $0x38] sm:$0xff]
  %v1794 = vld [vmem:[%s5 + $0x40] sm:$0xff]
  %v1795 = vld [vmem:[%s5 + $0x48] sm:$0xff]
  %v1796 = vld [vmem:[%s5 + $0x50] sm:$0xf]
  %v1797 = vld [vmem:[%s5 + $0x54] sm:$0xff]
  %v1798 = vld [vmem:[%s5 + $0x5c] sm:$0xff]
  %v1799 = vld [vmem:[%s5 + $0x64] sm:$0xff]
  %v1800 = vld [vmem:[%s5 + $0x6c] sm:$0xf]
  %v1801 = vld [vmem:[%s5 + $0x70] sm:$0xff]
  %v1802 = vld [vmem:[%s5 + $0x78] sm:$0xff]
  %v1803 = vld [vmem:[%s5 + $0x80] sm:$0xff]
  %v1804 = vld [vmem:[%s5 + $0x88] sm:$0xf]
  %v1805 = vld [vmem:[%s5 + $0x8c] sm:$0xff]
  %v1806 = vld [vmem:[%s5 + $0x94] sm:$0xff]
  %v1807 = vld [vmem:[%s5 + $0x9c] sm:$0xff]
  %v1808 = vld [vmem:[%s5 + $0xa4] sm:$0xf]
  %v1809 = vld [vmem:[%s5 + $0xa8] sm:$0xff]
  %v1810 = vld [vmem:[%s5 + $0xb0] sm:$0xff]
  %v1811 = vld [vmem:[%s5 + $0xb8] sm:$0xff]
  %v1812 = vld [vmem:[%s5 + $0xc0] sm:$0xf]
  %v1813 = vld [vmem:[%s5 + $0xc4] sm:$0xff]
  %v1814 = vld [vmem:[%s5 + $0xcc] sm:$0xff]
  %v1815 = vld [vmem:[%s5 + $0xd4] sm:$0xff]
  %v1816 = vld [vmem:[%s5 + $0xdc] sm:$0xf]
  %v1817 = vld [vmem:[%s5 + $0xe0] sm:$0xff]
  %v1818 = vld [vmem:[%s5 + $0xe8] sm:$0xff]
  %v1819 = vld [vmem:[%s5 + $0xf0] sm:$0xff]
  %v1820 = vld [vmem:[%s5 + $0xf8] sm:$0xf]
  %v1821 = vld [vmem:[%s5 + $0xfc] sm:$0xff]
  %v1822 = vld [vmem:[%s5 + $0x104] sm:$0xff]
  %v1823 = vld [vmem:[%s5 + $0x10c] sm:$0xff]
  %v1824 = vld [vmem:[%s5 + $0x114] sm:$0xf]
  %v1825 = vld [vmem:[%s5 + $0x118] sm:$0xff]
  %v1826 = vld [vmem:[%s5 + $0x120] sm:$0xff]
  %v1827 = vld [vmem:[%s5 + $0x128] sm:$0xff]
  %v1828 = vld [vmem:[%s5 + $0x130] sm:$0xf]
  %v1829 = vld [vmem:[%s5 + $0x134] sm:$0xff]
  %v1830 = vld [vmem:[%s5 + $0x13c] sm:$0xff]
  %v1831 = vld [vmem:[%s5 + $0x144] sm:$0xff]
  %v1832 = vld [vmem:[%s5 + $0x14c] sm:$0xf]
  %v1833 = vld [vmem:[%s5 + $0x150] sm:$0xff]
  %v1834 = vld [vmem:[%s5 + $0x158] sm:$0xff]
  %v1835 = vld [vmem:[%s5 + $0x160] sm:$0xff]
  %v1836 = vld [vmem:[%s5 + $0x168] sm:$0xf]
  %v1837 = vld [vmem:[%s5 + $0x16c] sm:$0xff]
  %v1838 = vld [vmem:[%s5 + $0x174] sm:$0xff]
  %v1839 = vld [vmem:[%s5 + $0x17c] sm:$0xff]
  %v1840 = vld [vmem:[%s5 + $0x184] sm:$0xf]
  %v1841 = vld [vmem:[%s5 + $0x188] sm:$0xff]
  %v1842 = vld [vmem:[%s5 + $0x190] sm:$0xff]
  %v1843 = vld [vmem:[%s5 + $0x198] sm:$0xff]
  %v1844 = vld [vmem:[%s5 + $0x1a0] sm:$0xf]
  %v1845 = vld [vmem:[%s5 + $0x1a4] sm:$0xff]
  %v1846 = vld [vmem:[%s5 + $0x1ac] sm:$0xff]
  %v1847 = vld [vmem:[%s5 + $0x1b4] sm:$0xff]
  %v1848 = vld [vmem:[%s5 + $0x1bc] sm:$0xf]
  %v1849 = vld [vmem:[%s5 + $0x1c0] sm:$0xff]
  %v1850 = vld [vmem:[%s5 + $0x1c8] sm:$0xff]
  %v1851 = vld [vmem:[%s5 + $0x1d0] sm:$0xff]
  %v1852 = vld [vmem:[%s5 + $0x1d8] sm:$0xf]
  %v1853 = vld [vmem:[%s5 + $0x1dc] sm:$0xff]
  %v1854 = vld [vmem:[%s5 + $0x1e4] sm:$0xff]
  %v1855 = vld [vmem:[%s5 + $0x1ec] sm:$0xff]
  %v1856 = vld [vmem:[%s5 + $0x1f4] sm:$0xf]
  %v1857 = vld [vmem:[%s5 + $0x1f8] sm:$0xff]
  %v1858 = vld [vmem:[%s5 + $0x200] sm:$0xff]
  %v1859 = vld [vmem:[%s5 + $0x208] sm:$0xff]
  %v1860 = vld [vmem:[%s5 + $0x210] sm:$0xf]
  %v1861 = vld [vmem:[%s5 + $0x214] sm:$0xff]
  %v1862 = vld [vmem:[%s5 + $0x21c] sm:$0xff]
  %v1863 = vld [vmem:[%s5 + $0x224] sm:$0xff]
  %v1864 = vld [vmem:[%s5 + $0x22c] sm:$0xf]
  %v1865 = vld [vmem:[%s5 + $0x230] sm:$0xff]
  %v1866 = vld [vmem:[%s5 + $0x238] sm:$0xff]
  %v1867 = vld [vmem:[%s5 + $0x240] sm:$0xff]
  %v1868 = vld [vmem:[%s5 + $0x248] sm:$0xf]
  %v1869 = vld [vmem:[%s5 + $0x24c] sm:$0xff]
  %v1870 = vld [vmem:[%s5 + $0x254] sm:$0xff]
  %v1871 = vld [vmem:[%s5 + $0x25c] sm:$0xff]
  %v1872 = vld [vmem:[%s5 + $0x264] sm:$0xf]
  %v1873 = vld [vmem:[%s5 + $0x268] sm:$0xff]
  %v1874 = vld [vmem:[%s5 + $0x270] sm:$0xff]
  %v1875 = vld [vmem:[%s5 + $0x278] sm:$0xff]
  %v1876 = vld [vmem:[%s5 + $0x280] sm:$0xf]
  %v1877 = vld [vmem:[%s5 + $0x284] sm:$0xff]
  %v1878 = vld [vmem:[%s5 + $0x28c] sm:$0xff]
  %v1879 = vld [vmem:[%s5 + $0x294] sm:$0xff]
  %v1880 = vld [vmem:[%s5 + $0x29c] sm:$0xf]
  %v1881 = vld [vmem:[%s5 + $0x2a0] sm:$0xff]
  %v1882 = vld [vmem:[%s5 + $0x2a8] sm:$0xff]
  %v1883 = vld [vmem:[%s5 + $0x2b0] sm:$0xff]
  %v1884 = vld [vmem:[%s5 + $0x2b8] sm:$0xf]
  %v1885 = vld [vmem:[%s5 + $0x2bc] sm:$0xff]
  %v1886 = vld [vmem:[%s5 + $0x2c4] sm:$0xff]
  %v1887 = vld [vmem:[%s5 + $0x2cc] sm:$0xff]
  %v1888 = vld [vmem:[%s5 + $0x2d4] sm:$0xf]
  %v1889 = vld [vmem:[%s5 + $0x2d8] sm:$0xff]
  %v1890 = vld [vmem:[%s5 + $0x2e0] sm:$0xff]
  %v1891 = vld [vmem:[%s5 + $0x2e8] sm:$0xff]
  %v1892 = vld [vmem:[%s5 + $0x2f0] sm:$0xf]
  %v1893 = vld [vmem:[%s5 + $0x2f4] sm:$0xff]
  %v1894 = vld [vmem:[%s5 + $0x2fc] sm:$0xff]
  %v1895 = vld [vmem:[%s5 + $0x304] sm:$0xff]
  %v1896 = vld [vmem:[%s5 + $0x30c] sm:$0xf]
  %v1897 = vld [vmem:[%s5 + $0x310] sm:$0xff]
  %v1898 = vld [vmem:[%s5 + $0x318] sm:$0xff]
  %v1899 = vld [vmem:[%s5 + $0x320] sm:$0xff]
  %v1900 = vld [vmem:[%s5 + $0x328] sm:$0xf]
  %v1901 = vld [vmem:[%s5 + $0x32c] sm:$0xff]
  %v1902 = vld [vmem:[%s5 + $0x334] sm:$0xff]
  %v1903 = vld [vmem:[%s5 + $0x33c] sm:$0xff]
  %v1904 = vld [vmem:[%s5 + $0x344] sm:$0xf]
  %v1905 = vld [vmem:[%s5 + $0x348] sm:$0xff]
  %v1906 = vld [vmem:[%s5 + $0x350] sm:$0xff]
  %v1907 = vld [vmem:[%s5 + $0x358] sm:$0xff]
  %v1908 = vld [vmem:[%s5 + $0x360] sm:$0xf]
  %v1909 = vld [vmem:[%s5 + $0x364] sm:$0xff]
  %v1910 = vld [vmem:[%s5 + $0x36c] sm:$0xff]
  %v1911 = vld [vmem:[%s5 + $0x374] sm:$0xff]
  %v1912 = vld [vmem:[%s5 + $0x37c] sm:$0xf]
  %v1913 = vld [vmem:[%s5 + $0x380] sm:$0xff]
  %v1914 = vld [vmem:[%s5 + $0x388] sm:$0xff]
  %v1915 = vld [vmem:[%s5 + $0x390] sm:$0xff]
  %v1916 = vld [vmem:[%s5 + $0x398] sm:$0xf]
  %v1917 = vld [vmem:[%s5 + $0x39c] sm:$0xff]
  %v1918 = vld [vmem:[%s5 + $0x3a4] sm:$0xff]
  %v1919 = vld [vmem:[%s5 + $0x3ac] sm:$0xff]
  %v1920 = vld [vmem:[%s5 + $0x3b4] sm:$0xf]
  %v1921 = vld [vmem:[%s5 + $0x3b8] sm:$0xff]
  %v1922 = vld [vmem:[%s5 + $0x3c0] sm:$0xff]
  %v1923 = vld [vmem:[%s5 + $0x3c8] sm:$0xff]
  %v1924 = vld [vmem:[%s5 + $0x3d0] sm:$0xf]
  %v1925 = vld [vmem:[%s5 + $0x3d4] sm:$0xff]
  %v1926 = vld [vmem:[%s5 + $0x3dc] sm:$0xff]
  %v1927 = vld [vmem:[%s5 + $0x3e4] sm:$0xff]
  %v1928 = vld [vmem:[%s5 + $0x3ec] sm:$0xf]
  %v1929 = vld [vmem:[%s5 + $0x3f0] sm:$0xff]
  %v1930 = vld [vmem:[%s5 + $0x3f8] sm:$0xff]
  %v1931 = vld [vmem:[%s5 + $0x400] sm:$0xff]
  %v1932 = vld [vmem:[%s5 + $0x408] sm:$0xf]
  %v1933 = vld [vmem:[%s5 + $0x40c] sm:$0xff]
  %v1934 = vld [vmem:[%s5 + $0x414] sm:$0xff]
  %v1935 = vld [vmem:[%s5 + $0x41c] sm:$0xff]
  %v1936 = vld [vmem:[%s5 + $0x424] sm:$0xf]
  %v1937 = vld [vmem:[%s5 + $0x428] sm:$0xff]
  %v1938 = vld [vmem:[%s5 + $0x430] sm:$0xff]
  %v1939 = vld [vmem:[%s5 + $0x438] sm:$0xff]
  %v1940 = vld [vmem:[%s5 + $0x440] sm:$0xf]
  %v1941 = vld [vmem:[%s5 + $0x444] sm:$0xff]
  %v1942 = vld [vmem:[%s5 + $0x44c] sm:$0xff]
  %v1943 = vld [vmem:[%s5 + $0x454] sm:$0xff]
  %v1944 = vld [vmem:[%s5 + $0x45c] sm:$0xf]
  %v1945 = vld [vmem:[%s5 + $0x460] sm:$0xff]
  %v1946 = vld [vmem:[%s5 + $0x468] sm:$0xff]
  %v1947 = vld [vmem:[%s5 + $0x470] sm:$0xff]
  %v1948 = vld [vmem:[%s5 + $0x478] sm:$0xf]
  %v1949 = vld [vmem:[%s5 + $0x47c] sm:$0xff]
  %v1950 = vld [vmem:[%s5 + $0x484] sm:$0xff]
  %v1951 = vld [vmem:[%s5 + $0x48c] sm:$0xff]
  %v1952 = vld [vmem:[%s5 + $0x494] sm:$0xf]
  %v1953 = vld [vmem:[%s5 + $0x498] sm:$0xff]
  %v1954 = vld [vmem:[%s5 + $0x4a0] sm:$0xff]
  %v1955 = vld [vmem:[%s5 + $0x4a8] sm:$0xff]
  %v1956 = vld [vmem:[%s5 + $0x4b0] sm:$0xf]
  %v1957 = vld [vmem:[%s5 + $0x4b4] sm:$0xff]
  %v1958 = vld [vmem:[%s5 + $0x4bc] sm:$0xff]
  %v1959 = vld [vmem:[%s5 + $0x4c4] sm:$0xff]
  %v1960 = vld [vmem:[%s5 + $0x4cc] sm:$0xf]
  %v1961 = vld [vmem:[%s5 + $0x4d0] sm:$0xff]
  %v1962 = vld [vmem:[%s5 + $0x4d8] sm:$0xff]
  %v1963 = vld [vmem:[%s5 + $0x4e0] sm:$0xff]
  %v1964 = vld [vmem:[%s5 + $0x4e8] sm:$0xf]
  %v1965 = vld [vmem:[%s5 + $0x4ec] sm:$0xff]
  %v1966 = vld [vmem:[%s5 + $0x4f4] sm:$0xff]
  %v1967 = vld [vmem:[%s5 + $0x4fc] sm:$0xff]
  %v1968 = vld [vmem:[%s5 + $0x504] sm:$0xf]
  %v1969 = vld [vmem:[%s5 + $0x508] sm:$0xff]
  %v1970 = vld [vmem:[%s5 + $0x510] sm:$0xff]
  %v1971 = vld [vmem:[%s5 + $0x518] sm:$0xff]
  %v1972 = vld [vmem:[%s5 + $0x520] sm:$0xf]
  %v1973 = vld [vmem:[%s5 + $0x524] sm:$0xff]
  %v1974 = vld [vmem:[%s5 + $0x52c] sm:$0xff]
  %v1975 = vld [vmem:[%s5 + $0x534] sm:$0xff]
  %v1976 = vld [vmem:[%s5 + $0x53c] sm:$0xf]
  %v1977 = vld [vmem:[%s5 + $0x540] sm:$0xff]
  %v1978 = vld [vmem:[%s5 + $0x548] sm:$0xff]
  %v1979 = vld [vmem:[%s5 + $0x550] sm:$0xff]
  %v1980 = vld [vmem:[%s5 + $0x558] sm:$0xf]
  %v1981 = vld [vmem:[%s5 + $0x55c] sm:$0xff]
  %v1982 = vld [vmem:[%s5 + $0x564] sm:$0xff]
  %v1983 = vld [vmem:[%s5 + $0x56c] sm:$0xff]
  %v1984 = vld [vmem:[%s5 + $0x574] sm:$0xf]
  %v1985 = vld [vmem:[%s5 + $0x578] sm:$0xff]
  %v1986 = vld [vmem:[%s5 + $0x580] sm:$0xff]
  %v1987 = vld [vmem:[%s5 + $0x588] sm:$0xff]
  %v1988 = vld [vmem:[%s5 + $0x590] sm:$0xf]
  %v1989 = vld [vmem:[%s5 + $0x594] sm:$0xff]
  %v1990 = vld [vmem:[%s5 + $0x59c] sm:$0xff]
  %v1991 = vld [vmem:[%s5 + $0x5a4] sm:$0xff]
  %v1992 = vld [vmem:[%s5 + $0x5ac] sm:$0xf]
  %v1993 = vld [vmem:[%s5 + $0x5b0] sm:$0xff]
  %v1994 = vld [vmem:[%s5 + $0x5b8] sm:$0xff]
  %v1995 = vld [vmem:[%s5 + $0x5c0] sm:$0xff]
  %v1996 = vld [vmem:[%s5 + $0x5c8] sm:$0xf]
  %v1997 = vld [vmem:[%s5 + $0x5cc] sm:$0xff]
  %v1998 = vld [vmem:[%s5 + $0x5d4] sm:$0xff]
  %v1999 = vld [vmem:[%s5 + $0x5dc] sm:$0xff]
  %v2000 = vld [vmem:[%s5 + $0x5e4] sm:$0xf]
  %v2001 = vld [vmem:[%s5 + $0x5e8] sm:$0xff]
  %v2002 = vld [vmem:[%s5 + $0x5f0] sm:$0xff]
  %v2003 = vld [vmem:[%s5 + $0x5f8] sm:$0xff]
  %v2004 = vld [vmem:[%s5 + $0x600] sm:$0xf]
  %v2005 = vld [vmem:[%s5 + $0x604] sm:$0xff]
  %v2006 = vld [vmem:[%s5 + $0x60c] sm:$0xff]
  %v2007 = vld [vmem:[%s5 + $0x614] sm:$0xff]
  %v2008 = vld [vmem:[%s5 + $0x61c] sm:$0xf]
  %v2009 = vld [vmem:[%s5 + $0x620] sm:$0xff]
  %v2010 = vld [vmem:[%s5 + $0x628] sm:$0xff]
  %v2011 = vld [vmem:[%s5 + $0x630] sm:$0xff]
  %v2012 = vld [vmem:[%s5 + $0x638] sm:$0xf]
  %v2013 = vld [vmem:[%s5 + $0x63c] sm:$0xff]
  %v2014 = vld [vmem:[%s5 + $0x644] sm:$0xff]
  %v2015 = vld [vmem:[%s5 + $0x64c] sm:$0xff]
  %v2016 = vld [vmem:[%s5 + $0x654] sm:$0xf]
  %v2017 = vld [vmem:[%s5 + $0x658] sm:$0xff]
  %v2018 = vld [vmem:[%s5 + $0x660] sm:$0xff]
  %v2019 = vld [vmem:[%s5 + $0x668] sm:$0xff]
  %v2020 = vld [vmem:[%s5 + $0x670] sm:$0xf]
  %v2021 = vld [vmem:[%s5 + $0x674] sm:$0xff]
  %v2022 = vld [vmem:[%s5 + $0x67c] sm:$0xff]
  %v2023 = vld [vmem:[%s5 + $0x684] sm:$0xff]
  %v2024 = vld [vmem:[%s5 + $0x68c] sm:$0xf]
  %v2025 = vld [vmem:[%s5 + $0x690] sm:$0xff]
  %v2026 = vld [vmem:[%s5 + $0x698] sm:$0xff]
  %v2027 = vld [vmem:[%s5 + $0x6a0] sm:$0xff]
  %v2028 = vld [vmem:[%s5 + $0x6a8] sm:$0xf]
  %v2029 = vld [vmem:[%s5 + $0x6ac] sm:$0xff]
  %v2030 = vld [vmem:[%s5 + $0x6b4] sm:$0xff]
  %v2031 = vld [vmem:[%s5 + $0x6bc] sm:$0xff]
  %v2032 = vld [vmem:[%s5 + $0x6c4] sm:$0xf]
  %v2033 = vld [vmem:[%s5 + $0x6c8] sm:$0xff]
  %v2034 = vld [vmem:[%s5 + $0x6d0] sm:$0xff]
  %v2035 = vld [vmem:[%s5 + $0x6d8] sm:$0xff]
  %v2036 = vld [vmem:[%s5 + $0x6e0] sm:$0xf]
  %v2037 = vld [vmem:[%s5 + $0x6e4] sm:$0xff]
  %v2038 = vld [vmem:[%s5 + $0x6ec] sm:$0xff]
  %v2039 = vld [vmem:[%s5 + $0x6f4] sm:$0xff]
  %v2040 = vld [vmem:[%s5 + $0x6fc] sm:$0xf]
  %v2041 = vld [vmem:[%s6] sm:$0x7f]
  %v2043 = vlaneseq
  %v2044 = vshrl.u32 %v2043, 7
  %v2045 = vsub.s32 0, %v2044
  %v2046 = vrot.slane %v2041, %v2045
  %v2047 = vlaneseq
  %v2048 = vshrl.u32 %v2047, 7
  %v2049 = vsub.s32 1, %v2048
  %v2050 = vrot.slane %v2041, %v2049
  %v2051 = vlaneseq
  %v2052 = vshrl.u32 %v2051, 7
  %v2053 = vsub.s32 2, %v2052
  %v2054 = vrot.slane %v2041, %v2053
  %v2055 = vlaneseq
  %v2056 = vshrl.u32 %v2055, 7
  %v2057 = vsub.s32 3, %v2056
  %v2058 = vrot.slane %v2041, %v2057
  %v2059 = vlaneseq
  %v2060 = vshrl.u32 %v2059, 7
  %v2061 = vsub.s32 4, %v2060
  %v2062 = vrot.slane %v2041, %v2061
  %v2063 = vlaneseq
  %v2064 = vshrl.u32 %v2063, 7
  %v2065 = vsub.s32 5, %v2064
  %v2066 = vrot.slane %v2041, %v2065
  %v2067 = vlaneseq
  %v2068 = vshrl.u32 %v2067, 7
  %v2069 = vsub.s32 6, %v2068
  %v2070 = vrot.slane %v2041, %v2069
  %v2334 = vunpack.c.l.b16 %v1785
  %v2335 = vunpack.c.h.b16 %v1785
  %v2336 = vunpack.c.l.b16 %v1786
  %v2337 = vunpack.c.h.b16 %v1786
  %v2338 = vunpack.c.l.b16 %v1787
  %v2339 = vunpack.c.h.b16 %v1787
  %v2340 = vunpack.c.l.b16 %v1788
  %v2341 = vunpack.c.l.b16 %v1789
  %v2342 = vunpack.c.h.b16 %v1789
  %v2343 = vunpack.c.l.b16 %v1790
  %v2344 = vunpack.c.h.b16 %v1790
  %v2345 = vunpack.c.l.b16 %v1791
  %v2346 = vunpack.c.h.b16 %v1791
  %v2347 = vunpack.c.l.b16 %v1792
  %v2348 = vunpack.c.l.b16 %v1793
  %v2349 = vunpack.c.h.b16 %v1793
  %v2350 = vunpack.c.l.b16 %v1794
  %v2351 = vunpack.c.h.b16 %v1794
  %v2352 = vunpack.c.l.b16 %v1795
  %v2353 = vunpack.c.h.b16 %v1795
  %v2354 = vunpack.c.l.b16 %v1796
  %v2355 = vunpack.c.l.b16 %v1797
  %v2356 = vunpack.c.h.b16 %v1797
  %v2357 = vunpack.c.l.b16 %v1798
  %v2358 = vunpack.c.h.b16 %v1798
  %v2359 = vunpack.c.l.b16 %v1799
  %v2360 = vunpack.c.h.b16 %v1799
  %v2361 = vunpack.c.l.b16 %v1800
  %v2362 = vunpack.c.l.b16 %v1801
  %v2363 = vunpack.c.h.b16 %v1801
  %v2364 = vunpack.c.l.b16 %v1802
  %v2365 = vunpack.c.h.b16 %v1802
  %v2366 = vunpack.c.l.b16 %v1803
  %v2367 = vunpack.c.h.b16 %v1803
  %v2368 = vunpack.c.l.b16 %v1804
  %v2369 = vunpack.c.l.b16 %v1805
  %v2370 = vunpack.c.h.b16 %v1805
  %v2371 = vunpack.c.l.b16 %v1806
  %v2372 = vunpack.c.h.b16 %v1806
  %v2373 = vunpack.c.l.b16 %v1807
  %v2374 = vunpack.c.h.b16 %v1807
  %v2375 = vunpack.c.l.b16 %v1808
  %v2376 = vunpack.c.l.b16 %v1809
  %v2377 = vunpack.c.h.b16 %v1809
  %v2378 = vunpack.c.l.b16 %v1810
  %v2379 = vunpack.c.h.b16 %v1810
  %v2380 = vunpack.c.l.b16 %v1811
  %v2381 = vunpack.c.h.b16 %v1811
  %v2382 = vunpack.c.l.b16 %v1812
  %v2383 = vunpack.c.l.b16 %v1813
  %v2384 = vunpack.c.h.b16 %v1813
  %v2385 = vunpack.c.l.b16 %v1814
  %v2386 = vunpack.c.h.b16 %v1814
  %v2387 = vunpack.c.l.b16 %v1815
  %v2388 = vunpack.c.h.b16 %v1815
  %v2389 = vunpack.c.l.b16 %v1816
  %v2390 = vunpack.c.l.b16 %v1817
  %v2391 = vunpack.c.h.b16 %v1817
  %v2392 = vunpack.c.l.b16 %v1818
  %v2393 = vunpack.c.h.b16 %v1818
  %v2394 = vunpack.c.l.b16 %v1819
  %v2395 = vunpack.c.h.b16 %v1819
  %v2396 = vunpack.c.l.b16 %v1820
  %v2397 = vunpack.c.l.b16 %v1821
  %v2398 = vunpack.c.h.b16 %v1821
  %v2399 = vunpack.c.l.b16 %v1822
  %v2400 = vunpack.c.h.b16 %v1822
  %v2401 = vunpack.c.l.b16 %v1823
  %v2402 = vunpack.c.h.b16 %v1823
  %v2403 = vunpack.c.l.b16 %v1824
  %v2404 = vunpack.c.l.b16 %v1825
  %v2405 = vunpack.c.h.b16 %v1825
  %v2406 = vunpack.c.l.b16 %v1826
  %v2407 = vunpack.c.h.b16 %v1826
  %v2408 = vunpack.c.l.b16 %v1827
  %v2409 = vunpack.c.h.b16 %v1827
  %v2410 = vunpack.c.l.b16 %v1828
  %v2411 = vunpack.c.l.b16 %v1829
  %v2412 = vunpack.c.h.b16 %v1829
  %v2413 = vunpack.c.l.b16 %v1830
  %v2414 = vunpack.c.h.b16 %v1830
  %v2415 = vunpack.c.l.b16 %v1831
  %v2416 = vunpack.c.h.b16 %v1831
  %v2417 = vunpack.c.l.b16 %v1832
  %v2418 = vunpack.c.l.b16 %v1833
  %v2419 = vunpack.c.h.b16 %v1833
  %v2420 = vunpack.c.l.b16 %v1834
  %v2421 = vunpack.c.h.b16 %v1834
  %v2422 = vunpack.c.l.b16 %v1835
  %v2423 = vunpack.c.h.b16 %v1835
  %v2424 = vunpack.c.l.b16 %v1836
  %v2425 = vunpack.c.l.b16 %v1837
  %v2426 = vunpack.c.h.b16 %v1837
  %v2427 = vunpack.c.l.b16 %v1838
  %v2428 = vunpack.c.h.b16 %v1838
  %v2429 = vunpack.c.l.b16 %v1839
  %v2430 = vunpack.c.h.b16 %v1839
  %v2431 = vunpack.c.l.b16 %v1840
  %v2432 = vunpack.c.l.b16 %v1841
  %v2433 = vunpack.c.h.b16 %v1841
  %v2434 = vunpack.c.l.b16 %v1842
  %v2435 = vunpack.c.h.b16 %v1842
  %v2436 = vunpack.c.l.b16 %v1843
  %v2437 = vunpack.c.h.b16 %v1843
  %v2438 = vunpack.c.l.b16 %v1844
  %v2439 = vunpack.c.l.b16 %v1845
  %v2440 = vunpack.c.h.b16 %v1845
  %v2441 = vunpack.c.l.b16 %v1846
  %v2442 = vunpack.c.h.b16 %v1846
  %v2443 = vunpack.c.l.b16 %v1847
  %v2444 = vunpack.c.h.b16 %v1847
  %v2445 = vunpack.c.l.b16 %v1848
  %v2446 = vunpack.c.l.b16 %v1849
  %v2447 = vunpack.c.h.b16 %v1849
  %v2448 = vunpack.c.l.b16 %v1850
  %v2449 = vunpack.c.h.b16 %v1850
  %v2450 = vunpack.c.l.b16 %v1851
  %v2451 = vunpack.c.h.b16 %v1851
  %v2452 = vunpack.c.l.b16 %v1852
  %v2453 = vunpack.c.l.b16 %v1853
  %v2454 = vunpack.c.h.b16 %v1853
  %v2455 = vunpack.c.l.b16 %v1854
  %v2456 = vunpack.c.h.b16 %v1854
  %v2457 = vunpack.c.l.b16 %v1855
  %v2458 = vunpack.c.h.b16 %v1855
  %v2459 = vunpack.c.l.b16 %v1856
  %v2460 = vunpack.c.l.b16 %v1857
  %v2461 = vunpack.c.h.b16 %v1857
  %v2462 = vunpack.c.l.b16 %v1858
  %v2463 = vunpack.c.h.b16 %v1858
  %v2464 = vunpack.c.l.b16 %v1859
  %v2465 = vunpack.c.h.b16 %v1859
  %v2466 = vunpack.c.l.b16 %v1860
  %v2467 = vunpack.c.l.b16 %v1861
  %v2468 = vunpack.c.h.b16 %v1861
  %v2469 = vunpack.c.l.b16 %v1862
  %v2470 = vunpack.c.h.b16 %v1862
  %v2471 = vunpack.c.l.b16 %v1863
  %v2472 = vunpack.c.h.b16 %v1863
  %v2473 = vunpack.c.l.b16 %v1864
  %v2474 = vunpack.c.l.b16 %v1865
  %v2475 = vunpack.c.h.b16 %v1865
  %v2476 = vunpack.c.l.b16 %v1866
  %v2477 = vunpack.c.h.b16 %v1866
  %v2478 = vunpack.c.l.b16 %v1867
  %v2479 = vunpack.c.h.b16 %v1867
  %v2480 = vunpack.c.l.b16 %v1868
  %v2481 = vunpack.c.l.b16 %v1869
  %v2482 = vunpack.c.h.b16 %v1869
  %v2483 = vunpack.c.l.b16 %v1870
  %v2484 = vunpack.c.h.b16 %v1870
  %v2485 = vunpack.c.l.b16 %v1871
  %v2486 = vunpack.c.h.b16 %v1871
  %v2487 = vunpack.c.l.b16 %v1872
  %v2488 = vunpack.c.l.b16 %v1873
  %v2489 = vunpack.c.h.b16 %v1873
  %v2490 = vunpack.c.l.b16 %v1874
  %v2491 = vunpack.c.h.b16 %v1874
  %v2492 = vunpack.c.l.b16 %v1875
  %v2493 = vunpack.c.h.b16 %v1875
  %v2494 = vunpack.c.l.b16 %v1876
  %v2495 = vunpack.c.l.b16 %v1877
  %v2496 = vunpack.c.h.b16 %v1877
  %v2497 = vunpack.c.l.b16 %v1878
  %v2498 = vunpack.c.h.b16 %v1878
  %v2499 = vunpack.c.l.b16 %v1879
  %v2500 = vunpack.c.h.b16 %v1879
  %v2501 = vunpack.c.l.b16 %v1880
  %v2502 = vunpack.c.l.b16 %v1881
  %v2503 = vunpack.c.h.b16 %v1881
  %v2504 = vunpack.c.l.b16 %v1882
  %v2505 = vunpack.c.h.b16 %v1882
  %v2506 = vunpack.c.l.b16 %v1883
  %v2507 = vunpack.c.h.b16 %v1883
  %v2508 = vunpack.c.l.b16 %v1884
  %v2509 = vunpack.c.l.b16 %v1885
  %v2510 = vunpack.c.h.b16 %v1885
  %v2511 = vunpack.c.l.b16 %v1886
  %v2512 = vunpack.c.h.b16 %v1886
  %v2513 = vunpack.c.l.b16 %v1887
  %v2514 = vunpack.c.h.b16 %v1887
  %v2515 = vunpack.c.l.b16 %v1888
  %v2516 = vunpack.c.l.b16 %v1889
  %v2517 = vunpack.c.h.b16 %v1889
  %v2518 = vunpack.c.l.b16 %v1890
  %v2519 = vunpack.c.h.b16 %v1890
  %v2520 = vunpack.c.l.b16 %v1891
  %v2521 = vunpack.c.h.b16 %v1891
  %v2522 = vunpack.c.l.b16 %v1892
  %v2523 = vunpack.c.l.b16 %v1893
  %v2524 = vunpack.c.h.b16 %v1893
  %v2525 = vunpack.c.l.b16 %v1894
  %v2526 = vunpack.c.h.b16 %v1894
  %v2527 = vunpack.c.l.b16 %v1895
  %v2528 = vunpack.c.h.b16 %v1895
  %v2529 = vunpack.c.l.b16 %v1896
  %v2530 = vunpack.c.l.b16 %v1897
  %v2531 = vunpack.c.h.b16 %v1897
  %v2532 = vunpack.c.l.b16 %v1898
  %v2533 = vunpack.c.h.b16 %v1898
  %v2534 = vunpack.c.l.b16 %v1899
  %v2535 = vunpack.c.h.b16 %v1899
  %v2536 = vunpack.c.l.b16 %v1900
  %v2537 = vunpack.c.l.b16 %v1901
  %v2538 = vunpack.c.h.b16 %v1901
  %v2539 = vunpack.c.l.b16 %v1902
  %v2540 = vunpack.c.h.b16 %v1902
  %v2541 = vunpack.c.l.b16 %v1903
  %v2542 = vunpack.c.h.b16 %v1903
  %v2543 = vunpack.c.l.b16 %v1904
  %v2544 = vunpack.c.l.b16 %v1905
  %v2545 = vunpack.c.h.b16 %v1905
  %v2546 = vunpack.c.l.b16 %v1906
  %v2547 = vunpack.c.h.b16 %v1906
  %v2548 = vunpack.c.l.b16 %v1907
  %v2549 = vunpack.c.h.b16 %v1907
  %v2550 = vunpack.c.l.b16 %v1908
  %v2551 = vunpack.c.l.b16 %v1909
  %v2552 = vunpack.c.h.b16 %v1909
  %v2553 = vunpack.c.l.b16 %v1910
  %v2554 = vunpack.c.h.b16 %v1910
  %v2555 = vunpack.c.l.b16 %v1911
  %v2556 = vunpack.c.h.b16 %v1911
  %v2557 = vunpack.c.l.b16 %v1912
  %v2558 = vunpack.c.l.b16 %v1913
  %v2559 = vunpack.c.h.b16 %v1913
  %v2560 = vunpack.c.l.b16 %v1914
  %v2561 = vunpack.c.h.b16 %v1914
  %v2562 = vunpack.c.l.b16 %v1915
  %v2563 = vunpack.c.h.b16 %v1915
  %v2564 = vunpack.c.l.b16 %v1916
  %v2565 = vunpack.c.l.b16 %v1917
  %v2566 = vunpack.c.h.b16 %v1917
  %v2567 = vunpack.c.l.b16 %v1918
  %v2568 = vunpack.c.h.b16 %v1918
  %v2569 = vunpack.c.l.b16 %v1919
  %v2570 = vunpack.c.h.b16 %v1919
  %v2571 = vunpack.c.l.b16 %v1920
  %v2572 = vunpack.c.l.b16 %v1921
  %v2573 = vunpack.c.h.b16 %v1921
  %v2574 = vunpack.c.l.b16 %v1922
  %v2575 = vunpack.c.h.b16 %v1922
  %v2576 = vunpack.c.l.b16 %v1923
  %v2577 = vunpack.c.h.b16 %v1923
  %v2578 = vunpack.c.l.b16 %v1924
  %v2579 = vunpack.c.l.b16 %v1925
  %v2580 = vunpack.c.h.b16 %v1925
  %v2581 = vunpack.c.l.b16 %v1926
  %v2582 = vunpack.c.h.b16 %v1926
  %v2583 = vunpack.c.l.b16 %v1927
  %v2584 = vunpack.c.h.b16 %v1927
  %v2585 = vunpack.c.l.b16 %v1928
  %v2586 = vunpack.c.l.b16 %v1929
  %v2587 = vunpack.c.h.b16 %v1929
  %v2588 = vunpack.c.l.b16 %v1930
  %v2589 = vunpack.c.h.b16 %v1930
  %v2590 = vunpack.c.l.b16 %v1931
  %v2591 = vunpack.c.h.b16 %v1931
  %v2592 = vunpack.c.l.b16 %v1932
  %v2593 = vunpack.c.l.b16 %v1933
  %v2594 = vunpack.c.h.b16 %v1933
  %v2595 = vunpack.c.l.b16 %v1934
  %v2596 = vunpack.c.h.b16 %v1934
  %v2597 = vunpack.c.l.b16 %v1935
  %v2598 = vunpack.c.h.b16 %v1935
  %v2599 = vunpack.c.l.b16 %v1936
  %v2600 = vunpack.c.l.b16 %v1937
  %v2601 = vunpack.c.h.b16 %v1937
  %v2602 = vunpack.c.l.b16 %v1938
  %v2603 = vunpack.c.h.b16 %v1938
  %v2604 = vunpack.c.l.b16 %v1939
  %v2605 = vunpack.c.h.b16 %v1939
  %v2606 = vunpack.c.l.b16 %v1940
  %v2607 = vunpack.c.l.b16 %v1941
  %v2608 = vunpack.c.h.b16 %v1941
  %v2609 = vunpack.c.l.b16 %v1942
  %v2610 = vunpack.c.h.b16 %v1942
  %v2611 = vunpack.c.l.b16 %v1943
  %v2612 = vunpack.c.h.b16 %v1943
  %v2613 = vunpack.c.l.b16 %v1944
  %v2614 = vunpack.c.l.b16 %v1945
  %v2615 = vunpack.c.h.b16 %v1945
  %v2616 = vunpack.c.l.b16 %v1946
  %v2617 = vunpack.c.h.b16 %v1946
  %v2618 = vunpack.c.l.b16 %v1947
  %v2619 = vunpack.c.h.b16 %v1947
  %v2620 = vunpack.c.l.b16 %v1948
  %v2621 = vunpack.c.l.b16 %v1949
  %v2622 = vunpack.c.h.b16 %v1949
  %v2623 = vunpack.c.l.b16 %v1950
  %v2624 = vunpack.c.h.b16 %v1950
  %v2625 = vunpack.c.l.b16 %v1951
  %v2626 = vunpack.c.h.b16 %v1951
  %v2627 = vunpack.c.l.b16 %v1952
  %v2628 = vunpack.c.l.b16 %v1953
  %v2629 = vunpack.c.h.b16 %v1953
  %v2630 = vunpack.c.l.b16 %v1954
  %v2631 = vunpack.c.h.b16 %v1954
  %v2632 = vunpack.c.l.b16 %v1955
  %v2633 = vunpack.c.h.b16 %v1955
  %v2634 = vunpack.c.l.b16 %v1956
  %v2635 = vunpack.c.l.b16 %v1957
  %v2636 = vunpack.c.h.b16 %v1957
  %v2637 = vunpack.c.l.b16 %v1958
  %v2638 = vunpack.c.h.b16 %v1958
  %v2639 = vunpack.c.l.b16 %v1959
  %v2640 = vunpack.c.h.b16 %v1959
  %v2641 = vunpack.c.l.b16 %v1960
  %v2642 = vunpack.c.l.b16 %v1961
  %v2643 = vunpack.c.h.b16 %v1961
  %v2644 = vunpack.c.l.b16 %v1962
  %v2645 = vunpack.c.h.b16 %v1962
  %v2646 = vunpack.c.l.b16 %v1963
  %v2647 = vunpack.c.h.b16 %v1963
  %v2648 = vunpack.c.l.b16 %v1964
  %v2649 = vunpack.c.l.b16 %v1965
  %v2650 = vunpack.c.h.b16 %v1965
  %v2651 = vunpack.c.l.b16 %v1966
  %v2652 = vunpack.c.h.b16 %v1966
  %v2653 = vunpack.c.l.b16 %v1967
  %v2654 = vunpack.c.h.b16 %v1967
  %v2655 = vunpack.c.l.b16 %v1968
  %v2656 = vunpack.c.l.b16 %v1969
  %v2657 = vunpack.c.h.b16 %v1969
  %v2658 = vunpack.c.l.b16 %v1970
  %v2659 = vunpack.c.h.b16 %v1970
  %v2660 = vunpack.c.l.b16 %v1971
  %v2661 = vunpack.c.h.b16 %v1971
  %v2662 = vunpack.c.l.b16 %v1972
  %v2663 = vunpack.c.l.b16 %v1973
  %v2664 = vunpack.c.h.b16 %v1973
  %v2665 = vunpack.c.l.b16 %v1974
  %v2666 = vunpack.c.h.b16 %v1974
  %v2667 = vunpack.c.l.b16 %v1975
  %v2668 = vunpack.c.h.b16 %v1975
  %v2669 = vunpack.c.l.b16 %v1976
  %v2670 = vunpack.c.l.b16 %v1977
  %v2671 = vunpack.c.h.b16 %v1977
  %v2672 = vunpack.c.l.b16 %v1978
  %v2673 = vunpack.c.h.b16 %v1978
  %v2674 = vunpack.c.l.b16 %v1979
  %v2675 = vunpack.c.h.b16 %v1979
  %v2676 = vunpack.c.l.b16 %v1980
  %v2677 = vunpack.c.l.b16 %v1981
  %v2678 = vunpack.c.h.b16 %v1981
  %v2679 = vunpack.c.l.b16 %v1982
  %v2680 = vunpack.c.h.b16 %v1982
  %v2681 = vunpack.c.l.b16 %v1983
  %v2682 = vunpack.c.h.b16 %v1983
  %v2683 = vunpack.c.l.b16 %v1984
  %v2684 = vunpack.c.l.b16 %v1985
  %v2685 = vunpack.c.h.b16 %v1985
  %v2686 = vunpack.c.l.b16 %v1986
  %v2687 = vunpack.c.h.b16 %v1986
  %v2688 = vunpack.c.l.b16 %v1987
  %v2689 = vunpack.c.h.b16 %v1987
  %v2690 = vunpack.c.l.b16 %v1988
  %v2691 = vunpack.c.l.b16 %v1989
  %v2692 = vunpack.c.h.b16 %v1989
  %v2693 = vunpack.c.l.b16 %v1990
  %v2694 = vunpack.c.h.b16 %v1990
  %v2695 = vunpack.c.l.b16 %v1991
  %v2696 = vunpack.c.h.b16 %v1991
  %v2697 = vunpack.c.l.b16 %v1992
  %v2698 = vunpack.c.l.b16 %v1993
  %v2699 = vunpack.c.h.b16 %v1993
  %v2700 = vunpack.c.l.b16 %v1994
  %v2701 = vunpack.c.h.b16 %v1994
  %v2702 = vunpack.c.l.b16 %v1995
  %v2703 = vunpack.c.h.b16 %v1995
  %v2704 = vunpack.c.l.b16 %v1996
  %v2705 = vunpack.c.l.b16 %v1997
  %v2706 = vunpack.c.h.b16 %v1997
  %v2707 = vunpack.c.l.b16 %v1998
  %v2708 = vunpack.c.h.b16 %v1998
  %v2709 = vunpack.c.l.b16 %v1999
  %v2710 = vunpack.c.h.b16 %v1999
  %v2711 = vunpack.c.l.b16 %v2000
  %v2712 = vunpack.c.l.b16 %v2001
  %v2713 = vunpack.c.h.b16 %v2001
  %v2714 = vunpack.c.l.b16 %v2002
  %v2715 = vunpack.c.h.b16 %v2002
  %v2716 = vunpack.c.l.b16 %v2003
  %v2717 = vunpack.c.h.b16 %v2003
  %v2718 = vunpack.c.l.b16 %v2004
  %v2719 = vunpack.c.l.b16 %v2005
  %v2720 = vunpack.c.h.b16 %v2005
  %v2721 = vunpack.c.l.b16 %v2006
  %v2722 = vunpack.c.h.b16 %v2006
  %v2723 = vunpack.c.l.b16 %v2007
  %v2724 = vunpack.c.h.b16 %v2007
  %v2725 = vunpack.c.l.b16 %v2008
  %v2726 = vunpack.c.l.b16 %v2009
  %v2727 = vunpack.c.h.b16 %v2009
  %v2728 = vunpack.c.l.b16 %v2010
  %v2729 = vunpack.c.h.b16 %v2010
  %v2730 = vunpack.c.l.b16 %v2011
  %v2731 = vunpack.c.h.b16 %v2011
  %v2732 = vunpack.c.l.b16 %v2012
  %v2733 = vunpack.c.l.b16 %v2013
  %v2734 = vunpack.c.h.b16 %v2013
  %v2735 = vunpack.c.l.b16 %v2014
  %v2736 = vunpack.c.h.b16 %v2014
  %v2737 = vunpack.c.l.b16 %v2015
  %v2738 = vunpack.c.h.b16 %v2015
  %v2739 = vunpack.c.l.b16 %v2016
  %v2740 = vunpack.c.l.b16 %v2017
  %v2741 = vunpack.c.h.b16 %v2017
  %v2742 = vunpack.c.l.b16 %v2018
  %v2743 = vunpack.c.h.b16 %v2018
  %v2744 = vunpack.c.l.b16 %v2019
  %v2745 = vunpack.c.h.b16 %v2019
  %v2746 = vunpack.c.l.b16 %v2020
  %v2747 = vunpack.c.l.b16 %v2021
  %v2748 = vunpack.c.h.b16 %v2021
  %v2749 = vunpack.c.l.b16 %v2022
  %v2750 = vunpack.c.h.b16 %v2022
  %v2751 = vunpack.c.l.b16 %v2023
  %v2752 = vunpack.c.h.b16 %v2023
  %v2753 = vunpack.c.l.b16 %v2024
  %v2754 = vunpack.c.l.b16 %v2025
  %v2755 = vunpack.c.h.b16 %v2025
  %v2756 = vunpack.c.l.b16 %v2026
  %v2757 = vunpack.c.h.b16 %v2026
  %v2758 = vunpack.c.l.b16 %v2027
  %v2759 = vunpack.c.h.b16 %v2027
  %v2760 = vunpack.c.l.b16 %v2028
  %v2761 = vunpack.c.l.b16 %v2029
  %v2762 = vunpack.c.h.b16 %v2029
  %v2763 = vunpack.c.l.b16 %v2030
  %v2764 = vunpack.c.h.b16 %v2030
  %v2765 = vunpack.c.l.b16 %v2031
  %v2766 = vunpack.c.h.b16 %v2031
  %v2767 = vunpack.c.l.b16 %v2032
  %v2768 = vunpack.c.l.b16 %v2033
  %v2769 = vunpack.c.h.b16 %v2033
  %v2770 = vunpack.c.l.b16 %v2034
  %v2771 = vunpack.c.h.b16 %v2034
  %v2772 = vunpack.c.l.b16 %v2035
  %v2773 = vunpack.c.h.b16 %v2035
  %v2774 = vunpack.c.l.b16 %v2036
  %v2775 = vunpack.c.l.b16 %v2037
  %v2776 = vunpack.c.h.b16 %v2037
  %v2777 = vunpack.c.l.b16 %v2038
  %v2778 = vunpack.c.h.b16 %v2038
  %v2779 = vunpack.c.l.b16 %v2039
  %v2780 = vunpack.c.h.b16 %v2039
  %v2781 = vunpack.c.l.b16 %v2040
  %v2782 = vpack.c.b16 %v2341, %v2334
  %v2783 = vpack.c.b16 %v2342, %v2335
  %v2784 = vpack.c.b16 %v2343, %v2336
  %v2785 = vpack.c.b16 %v2344, %v2337
  %v2786 = vpack.c.b16 %v2345, %v2338
  %v2787 = vpack.c.b16 %v2346, %v2339
  %v2788 = vpack.c.b16 %v2347, %v2340
  %v2789 = vpack.c.b16 %v2355, %v2348
  %v2790 = vpack.c.b16 %v2356, %v2349
  %v2791 = vpack.c.b16 %v2357, %v2350
  %v2792 = vpack.c.b16 %v2358, %v2351
  %v2793 = vpack.c.b16 %v2359, %v2352
  %v2794 = vpack.c.b16 %v2360, %v2353
  %v2795 = vpack.c.b16 %v2361, %v2354
  %v2796 = vpack.c.b16 %v2369, %v2362
  %v2797 = vpack.c.b16 %v2370, %v2363
  %v2798 = vpack.c.b16 %v2371, %v2364
  %v2799 = vpack.c.b16 %v2372, %v2365
  %v2800 = vpack.c.b16 %v2373, %v2366
  %v2801 = vpack.c.b16 %v2374, %v2367
  %v2802 = vpack.c.b16 %v2375, %v2368
  %v2803 = vpack.c.b16 %v2383, %v2376
  %v2804 = vpack.c.b16 %v2384, %v2377
  %v2805 = vpack.c.b16 %v2385, %v2378
  %v2806 = vpack.c.b16 %v2386, %v2379
  %v2807 = vpack.c.b16 %v2387, %v2380
  %v2808 = vpack.c.b16 %v2388, %v2381
  %v2809 = vpack.c.b16 %v2389, %v2382
  %v2810 = vpack.c.b16 %v2397, %v2390
  %v2811 = vpack.c.b16 %v2398, %v2391
  %v2812 = vpack.c.b16 %v2399, %v2392
  %v2813 = vpack.c.b16 %v2400, %v2393
  %v2814 = vpack.c.b16 %v2401, %v2394
  %v2815 = vpack.c.b16 %v2402, %v2395
  %v2816 = vpack.c.b16 %v2403, %v2396
  %v2817 = vpack.c.b16 %v2411, %v2404
  %v2818 = vpack.c.b16 %v2412, %v2405
  %v2819 = vpack.c.b16 %v2413, %v2406
  %v2820 = vpack.c.b16 %v2414, %v2407
  %v2821 = vpack.c.b16 %v2415, %v2408
  %v2822 = vpack.c.b16 %v2416, %v2409
  %v2823 = vpack.c.b16 %v2417, %v2410
  %v2824 = vpack.c.b16 %v2425, %v2418
  %v2825 = vpack.c.b16 %v2426, %v2419
  %v2826 = vpack.c.b16 %v2427, %v2420
  %v2827 = vpack.c.b16 %v2428, %v2421
  %v2828 = vpack.c.b16 %v2429, %v2422
  %v2829 = vpack.c.b16 %v2430, %v2423
  %v2830 = vpack.c.b16 %v2431, %v2424
  %v2831 = vpack.c.b16 %v2439, %v2432
  %v2832 = vpack.c.b16 %v2440, %v2433
  %v2833 = vpack.c.b16 %v2441, %v2434
  %v2834 = vpack.c.b16 %v2442, %v2435
  %v2835 = vpack.c.b16 %v2443, %v2436
  %v2836 = vpack.c.b16 %v2444, %v2437
  %v2837 = vpack.c.b16 %v2445, %v2438
  %v2838 = vpack.c.b16 %v2453, %v2446
  %v2839 = vpack.c.b16 %v2454, %v2447
  %v2840 = vpack.c.b16 %v2455, %v2448
  %v2841 = vpack.c.b16 %v2456, %v2449
  %v2842 = vpack.c.b16 %v2457, %v2450
  %v2843 = vpack.c.b16 %v2458, %v2451
  %v2844 = vpack.c.b16 %v2459, %v2452
  %v2845 = vpack.c.b16 %v2467, %v2460
  %v2846 = vpack.c.b16 %v2468, %v2461
  %v2847 = vpack.c.b16 %v2469, %v2462
  %v2848 = vpack.c.b16 %v2470, %v2463
  %v2849 = vpack.c.b16 %v2471, %v2464
  %v2850 = vpack.c.b16 %v2472, %v2465
  %v2851 = vpack.c.b16 %v2473, %v2466
  %v2852 = vpack.c.b16 %v2481, %v2474
  %v2853 = vpack.c.b16 %v2482, %v2475
  %v2854 = vpack.c.b16 %v2483, %v2476
  %v2855 = vpack.c.b16 %v2484, %v2477
  %v2856 = vpack.c.b16 %v2485, %v2478
  %v2857 = vpack.c.b16 %v2486, %v2479
  %v2858 = vpack.c.b16 %v2487, %v2480
  %v2859 = vpack.c.b16 %v2495, %v2488
  %v2860 = vpack.c.b16 %v2496, %v2489
  %v2861 = vpack.c.b16 %v2497, %v2490
  %v2862 = vpack.c.b16 %v2498, %v2491
  %v2863 = vpack.c.b16 %v2499, %v2492
  %v2864 = vpack.c.b16 %v2500, %v2493
  %v2865 = vpack.c.b16 %v2501, %v2494
  %v2866 = vpack.c.b16 %v2509, %v2502
  %v2867 = vpack.c.b16 %v2510, %v2503
  %v2868 = vpack.c.b16 %v2511, %v2504
  %v2869 = vpack.c.b16 %v2512, %v2505
  %v2870 = vpack.c.b16 %v2513, %v2506
  %v2871 = vpack.c.b16 %v2514, %v2507
  %v2872 = vpack.c.b16 %v2515, %v2508
  %v2873 = vpack.c.b16 %v2523, %v2516
  %v2874 = vpack.c.b16 %v2524, %v2517
  %v2875 = vpack.c.b16 %v2525, %v2518
  %v2876 = vpack.c.b16 %v2526, %v2519
  %v2877 = vpack.c.b16 %v2527, %v2520
  %v2878 = vpack.c.b16 %v2528, %v2521
  %v2879 = vpack.c.b16 %v2529, %v2522
  %v2880 = vpack.c.b16 %v2537, %v2530
  %v2881 = vpack.c.b16 %v2538, %v2531
  %v2882 = vpack.c.b16 %v2539, %v2532
  %v2883 = vpack.c.b16 %v2540, %v2533
  %v2884 = vpack.c.b16 %v2541, %v2534
  %v2885 = vpack.c.b16 %v2542, %v2535
  %v2886 = vpack.c.b16 %v2543, %v2536
  %v2887 = vpack.c.b16 %v2551, %v2544
  %v2888 = vpack.c.b16 %v2552, %v2545
  %v2889 = vpack.c.b16 %v2553, %v2546
  %v2890 = vpack.c.b16 %v2554, %v2547
  %v2891 = vpack.c.b16 %v2555, %v2548
  %v2892 = vpack.c.b16 %v2556, %v2549
  %v2893 = vpack.c.b16 %v2557, %v2550
  %v2894 = vpack.c.b16 %v2565, %v2558
  %v2895 = vpack.c.b16 %v2566, %v2559
  %v2896 = vpack.c.b16 %v2567, %v2560
  %v2897 = vpack.c.b16 %v2568, %v2561
  %v2898 = vpack.c.b16 %v2569, %v2562
  %v2899 = vpack.c.b16 %v2570, %v2563
  %v2900 = vpack.c.b16 %v2571, %v2564
  %v2901 = vpack.c.b16 %v2579, %v2572
  %v2902 = vpack.c.b16 %v2580, %v2573
  %v2903 = vpack.c.b16 %v2581, %v2574
  %v2904 = vpack.c.b16 %v2582, %v2575
  %v2905 = vpack.c.b16 %v2583, %v2576
  %v2906 = vpack.c.b16 %v2584, %v2577
  %v2907 = vpack.c.b16 %v2585, %v2578
  %v2908 = vpack.c.b16 %v2593, %v2586
  %v2909 = vpack.c.b16 %v2594, %v2587
  %v2910 = vpack.c.b16 %v2595, %v2588
  %v2911 = vpack.c.b16 %v2596, %v2589
  %v2912 = vpack.c.b16 %v2597, %v2590
  %v2913 = vpack.c.b16 %v2598, %v2591
  %v2914 = vpack.c.b16 %v2599, %v2592
  %v2915 = vpack.c.b16 %v2607, %v2600
  %v2916 = vpack.c.b16 %v2608, %v2601
  %v2917 = vpack.c.b16 %v2609, %v2602
  %v2918 = vpack.c.b16 %v2610, %v2603
  %v2919 = vpack.c.b16 %v2611, %v2604
  %v2920 = vpack.c.b16 %v2612, %v2605
  %v2921 = vpack.c.b16 %v2613, %v2606
  %v2922 = vpack.c.b16 %v2621, %v2614
  %v2923 = vpack.c.b16 %v2622, %v2615
  %v2924 = vpack.c.b16 %v2623, %v2616
  %v2925 = vpack.c.b16 %v2624, %v2617
  %v2926 = vpack.c.b16 %v2625, %v2618
  %v2927 = vpack.c.b16 %v2626, %v2619
  %v2928 = vpack.c.b16 %v2627, %v2620
  %v2929 = vpack.c.b16 %v2635, %v2628
  %v2930 = vpack.c.b16 %v2636, %v2629
  %v2931 = vpack.c.b16 %v2637, %v2630
  %v2932 = vpack.c.b16 %v2638, %v2631
  %v2933 = vpack.c.b16 %v2639, %v2632
  %v2934 = vpack.c.b16 %v2640, %v2633
  %v2935 = vpack.c.b16 %v2641, %v2634
  %v2936 = vpack.c.b16 %v2649, %v2642
  %v2937 = vpack.c.b16 %v2650, %v2643
  %v2938 = vpack.c.b16 %v2651, %v2644
  %v2939 = vpack.c.b16 %v2652, %v2645
  %v2940 = vpack.c.b16 %v2653, %v2646
  %v2941 = vpack.c.b16 %v2654, %v2647
  %v2942 = vpack.c.b16 %v2655, %v2648
  %v2943 = vpack.c.b16 %v2663, %v2656
  %v2944 = vpack.c.b16 %v2664, %v2657
  %v2945 = vpack.c.b16 %v2665, %v2658
  %v2946 = vpack.c.b16 %v2666, %v2659
  %v2947 = vpack.c.b16 %v2667, %v2660
  %v2948 = vpack.c.b16 %v2668, %v2661
  %v2949 = vpack.c.b16 %v2669, %v2662
  %v2950 = vpack.c.b16 %v2677, %v2670
  %v2951 = vpack.c.b16 %v2678, %v2671
  %v2952 = vpack.c.b16 %v2679, %v2672
  %v2953 = vpack.c.b16 %v2680, %v2673
  %v2954 = vpack.c.b16 %v2681, %v2674
  %v2955 = vpack.c.b16 %v2682, %v2675
  %v2956 = vpack.c.b16 %v2683, %v2676
  %v2957 = vpack.c.b16 %v2691, %v2684
  %v2958 = vpack.c.b16 %v2692, %v2685
  %v2959 = vpack.c.b16 %v2693, %v2686
  %v2960 = vpack.c.b16 %v2694, %v2687
  %v2961 = vpack.c.b16 %v2695, %v2688
  %v2962 = vpack.c.b16 %v2696, %v2689
  %v2963 = vpack.c.b16 %v2697, %v2690
  %v2964 = vpack.c.b16 %v2705, %v2698
  %v2965 = vpack.c.b16 %v2706, %v2699
  %v2966 = vpack.c.b16 %v2707, %v2700
  %v2967 = vpack.c.b16 %v2708, %v2701
  %v2968 = vpack.c.b16 %v2709, %v2702
  %v2969 = vpack.c.b16 %v2710, %v2703
  %v2970 = vpack.c.b16 %v2711, %v2704
  %v2971 = vpack.c.b16 %v2719, %v2712
  %v2972 = vpack.c.b16 %v2720, %v2713
  %v2973 = vpack.c.b16 %v2721, %v2714
  %v2974 = vpack.c.b16 %v2722, %v2715
  %v2975 = vpack.c.b16 %v2723, %v2716
  %v2976 = vpack.c.b16 %v2724, %v2717
  %v2977 = vpack.c.b16 %v2725, %v2718
  %v2978 = vpack.c.b16 %v2733, %v2726
  %v2979 = vpack.c.b16 %v2734, %v2727
  %v2980 = vpack.c.b16 %v2735, %v2728
  %v2981 = vpack.c.b16 %v2736, %v2729
  %v2982 = vpack.c.b16 %v2737, %v2730
  %v2983 = vpack.c.b16 %v2738, %v2731
  %v2984 = vpack.c.b16 %v2739, %v2732
  %v2985 = vpack.c.b16 %v2747, %v2740
  %v2986 = vpack.c.b16 %v2748, %v2741
  %v2987 = vpack.c.b16 %v2749, %v2742
  %v2988 = vpack.c.b16 %v2750, %v2743
  %v2989 = vpack.c.b16 %v2751, %v2744
  %v2990 = vpack.c.b16 %v2752, %v2745
  %v2991 = vpack.c.b16 %v2753, %v2746
  %v2992 = vpack.c.b16 %v2761, %v2754
  %v2993 = vpack.c.b16 %v2762, %v2755
  %v2994 = vpack.c.b16 %v2763, %v2756
  %v2995 = vpack.c.b16 %v2764, %v2757
  %v2996 = vpack.c.b16 %v2765, %v2758
  %v2997 = vpack.c.b16 %v2766, %v2759
  %v2998 = vpack.c.b16 %v2767, %v2760
  %v2999 = vpack.c.b16 %v2775, %v2768
  %v3000 = vpack.c.b16 %v2776, %v2769
  %v3001 = vpack.c.b16 %v2777, %v2770
  %v3002 = vpack.c.b16 %v2778, %v2771
  %v3003 = vpack.c.b16 %v2779, %v2772
  %v3004 = vpack.c.b16 %v2780, %v2773
  %v3005 = vpack.c.b16 %v2781, %v2774
  %3230 = vmatprep.subr.bf16.mxu0 %v2783
  %3231 = vmatpush1.bf16.msra.mxu0 %v2782
  %3232 = vmatprep.subr.bf16.mxu0 %v2790
  %3233 = vmatpush1.bf16.msra.mxu0 %v2789
  %3234 = vmatprep.subr.bf16.mxu0 %v2797
  %3235 = vmatpush1.bf16.msra.mxu0 %v2796
  %3236 = vmatprep.subr.bf16.mxu0 %v2804
  %3237 = vmatpush1.bf16.msra.mxu0 %v2803
  %3238 = vmatprep.subr.bf16.mxu0 %v2811
  %3239 = vmatpush1.bf16.msra.mxu0 %v2810
  %3240 = vmatprep.subr.bf16.mxu0 %v2818
  %3241 = vmatpush1.bf16.msra.mxu0 %v2817
  %3242 = vmatprep.subr.bf16.mxu0 %v2825
  %3243 = vmatpush1.bf16.msra.mxu0 %v2824
  %3244 = vmatprep.subr.bf16.mxu0 %v2832
  %3245 = vmatpush1.bf16.msra.mxu0 %v2831
  %3246 = vmatprep.subr.bf16.mxu0 %v2839
  %3247 = vmatpush1.bf16.msra.mxu0 %v2838
  %3248 = vmatprep.subr.bf16.mxu0 %v2846
  %3249 = vmatpush1.bf16.msra.mxu0 %v2845
  %3250 = vmatprep.subr.bf16.mxu0 %v2853
  %3251 = vmatpush1.bf16.msra.mxu0 %v2852
  %3252 = vmatprep.subr.bf16.mxu0 %v2860
  %3253 = vmatpush1.bf16.msra.mxu0 %v2859
  %3254 = vmatprep.subr.bf16.mxu0 %v2867
  %3255 = vmatpush1.bf16.msra.mxu0 %v2866
  %3256 = vmatprep.subr.bf16.mxu0 %v2874
  %3257 = vmatpush1.bf16.msra.mxu0 %v2873
  %3258 = vmatprep.subr.bf16.mxu0 %v2881
  %3259 = vmatpush1.bf16.msra.mxu0 %v2880
  %3260 = vmatprep.subr.bf16.mxu0 %v2888
  %3261 = vmatpush1.bf16.msra.mxu0 %v2887
  %3262 = vmatprep.mubr.bf16.mxu0 %v1754
  %3263 = vmatmul.mubr.bf16.gmra.mrb[0].mxu0 %v1753
  %v3264 = vpop.f32.mrb[0].mxu0
  %v3265 = vadd.f32 %v2046, %v3264
  %v3266 = vpop.f32.mrb[0].mxu0
  %v3267 = vadd.f32 %v2050, %v3266
  %v3268 = vpop.f32.mrb[0].mxu0
  %v3269 = vadd.f32 %v2046, %v3268
  %v3270 = vpop.f32.mrb[0].mxu0
  %v3271 = vadd.f32 %v2050, %v3270
  %3272 = vmatprep.mubr.bf16.mxu0 %v1758
  %3273 = vmatmul.mubr.bf16.gmra.mrb[0].mxu0 %v1757
  %v3274 = vpop.f32.mrb[0].mxu0
  %v3275 = vadd.f32 %v2046, %v3274
  %v3276 = vpop.f32.mrb[0].mxu0
  %v3277 = vadd.f32 %v2050, %v3276
  %v3278 = vpop.f32.mrb[0].mxu0
  %v3279 = vadd.f32 %v2046, %v3278
  %v3280 = vpop.f32.mrb[0].mxu0
  %v3281 = vadd.f32 %v2050, %v3280
  %3282 = vmatprep.mubr.bf16.mxu0 %v1762
  %3283 = vmatmul.mubr.bf16.gmra.mrb[0].mxu0 %v1761
  %v3284 = vpop.f32.mrb[0].mxu0
  %v3285 = vadd.f32 %v2046, %v3284
  %v3286 = vpop.f32.mrb[0].mxu0
  %v3287 = vadd.f32 %v2050, %v3286
  %v3288 = vpop.f32.mrb[0].mxu0
  %v3289 = vadd.f32 %v2046, %v3288
  %v3290 = vpop.f32.mrb[0].mxu0
  %v3291 = vadd.f32 %v2050, %v3290
  %3292 = vmatprep.mubr.bf16.mxu0 %v1766
  %3293 = vmatmul.mubr.bf16.gmra.mrb[0].mxu0 %v1765
  %v3294 = vpop.f32.mrb[0].mxu0
  %v3295 = vadd.f32 %v2046, %v3294
  %v3296 = vpop.f32.mrb[0].mxu0
  %v3297 = vadd.f32 %v2050, %v3296
  %v3298 = vpop.f32.mrb[0].mxu0
  %v3299 = vadd.f32 %v2046, %v3298
  %v3300 = vpop.f32.mrb[0].mxu0
  %v3301 = vadd.f32 %v2050, %v3300
  %3302 = vmatprep.mubr.bf16.mxu0 %v1770
  %3303 = vmatmul.mubr.bf16.gmra.mrb[0].mxu0 %v1769
  %v3304 = vpop.f32.mrb[0].mxu0
  %v3305 = vadd.f32 %v2046, %v3304
  %v3306 = vpop.f32.mrb[0].mxu0
  %v3307 = vadd.f32 %v2050, %v3306
  %v3308 = vpop.f32.mrb[0].mxu0
  %v3309 = vadd.f32 %v2046, %v3308
  %v3310 = vpop.f32.mrb[0].mxu0
  %v3311 = vadd.f32 %v2050, %v3310
  %3312 = vmatprep.mubr.bf16.mxu0 %v1774
  %3313 = vmatmul.mubr.bf16.gmra.mrb[0].mxu0 %v1773
  %v3314 = vpop.f32.mrb[0].mxu0
  %v3315 = vadd.f32 %v2046, %v3314
  %v3316 = vpop.f32.mrb[0].mxu0
  %v3317 = vadd.f32 %v2050, %v3316
  %v3318 = vpop.f32.mrb[0].mxu0
  %v3319 = vadd.f32 %v2046, %v3318
  %v3320 = vpop.f32.mrb[0].mxu0
  %v3321 = vadd.f32 %v2050, %v3320
  %3322 = vmatprep.mubr.bf16.mxu0 %v1778
  %3323 = vmatmul.mubr.bf16.gmra.mrb[0].mxu0 %v1777
  %v3324 = vpop.f32.mrb[0].mxu0
  %v3325 = vadd.f32 %v2046, %v3324
  %v3326 = vpop.f32.mrb[0].mxu0
  %v3327 = vadd.f32 %v2050, %v3326
  %v3328 = vpop.f32.mrb[0].mxu0
  %v3329 = vadd.f32 %v2046, %v3328
  %v3330 = vpop.f32.mrb[0].mxu0
  %v3331 = vadd.f32 %v2050, %v3330
  %3332 = vmatprep.mubr.bf16.mxu0 %v1782
  %3333 = vmatmul.mubr.bf16.gmra.mrb[0].mxu0 %v1781
  %v3334 = vpop.f32.mrb[0].mxu0
  %v3335 = vadd.f32 %v2046, %v3334
  %v3336 = vpop.f32.mrb[0].mxu0
  %v3337 = vadd.f32 %v2050, %v3336
  %v3338 = vpop.f32.mrb[0].mxu0
  %v3339 = vadd.f32 %v2046, %v3338
  %v3340 = vpop.f32.mrb[0].mxu0
  %v3341 = vadd.f32 %v2050, %v3340
  %3342 = vdwg.mxu0
  %3343 = vmatprep.subr.bf16.mxu0 %v2895
  %3344 = vmatpush1.bf16.msra.mxu0 %v2894
  %3345 = vmatprep.subr.bf16.mxu0 %v2902
  %3346 = vmatpush1.bf16.msra.mxu0 %v2901
  %3347 = vmatprep.subr.bf16.mxu0 %v2909
  %3348 = vmatpush1.bf16.msra.mxu0 %v2908
  %3349 = vmatprep.subr.bf16.mxu0 %v2916
  %3350 = vmatpush1.bf16.msra.mxu0 %v2915
  %3351 = vmatprep.subr.bf16.mxu0 %v2923
  %3352 = vmatpush1.bf16.msra.mxu0 %v2922
  %3353 = vmatprep.subr.bf16.mxu0 %v2930
  %3354 = vmatpush1.bf16.msra.mxu0 %v2929
  %3355 = vmatprep.subr.bf16.mxu0 %v2937
  %3356 = vmatpush1.bf16.msra.mxu0 %v2936
  %3357 = vmatprep.subr.bf16.mxu0 %v2944
  %3358 = vmatpush1.bf16.msra.mxu0 %v2943
  %3359 = vmatprep.subr.bf16.mxu0 %v2951
  %3360 = vmatpush1.bf16.msra.mxu0 %v2950
  %3361 = vmatprep.subr.bf16.mxu0 %v2958
  %3362 = vmatpush1.bf16.msra.mxu0 %v2957
  %3363 = vmatprep.subr.bf16.mxu0 %v2965
  %3364 = vmatpush1.bf16.msra.mxu0 %v2964
  %3365 = vmatprep.subr.bf16.mxu0 %v2972
  %3366 = vmatpush1.bf16.msra.mxu0 %v2971
  %3367 = vmatprep.subr.bf16.mxu0 %v2979
  %3368 = vmatpush1.bf16.msra.mxu0 %v2978
  %3369 = vmatprep.subr.bf16.mxu0 %v2986
  %3370 = vmatpush1.bf16.msra.mxu0 %v2985
  %3371 = vmatprep.subr.bf16.mxu0 %v2993
  %3372 = vmatpush1.bf16.msra.mxu0 %v2992
  %3373 = vmatprep.subr.bf16.mxu0 %v3000
  %3374 = vmatpush1.bf16.msra.mxu0 %v2999
  %3375 = vmatprep.mubr.bf16.mxu0 %v1756
  %3376 = vmatmul.mubr.bf16.gmra.mrb[0].mxu0 %v1755
  %v3377 = vpop.f32.mrb[0].mxu0
  %v3378 = vadd.f32 %v3265, %v3377
  %v3379 = vpop.f32.mrb[0].mxu0
  %v3380 = vadd.f32 %v3267, %v3379
  %v3381 = vpop.f32.mrb[0].mxu0
  %v3382 = vadd.f32 %v3269, %v3381
  %v3383 = vpop.f32.mrb[0].mxu0
  %v3384 = vadd.f32 %v3271, %v3383
  %3385 = vmatprep.mubr.bf16.mxu0 %v1760
  %3386 = vmatmul.mubr.bf16.gmra.mrb[0].mxu0 %v1759
  %v3387 = vpop.f32.mrb[0].mxu0
  %v3388 = vadd.f32 %v3275, %v3387
  %v3389 = vpop.f32.mrb[0].mxu0
  %v3390 = vadd.f32 %v3277, %v3389
  %v3391 = vpop.f32.mrb[0].mxu0
  %v3392 = vadd.f32 %v3279, %v3391
  %v3393 = vpop.f32.mrb[0].mxu0
  %v3394 = vadd.f32 %v3281, %v3393
  %3395 = vmatprep.mubr.bf16.mxu0 %v1764
  %3396 = vmatmul.mubr.bf16.gmra.mrb[0].mxu0 %v1763
  %v3397 = vpop.f32.mrb[0].mxu0
  %v3398 = vadd.f32 %v3285, %v3397
  %v3399 = vpop.f32.mrb[0].mxu0
  %v3400 = vadd.f32 %v3287, %v3399
  %v3401 = vpop.f32.mrb[0].mxu0
  %v3402 = vadd.f32 %v3289, %v3401
  %v3403 = vpop.f32.mrb[0].mxu0
  %v3404 = vadd.f32 %v3291, %v3403
  %3405 = vmatprep.mubr.bf16.mxu0 %v1768
  %3406 = vmatmul.mubr.bf16.gmra.mrb[0].mxu0 %v1767
  %v3407 = vpop.f32.mrb[0].mxu0
  %v3408 = vadd.f32 %v3295, %v3407
  %v3409 = vpop.f32.mrb[0].mxu0
  %v3410 = vadd.f32 %v3297, %v3409
  %v3411 = vpop.f32.mrb[0].mxu0
  %v3412 = vadd.f32 %v3299, %v3411
  %v3413 = vpop.f32.mrb[0].mxu0
  %v3414 = vadd.f32 %v3301, %v3413
  %3415 = vmatprep.mubr.bf16.mxu0 %v1772
  %3416 = vmatmul.mubr.bf16.gmra.mrb[0].mxu0 %v1771
  %v3417 = vpop.f32.mrb[0].mxu0
  %v3418 = vadd.f32 %v3305, %v3417
  %v3419 = vpop.f32.mrb[0].mxu0
  %v3420 = vadd.f32 %v3307, %v3419
  %v3421 = vpop.f32.mrb[0].mxu0
  %v3422 = vadd.f32 %v3309, %v3421
  %v3423 = vpop.f32.mrb[0].mxu0
  %v3424 = vadd.f32 %v3311, %v3423
  %3425 = vmatprep.mubr.bf16.mxu0 %v1776
  %3426 = vmatmul.mubr.bf16.gmra.mrb[0].mxu0 %v1775
  %v3427 = vpop.f32.mrb[0].mxu0
  %v3428 = vadd.f32 %v3315, %v3427
  %v3429 = vpop.f32.mrb[0].mxu0
  %v3430 = vadd.f32 %v3317, %v3429
  %v3431 = vpop.f32.mrb[0].mxu0
  %v3432 = vadd.f32 %v3319, %v3431
  %v3433 = vpop.f32.mrb[0].mxu0
  %v3434 = vadd.f32 %v3321, %v3433
  %3435 = vmatprep.mubr.bf16.mxu0 %v1780
  %3436 = vmatmul.mubr.bf16.gmra.mrb[0].mxu0 %v1779
  %v3437 = vpop.f32.mrb[0].mxu0
  %v3438 = vadd.f32 %v3325, %v3437
  %v3439 = vpop.f32.mrb[0].mxu0
  %v3440 = vadd.f32 %v3327, %v3439
  %v3441 = vpop.f32.mrb[0].mxu0
  %v3442 = vadd.f32 %v3329, %v3441
  %v3443 = vpop.f32.mrb[0].mxu0
  %v3444 = vadd.f32 %v3331, %v3443
  %3445 = vmatprep.mubr.bf16.mxu0 %v1784
  %3446 = vmatmul.mubr.bf16.gmra.mrb[0].mxu0 %v1783
  %v3447 = vpop.f32.mrb[0].mxu0
  %v3448 = vadd.f32 %v3335, %v3447
  %v3449 = vpop.f32.mrb[0].mxu0
  %v3450 = vadd.f32 %v3337, %v3449
  %v3451 = vpop.f32.mrb[0].mxu0
  %v3452 = vadd.f32 %v3339, %v3451
  %v3453 = vpop.f32.mrb[0].mxu0
  %v3454 = vadd.f32 %v3341, %v3453
  %3455 = vdwg.mxu0
  %3456 = vmatprep.subr.bf16.mxu0 %v2785
  %3457 = vmatpush1.bf16.msra.mxu0 %v2784
  %3458 = vmatprep.subr.bf16.mxu0 %v2792
  %3459 = vmatpush1.bf16.msra.mxu0 %v2791
  %3460 = vmatprep.subr.bf16.mxu0 %v2799
  %3461 = vmatpush1.bf16.msra.mxu0 %v2798
  %3462 = vmatprep.subr.bf16.mxu0 %v2806
  %3463 = vmatpush1.bf16.msra.mxu0 %v2805
  %3464 = vmatprep.subr.bf16.mxu0 %v2813
  %3465 = vmatpush1.bf16.msra.mxu0 %v2812
  %3466 = vmatprep.subr.bf16.mxu0 %v2820
  %3467 = vmatpush1.bf16.msra.mxu0 %v2819
  %3468 = vmatprep.subr.bf16.mxu0 %v2827
  %3469 = vmatpush1.bf16.msra.mxu0 %v2826
  %3470 = vmatprep.subr.bf16.mxu0 %v2834
  %3471 = vmatpush1.bf16.msra.mxu0 %v2833
  %3472 = vmatprep.subr.bf16.mxu0 %v2841
  %3473 = vmatpush1.bf16.msra.mxu0 %v2840
  %3474 = vmatprep.subr.bf16.mxu0 %v2848
  %3475 = vmatpush1.bf16.msra.mxu0 %v2847
  %3476 = vmatprep.subr.bf16.mxu0 %v2855
  %3477 = vmatpush1.bf16.msra.mxu0 %v2854
  %3478 = vmatprep.subr.bf16.mxu0 %v2862
  %3479 = vmatpush1.bf16.msra.mxu0 %v2861
  %3480 = vmatprep.subr.bf16.mxu0 %v2869
  %3481 = vmatpush1.bf16.msra.mxu0 %v2868
  %3482 = vmatprep.subr.bf16.mxu0 %v2876
  %3483 = vmatpush1.bf16.msra.mxu0 %v2875
  %3484 = vmatprep.subr.bf16.mxu0 %v2883
  %3485 = vmatpush1.bf16.msra.mxu0 %v2882
  %3486 = vmatprep.subr.bf16.mxu0 %v2890
  %3487 = vmatpush1.bf16.msra.mxu0 %v2889
  %3488 = vmatprep.mubr.bf16.mxu0 %v1754
  %3489 = vmatmul.mubr.bf16.gmra.mrb[0].mxu0 %v1753
  %v3490 = vpop.f32.mrb[0].mxu0
  %v3491 = vadd.f32 %v2054, %v3490
  %v3492 = vpop.f32.mrb[0].mxu0
  %v3493 = vadd.f32 %v2058, %v3492
  %v3494 = vpop.f32.mrb[0].mxu0
  %v3495 = vadd.f32 %v2054, %v3494
  %v3496 = vpop.f32.mrb[0].mxu0
  %v3497 = vadd.f32 %v2058, %v3496
  %3498 = vmatprep.mubr.bf16.mxu0 %v1758
  %3499 = vmatmul.mubr.bf16.gmra.mrb[0].mxu0 %v1757
  %v3500 = vpop.f32.mrb[0].mxu0
  %v3501 = vadd.f32 %v2054, %v3500
  %v3502 = vpop.f32.mrb[0].mxu0
  %v3503 = vadd.f32 %v2058, %v3502
  %v3504 = vpop.f32.mrb[0].mxu0
  %v3505 = vadd.f32 %v2054, %v3504
  %v3506 = vpop.f32.mrb[0].mxu0
  %v3507 = vadd.f32 %v2058, %v3506
  %3508 = vmatprep.mubr.bf16.mxu0 %v1762
  %3509 = vmatmul.mubr.bf16.gmra.mrb[0].mxu0 %v1761
  %v3510 = vpop.f32.mrb[0].mxu0
  %v3511 = vadd.f32 %v2054, %v3510
  %v3512 = vpop.f32.mrb[0].mxu0
  %v3513 = vadd.f32 %v2058, %v3512
  %v3514 = vpop.f32.mrb[0].mxu0
  %v3515 = vadd.f32 %v2054, %v3514
  %v3516 = vpop.f32.mrb[0].mxu0
  %v3517 = vadd.f32 %v2058, %v3516
  %3518 = vmatprep.mubr.bf16.mxu0 %v1766
  %3519 = vmatmul.mubr.bf16.gmra.mrb[0].mxu0 %v1765
  %v3520 = vpop.f32.mrb[0].mxu0
  %v3521 = vadd.f32 %v2054, %v3520
  %v3522 = vpop.f32.mrb[0].mxu0
  %v3523 = vadd.f32 %v2058, %v3522
  %v3524 = vpop.f32.mrb[0].mxu0
  %v3525 = vadd.f32 %v2054, %v3524
  %v3526 = vpop.f32.mrb[0].mxu0
  %v3527 = vadd.f32 %v2058, %v3526
  %3528 = vmatprep.mubr.bf16.mxu0 %v1770
  %3529 = vmatmul.mubr.bf16.gmra.mrb[0].mxu0 %v1769
  %v3530 = vpop.f32.mrb[0].mxu0
  %v3531 = vadd.f32 %v2054, %v3530
  %v3532 = vpop.f32.mrb[0].mxu0
  %v3533 = vadd.f32 %v2058, %v3532
  %v3534 = vpop.f32.mrb[0].mxu0
  %v3535 = vadd.f32 %v2054, %v3534
  %v3536 = vpop.f32.mrb[0].mxu0
  %v3537 = vadd.f32 %v2058, %v3536
  %3538 = vmatprep.mubr.bf16.mxu0 %v1774
  %3539 = vmatmul.mubr.bf16.gmra.mrb[0].mxu0 %v1773
  %v3540 = vpop.f32.mrb[0].mxu0
  %v3541 = vadd.f32 %v2054, %v3540
  %v3542 = vpop.f32.mrb[0].mxu0
  %v3543 = vadd.f32 %v2058, %v3542
  %v3544 = vpop.f32.mrb[0].mxu0
  %v3545 = vadd.f32 %v2054, %v3544
  %v3546 = vpop.f32.mrb[0].mxu0
  %v3547 = vadd.f32 %v2058, %v3546
  %3548 = vmatprep.mubr.bf16.mxu0 %v1778
  %3549 = vmatmul.mubr.bf16.gmra.mrb[0].mxu0 %v1777
  %v3550 = vpop.f32.mrb[0].mxu0
  %v3551 = vadd.f32 %v2054, %v3550
  %v3552 = vpop.f32.mrb[0].mxu0
  %v3553 = vadd.f32 %v2058, %v3552
  %v3554 = vpop.f32.mrb[0].mxu0
  %v3555 = vadd.f32 %v2054, %v3554
  %v3556 = vpop.f32.mrb[0].mxu0
  %v3557 = vadd.f32 %v2058, %v3556
  %3558 = vmatprep.mubr.bf16.mxu0 %v1782
  %3559 = vmatmul.mubr.bf16.gmra.mrb[0].mxu0 %v1781
  %v3560 = vpop.f32.mrb[0].mxu0
  %v3561 = vadd.f32 %v2054, %v3560
  %v3562 = vpop.f32.mrb[0].mxu0
  %v3563 = vadd.f32 %v2058, %v3562
  %v3564 = vpop.f32.mrb[0].mxu0
  %v3565 = vadd.f32 %v2054, %v3564
  %v3566 = vpop.f32.mrb[0].mxu0
  %v3567 = vadd.f32 %v2058, %v3566
  %3568 = vdwg.mxu0
  %3569 = vmatprep.subr.bf16.mxu0 %v2897
  %3570 = vmatpush1.bf16.msra.mxu0 %v2896
  %3571 = vmatprep.subr.bf16.mxu0 %v2904
  %3572 = vmatpush1.bf16.msra.mxu0 %v2903
  %3573 = vmatprep.subr.bf16.mxu0 %v2911
  %3574 = vmatpush1.bf16.msra.mxu0 %v2910
  %3575 = vmatprep.subr.bf16.mxu0 %v2918
  %3576 = vmatpush1.bf16.msra.mxu0 %v2917
  %3577 = vmatprep.subr.bf16.mxu0 %v2925
  %3578 = vmatpush1.bf16.msra.mxu0 %v2924
  %3579 = vmatprep.subr.bf16.mxu0 %v2932
  %3580 = vmatpush1.bf16.msra.mxu0 %v2931
  %3581 = vmatprep.subr.bf16.mxu0 %v2939
  %3582 = vmatpush1.bf16.msra.mxu0 %v2938
  %3583 = vmatprep.subr.bf16.mxu0 %v2946
  %3584 = vmatpush1.bf16.msra.mxu0 %v2945
  %3585 = vmatprep.subr.bf16.mxu0 %v2953
  %3586 = vmatpush1.bf16.msra.mxu0 %v2952
  %3587 = vmatprep.subr.bf16.mxu0 %v2960
  %3588 = vmatpush1.bf16.msra.mxu0 %v2959
  %3589 = vmatprep.subr.bf16.mxu0 %v2967
  %3590 = vmatpush1.bf16.msra.mxu0 %v2966
  %3591 = vmatprep.subr.bf16.mxu0 %v2974
  %3592 = vmatpush1.bf16.msra.mxu0 %v2973
  %3593 = vmatprep.subr.bf16.mxu0 %v2981
  %3594 = vmatpush1.bf16.msra.mxu0 %v2980
  %3595 = vmatprep.subr.bf16.mxu0 %v2988
  %3596 = vmatpush1.bf16.msra.mxu0 %v2987
  %3597 = vmatprep.subr.bf16.mxu0 %v2995
  %3598 = vmatpush1.bf16.msra.mxu0 %v2994
  %3599 = vmatprep.subr.bf16.mxu0 %v3002
  %3600 = vmatpush1.bf16.msra.mxu0 %v3001
  %3601 = vmatprep.mubr.bf16.mxu0 %v1756
  %3602 = vmatmul.mubr.bf16.gmra.mrb[0].mxu0 %v1755
  %v3603 = vpop.f32.mrb[0].mxu0
  %v3604 = vadd.f32 %v3491, %v3603
  %v3605 = vpop.f32.mrb[0].mxu0
  %v3606 = vadd.f32 %v3493, %v3605
  %v3607 = vpop.f32.mrb[0].mxu0
  %v3608 = vadd.f32 %v3495, %v3607
  %v3609 = vpop.f32.mrb[0].mxu0
  %v3610 = vadd.f32 %v3497, %v3609
  %3611 = vmatprep.mubr.bf16.mxu0 %v1760
  %3612 = vmatmul.mubr.bf16.gmra.mrb[0].mxu0 %v1759
  %v3613 = vpop.f32.mrb[0].mxu0
  %v3614 = vadd.f32 %v3501, %v3613
  %v3615 = vpop.f32.mrb[0].mxu0
  %v3616 = vadd.f32 %v3503, %v3615
  %v3617 = vpop.f32.mrb[0].mxu0
  %v3618 = vadd.f32 %v3505, %v3617
  %v3619 = vpop.f32.mrb[0].mxu0
  %v3620 = vadd.f32 %v3507, %v3619
  %3621 = vmatprep.mubr.bf16.mxu0 %v1764
  %3622 = vmatmul.mubr.bf16.gmra.mrb[0].mxu0 %v1763
  %v3623 = vpop.f32.mrb[0].mxu0
  %v3624 = vadd.f32 %v3511, %v3623
  %v3625 = vpop.f32.mrb[0].mxu0
  %v3626 = vadd.f32 %v3513, %v3625
  %v3627 = vpop.f32.mrb[0].mxu0
  %v3628 = vadd.f32 %v3515, %v3627
  %v3629 = vpop.f32.mrb[0].mxu0
  %v3630 = vadd.f32 %v3517, %v3629
  %3631 = vmatprep.mubr.bf16.mxu0 %v1768
  %3632 = vmatmul.mubr.bf16.gmra.mrb[0].mxu0 %v1767
  %v3633 = vpop.f32.mrb[0].mxu0
  %v3634 = vadd.f32 %v3521, %v3633
  %v3635 = vpop.f32.mrb[0].mxu0
  %v3636 = vadd.f32 %v3523, %v3635
  %v3637 = vpop.f32.mrb[0].mxu0
  %v3638 = vadd.f32 %v3525, %v3637
  %v3639 = vpop.f32.mrb[0].mxu0
  %v3640 = vadd.f32 %v3527, %v3639
  %3641 = vmatprep.mubr.bf16.mxu0 %v1772
  %3642 = vmatmul.mubr.bf16.gmra.mrb[0].mxu0 %v1771
  %v3643 = vpop.f32.mrb[0].mxu0
  %v3644 = vadd.f32 %v3531, %v3643
  %v3645 = vpop.f32.mrb[0].mxu0
  %v3646 = vadd.f32 %v3533, %v3645
  %v3647 = vpop.f32.mrb[0].mxu0
  %v3648 = vadd.f32 %v3535, %v3647
  %v3649 = vpop.f32.mrb[0].mxu0
  %v3650 = vadd.f32 %v3537, %v3649
  %3651 = vmatprep.mubr.bf16.mxu0 %v1776
  %3652 = vmatmul.mubr.bf16.gmra.mrb[0].mxu0 %v1775
  %v3653 = vpop.f32.mrb[0].mxu0
  %v3654 = vadd.f32 %v3541, %v3653
  %v3655 = vpop.f32.mrb[0].mxu0
  %v3656 = vadd.f32 %v3543, %v3655
  %v3657 = vpop.f32.mrb[0].mxu0
  %v3658 = vadd.f32 %v3545, %v3657
  %v3659 = vpop.f32.mrb[0].mxu0
  %v3660 = vadd.f32 %v3547, %v3659
  %3661 = vmatprep.mubr.bf16.mxu0 %v1780
  %3662 = vmatmul.mubr.bf16.gmra.mrb[0].mxu0 %v1779
  %v3663 = vpop.f32.mrb[0].mxu0
  %v3664 = vadd.f32 %v3551, %v3663
  %v3665 = vpop.f32.mrb[0].mxu0
  %v3666 = vadd.f32 %v3553, %v3665
  %v3667 = vpop.f32.mrb[0].mxu0
  %v3668 = vadd.f32 %v3555, %v3667
  %v3669 = vpop.f32.mrb[0].mxu0
  %v3670 = vadd.f32 %v3557, %v3669
  %3671 = vmatprep.mubr.bf16.mxu0 %v1784
  %3672 = vmatmul.mubr.bf16.gmra.mrb[0].mxu0 %v1783
  %v3673 = vpop.f32.mrb[0].mxu0
  %v3674 = vadd.f32 %v3561, %v3673
  %v3675 = vpop.f32.mrb[0].mxu0
  %v3676 = vadd.f32 %v3563, %v3675
  %v3677 = vpop.f32.mrb[0].mxu0
  %v3678 = vadd.f32 %v3565, %v3677
  %v3679 = vpop.f32.mrb[0].mxu0
  %v3680 = vadd.f32 %v3567, %v3679
  %3681 = vdwg.mxu0
  %3682 = vmatprep.subr.bf16.mxu0 %v2787
  %3683 = vmatpush1.bf16.msra.mxu0 %v2786
  %3684 = vmatprep.subr.bf16.mxu0 %v2794
  %3685 = vmatpush1.bf16.msra.mxu0 %v2793
  %3686 = vmatprep.subr.bf16.mxu0 %v2801
  %3687 = vmatpush1.bf16.msra.mxu0 %v2800
  %3688 = vmatprep.subr.bf16.mxu0 %v2808
  %3689 = vmatpush1.bf16.msra.mxu0 %v2807
  %3690 = vmatprep.subr.bf16.mxu0 %v2815
  %3691 = vmatpush1.bf16.msra.mxu0 %v2814
  %3692 = vmatprep.subr.bf16.mxu0 %v2822
  %3693 = vmatpush1.bf16.msra.mxu0 %v2821
  %3694 = vmatprep.subr.bf16.mxu0 %v2829
  %3695 = vmatpush1.bf16.msra.mxu0 %v2828
  %3696 = vmatprep.subr.bf16.mxu0 %v2836
  %3697 = vmatpush1.bf16.msra.mxu0 %v2835
  %3698 = vmatprep.subr.bf16.mxu0 %v2843
  %3699 = vmatpush1.bf16.msra.mxu0 %v2842
  %3700 = vmatprep.subr.bf16.mxu0 %v2850
  %3701 = vmatpush1.bf16.msra.mxu0 %v2849
  %3702 = vmatprep.subr.bf16.mxu0 %v2857
  %3703 = vmatpush1.bf16.msra.mxu0 %v2856
  %3704 = vmatprep.subr.bf16.mxu0 %v2864
  %3705 = vmatpush1.bf16.msra.mxu0 %v2863
  %3706 = vmatprep.subr.bf16.mxu0 %v2871
  %3707 = vmatpush1.bf16.msra.mxu0 %v2870
  %3708 = vmatprep.subr.bf16.mxu0 %v2878
  %3709 = vmatpush1.bf16.msra.mxu0 %v2877
  %3710 = vmatprep.subr.bf16.mxu0 %v2885
  %3711 = vmatpush1.bf16.msra.mxu0 %v2884
  %3712 = vmatprep.subr.bf16.mxu0 %v2892
  %3713 = vmatpush1.bf16.msra.mxu0 %v2891
  %3714 = vmatprep.mubr.bf16.mxu0 %v1754
  %3715 = vmatmul.mubr.bf16.gmra.mrb[0].mxu0 %v1753
  %v3716 = vpop.f32.mrb[0].mxu0
  %v3717 = vadd.f32 %v2062, %v3716
  %v3718 = vpop.f32.mrb[0].mxu0
  %v3719 = vadd.f32 %v2066, %v3718
  %v3720 = vpop.f32.mrb[0].mxu0
  %v3721 = vadd.f32 %v2062, %v3720
  %v3722 = vpop.f32.mrb[0].mxu0
  %v3723 = vadd.f32 %v2066, %v3722
  %3724 = vmatprep.mubr.bf16.mxu0 %v1758
  %3725 = vmatmul.mubr.bf16.gmra.mrb[0].mxu0 %v1757
  %v3726 = vpop.f32.mrb[0].mxu0
  %v3727 = vadd.f32 %v2062, %v3726
  %v3728 = vpop.f32.mrb[0].mxu0
  %v3729 = vadd.f32 %v2066, %v3728
  %v3730 = vpop.f32.mrb[0].mxu0
  %v3731 = vadd.f32 %v2062, %v3730
  %v3732 = vpop.f32.mrb[0].mxu0
  %v3733 = vadd.f32 %v2066, %v3732
  %3734 = vmatprep.mubr.bf16.mxu0 %v1762
  %3735 = vmatmul.mubr.bf16.gmra.mrb[0].mxu0 %v1761
  %v3736 = vpop.f32.mrb[0].mxu0
  %v3737 = vadd.f32 %v2062, %v3736
  %v3738 = vpop.f32.mrb[0].mxu0
  %v3739 = vadd.f32 %v2066, %v3738
  %v3740 = vpop.f32.mrb[0].mxu0
  %v3741 = vadd.f32 %v2062, %v3740
  %v3742 = vpop.f32.mrb[0].mxu0
  %v3743 = vadd.f32 %v2066, %v3742
  %3744 = vmatprep.mubr.bf16.mxu0 %v1766
  %3745 = vmatmul.mubr.bf16.gmra.mrb[0].mxu0 %v1765
  %v3746 = vpop.f32.mrb[0].mxu0
  %v3747 = vadd.f32 %v2062, %v3746
  %v3748 = vpop.f32.mrb[0].mxu0
  %v3749 = vadd.f32 %v2066, %v3748
  %v3750 = vpop.f32.mrb[0].mxu0
  %v3751 = vadd.f32 %v2062, %v3750
  %v3752 = vpop.f32.mrb[0].mxu0
  %v3753 = vadd.f32 %v2066, %v3752
  %3754 = vmatprep.mubr.bf16.mxu0 %v1770
  %3755 = vmatmul.mubr.bf16.gmra.mrb[0].mxu0 %v1769
  %v3756 = vpop.f32.mrb[0].mxu0
  %v3757 = vadd.f32 %v2062, %v3756
  %v3758 = vpop.f32.mrb[0].mxu0
  %v3759 = vadd.f32 %v2066, %v3758
  %v3760 = vpop.f32.mrb[0].mxu0
  %v3761 = vadd.f32 %v2062, %v3760
  %v3762 = vpop.f32.mrb[0].mxu0
  %v3763 = vadd.f32 %v2066, %v3762
  %3764 = vmatprep.mubr.bf16.mxu0 %v1774
  %3765 = vmatmul.mubr.bf16.gmra.mrb[0].mxu0 %v1773
  %v3766 = vpop.f32.mrb[0].mxu0
  %v3767 = vadd.f32 %v2062, %v3766
  %v3768 = vpop.f32.mrb[0].mxu0
  %v3769 = vadd.f32 %v2066, %v3768
  %v3770 = vpop.f32.mrb[0].mxu0
  %v3771 = vadd.f32 %v2062, %v3770
  %v3772 = vpop.f32.mrb[0].mxu0
  %v3773 = vadd.f32 %v2066, %v3772
  %3774 = vmatprep.mubr.bf16.mxu0 %v1778
  %3775 = vmatmul.mubr.bf16.gmra.mrb[0].mxu0 %v1777
  %v3776 = vpop.f32.mrb[0].mxu0
  %v3777 = vadd.f32 %v2062, %v3776
  %v3778 = vpop.f32.mrb[0].mxu0
  %v3779 = vadd.f32 %v2066, %v3778
  %v3780 = vpop.f32.mrb[0].mxu0
  %v3781 = vadd.f32 %v2062, %v3780
  %v3782 = vpop.f32.mrb[0].mxu0
  %v3783 = vadd.f32 %v2066, %v3782
  %3784 = vmatprep.mubr.bf16.mxu0 %v1782
  %3785 = vmatmul.mubr.bf16.gmra.mrb[0].mxu0 %v1781
  %v3786 = vpop.f32.mrb[0].mxu0
  %v3787 = vadd.f32 %v2062, %v3786
  %v3788 = vpop.f32.mrb[0].mxu0
  %v3789 = vadd.f32 %v2066, %v3788
  %v3790 = vpop.f32.mrb[0].mxu0
  %v3791 = vadd.f32 %v2062, %v3790
  %v3792 = vpop.f32.mrb[0].mxu0
  %v3793 = vadd.f32 %v2066, %v3792
  %3794 = vdwg.mxu0
  %3795 = vmatprep.subr.bf16.mxu0 %v2899
  %3796 = vmatpush1.bf16.msra.mxu0 %v2898
  %3797 = vmatprep.subr.bf16.mxu0 %v2906
  %3798 = vmatpush1.bf16.msra.mxu0 %v2905
  %3799 = vmatprep.subr.bf16.mxu0 %v2913
  %3800 = vmatpush1.bf16.msra.mxu0 %v2912
  %3801 = vmatprep.subr.bf16.mxu0 %v2920
  %3802 = vmatpush1.bf16.msra.mxu0 %v2919
  %3803 = vmatprep.subr.bf16.mxu0 %v2927
  %3804 = vmatpush1.bf16.msra.mxu0 %v2926
  %3805 = vmatprep.subr.bf16.mxu0 %v2934
  %3806 = vmatpush1.bf16.msra.mxu0 %v2933
  %3807 = vmatprep.subr.bf16.mxu0 %v2941
  %3808 = vmatpush1.bf16.msra.mxu0 %v2940
  %3809 = vmatprep.subr.bf16.mxu0 %v2948
  %3810 = vmatpush1.bf16.msra.mxu0 %v2947
  %3811 = vmatprep.subr.bf16.mxu0 %v2955
  %3812 = vmatpush1.bf16.msra.mxu0 %v2954
  %3813 = vmatprep.subr.bf16.mxu0 %v2962
  %3814 = vmatpush1.bf16.msra.mxu0 %v2961
  %3815 = vmatprep.subr.bf16.mxu0 %v2969
  %3816 = vmatpush1.bf16.msra.mxu0 %v2968
  %3817 = vmatprep.subr.bf16.mxu0 %v2976
  %3818 = vmatpush1.bf16.msra.mxu0 %v2975
  %3819 = vmatprep.subr.bf16.mxu0 %v2983
  %3820 = vmatpush1.bf16.msra.mxu0 %v2982
  %3821 = vmatprep.subr.bf16.mxu0 %v2990
  %3822 = vmatpush1.bf16.msra.mxu0 %v2989
  %3823 = vmatprep.subr.bf16.mxu0 %v2997
  %3824 = vmatpush1.bf16.msra.mxu0 %v2996
  %3825 = vmatprep.subr.bf16.mxu0 %v3004
  %3826 = vmatpush1.bf16.msra.mxu0 %v3003
  %3827 = vmatprep.mubr.bf16.mxu0 %v1756
  %3828 = vmatmul.mubr.bf16.gmra.mrb[0].mxu0 %v1755
  %v3829 = vpop.f32.mrb[0].mxu0
  %v3830 = vadd.f32 %v3717, %v3829
  %v3831 = vpop.f32.mrb[0].mxu0
  %v3832 = vadd.f32 %v3719, %v3831
  %v3833 = vpop.f32.mrb[0].mxu0
  %v3834 = vadd.f32 %v3721, %v3833
  %v3835 = vpop.f32.mrb[0].mxu0
  %v3836 = vadd.f32 %v3723, %v3835
  %3837 = vmatprep.mubr.bf16.mxu0 %v1760
  %3838 = vmatmul.mubr.bf16.gmra.mrb[0].mxu0 %v1759
  %v3839 = vpop.f32.mrb[0].mxu0
  %v3840 = vadd.f32 %v3727, %v3839
  %v3841 = vpop.f32.mrb[0].mxu0
  %v3842 = vadd.f32 %v3729, %v3841
  %v3843 = vpop.f32.mrb[0].mxu0
  %v3844 = vadd.f32 %v3731, %v3843
  %v3845 = vpop.f32.mrb[0].mxu0
  %v3846 = vadd.f32 %v3733, %v3845
  %3847 = vmatprep.mubr.bf16.mxu0 %v1764
  %3848 = vmatmul.mubr.bf16.gmra.mrb[0].mxu0 %v1763
  %v3849 = vpop.f32.mrb[0].mxu0
  %v3850 = vadd.f32 %v3737, %v3849
  %v3851 = vpop.f32.mrb[0].mxu0
  %v3852 = vadd.f32 %v3739, %v3851
  %v3853 = vpop.f32.mrb[0].mxu0
  %v3854 = vadd.f32 %v3741, %v3853
  %v3855 = vpop.f32.mrb[0].mxu0
  %v3856 = vadd.f32 %v3743, %v3855
  %3857 = vmatprep.mubr.bf16.mxu0 %v1768
  %3858 = vmatmul.mubr.bf16.gmra.mrb[0].mxu0 %v1767
  %v3859 = vpop.f32.mrb[0].mxu0
  %v3860 = vadd.f32 %v3747, %v3859
  %v3861 = vpop.f32.mrb[0].mxu0
  %v3862 = vadd.f32 %v3749, %v3861
  %v3863 = vpop.f32.mrb[0].mxu0
  %v3864 = vadd.f32 %v3751, %v3863
  %v3865 = vpop.f32.mrb[0].mxu0
  %v3866 = vadd.f32 %v3753, %v3865
  %3867 = vmatprep.mubr.bf16.mxu0 %v1772
  %3868 = vmatmul.mubr.bf16.gmra.mrb[0].mxu0 %v1771
  %v3869 = vpop.f32.mrb[0].mxu0
  %v3870 = vadd.f32 %v3757, %v3869
  %v3871 = vpop.f32.mrb[0].mxu0
  %v3872 = vadd.f32 %v3759, %v3871
  %v3873 = vpop.f32.mrb[0].mxu0
  %v3874 = vadd.f32 %v3761, %v3873
  %v3875 = vpop.f32.mrb[0].mxu0
  %v3876 = vadd.f32 %v3763, %v3875
  %3877 = vmatprep.mubr.bf16.mxu0 %v1776
  %3878 = vmatmul.mubr.bf16.gmra.mrb[0].mxu0 %v1775
  %v3879 = vpop.f32.mrb[0].mxu0
  %v3880 = vadd.f32 %v3767, %v3879
  %v3881 = vpop.f32.mrb[0].mxu0
  %v3882 = vadd.f32 %v3769, %v3881
  %v3883 = vpop.f32.mrb[0].mxu0
  %v3884 = vadd.f32 %v3771, %v3883
  %v3885 = vpop.f32.mrb[0].mxu0
  %v3886 = vadd.f32 %v3773, %v3885
  %3887 = vmatprep.mubr.bf16.mxu0 %v1780
  %3888 = vmatmul.mubr.bf16.gmra.mrb[0].mxu0 %v1779
  %v3889 = vpop.f32.mrb[0].mxu0
  %v3890 = vadd.f32 %v3777, %v3889
  %v3891 = vpop.f32.mrb[0].mxu0
  %v3892 = vadd.f32 %v3779, %v3891
  %v3893 = vpop.f32.mrb[0].mxu0
  %v3894 = vadd.f32 %v3781, %v3893
  %v3895 = vpop.f32.mrb[0].mxu0
  %v3896 = vadd.f32 %v3783, %v3895
  %3897 = vmatprep.mubr.bf16.mxu0 %v1784
  %3898 = vmatmul.mubr.bf16.gmra.mrb[0].mxu0 %v1783
  %v3899 = vpop.f32.mrb[0].mxu0
  %v3900 = vadd.f32 %v3787, %v3899
  %v3901 = vpop.f32.mrb[0].mxu0
  %v3902 = vadd.f32 %v3789, %v3901
  %v3903 = vpop.f32.mrb[0].mxu0
  %v3904 = vadd.f32 %v3791, %v3903
  %v3905 = vpop.f32.mrb[0].mxu0
  %v3906 = vadd.f32 %v3793, %v3905
  %3907 = vdwg.mxu0
  %3908 = vmatprep.subr.bf16.mxu0 0
  %3909 = vmatpush1.bf16.msra.mxu0 %v2788
  %3910 = vmatprep.subr.bf16.mxu0 0
  %3911 = vmatpush1.bf16.msra.mxu0 %v2795
  %3912 = vmatprep.subr.bf16.mxu0 0
  %3913 = vmatpush1.bf16.msra.mxu0 %v2802
  %3914 = vmatprep.subr.bf16.mxu0 0
  %3915 = vmatpush1.bf16.msra.mxu0 %v2809
  %3916 = vmatprep.subr.bf16.mxu0 0
  %3917 = vmatpush1.bf16.msra.mxu0 %v2816
  %3918 = vmatprep.subr.bf16.mxu0 0
  %3919 = vmatpush1.bf16.msra.mxu0 %v2823
  %3920 = vmatprep.subr.bf16.mxu0 0
  %3921 = vmatpush1.bf16.msra.mxu0 %v2830
  %3922 = vmatprep.subr.bf16.mxu0 0
  %3923 = vmatpush1.bf16.msra.mxu0 %v2837
  %3924 = vmatprep.subr.bf16.mxu0 0
  %3925 = vmatpush1.bf16.msra.mxu0 %v2844
  %3926 = vmatprep.subr.bf16.mxu0 0
  %3927 = vmatpush1.bf16.msra.mxu0 %v2851
  %3928 = vmatprep.subr.bf16.mxu0 0
  %3929 = vmatpush1.bf16.msra.mxu0 %v2858
  %3930 = vmatprep.subr.bf16.mxu0 0
  %3931 = vmatpush1.bf16.msra.mxu0 %v2865
  %3932 = vmatprep.subr.bf16.mxu0 0
  %3933 = vmatpush1.bf16.msra.mxu0 %v2872
  %3934 = vmatprep.subr.bf16.mxu0 0
  %3935 = vmatpush1.bf16.msra.mxu0 %v2879
  %3936 = vmatprep.subr.bf16.mxu0 0
  %3937 = vmatpush1.bf16.msra.mxu0 %v2886
  %3938 = vmatprep.subr.bf16.mxu0 0
  %3939 = vmatpush1.bf16.msra.mxu0 %v2893
  %3940 = vmatprep.mubr.bf16.mxu0 %v1754
  %3941 = vmatmul.mubr.bf16.gmra.mrb[0].mxu0 %v1753
  %v3942 = vpop.f32.mrb[0].mxu0
  %v3943 = vadd.f32 %v2070, %v3942
  %v3944 = vpop.f32.mrb[0].mxu0
  %v3945 = vpop.f32.mrb[0].mxu0
  %v3946 = vadd.f32 %v2070, %v3945
  %v3947 = vpop.f32.mrb[0].mxu0
  %3948 = vmatprep.mubr.bf16.mxu0 %v1758
  %3949 = vmatmul.mubr.bf16.gmra.mrb[0].mxu0 %v1757
  %v3950 = vpop.f32.mrb[0].mxu0
  %v3951 = vadd.f32 %v2070, %v3950
  %v3952 = vpop.f32.mrb[0].mxu0
  %v3953 = vpop.f32.mrb[0].mxu0
  %v3954 = vadd.f32 %v2070, %v3953
  %v3955 = vpop.f32.mrb[0].mxu0
  %3956 = vmatprep.mubr.bf16.mxu0 %v1762
  %3957 = vmatmul.mubr.bf16.gmra.mrb[0].mxu0 %v1761
  %v3958 = vpop.f32.mrb[0].mxu0
  %v3959 = vadd.f32 %v2070, %v3958
  %v3960 = vpop.f32.mrb[0].mxu0
  %v3961 = vpop.f32.mrb[0].mxu0
  %v3962 = vadd.f32 %v2070, %v3961
  %v3963 = vpop.f32.mrb[0].mxu0
  %3964 = vmatprep.mubr.bf16.mxu0 %v1766
  %3965 = vmatmul.mubr.bf16.gmra.mrb[0].mxu0 %v1765
  %v3966 = vpop.f32.mrb[0].mxu0
  %v3967 = vadd.f32 %v2070, %v3966
  %v3968 = vpop.f32.mrb[0].mxu0
  %v3969 = vpop.f32.mrb[0].mxu0
  %v3970 = vadd.f32 %v2070, %v3969
  %v3971 = vpop.f32.mrb[0].mxu0
  %3972 = vmatprep.mubr.bf16.mxu0 %v1770
  %3973 = vmatmul.mubr.bf16.gmra.mrb[0].mxu0 %v1769
  %v3974 = vpop.f32.mrb[0].mxu0
  %v3975 = vadd.f32 %v2070, %v3974
  %v3976 = vpop.f32.mrb[0].mxu0
  %v3977 = vpop.f32.mrb[0].mxu0
  %v3978 = vadd.f32 %v2070, %v3977
  %v3979 = vpop.f32.mrb[0].mxu0
  %3980 = vmatprep.mubr.bf16.mxu0 %v1774
  %3981 = vmatmul.mubr.bf16.gmra.mrb[0].mxu0 %v1773
  %v3982 = vpop.f32.mrb[0].mxu0
  %v3983 = vadd.f32 %v2070, %v3982
  %v3984 = vpop.f32.mrb[0].mxu0
  %v3985 = vpop.f32.mrb[0].mxu0
  %v3986 = vadd.f32 %v2070, %v3985
  %v3987 = vpop.f32.mrb[0].mxu0
  %3988 = vmatprep.mubr.bf16.mxu0 %v1778
  %3989 = vmatmul.mubr.bf16.gmra.mrb[0].mxu0 %v1777
  %v3990 = vpop.f32.mrb[0].mxu0
  %v3991 = vadd.f32 %v2070, %v3990
  %v3992 = vpop.f32.mrb[0].mxu0
  %v3993 = vpop.f32.mrb[0].mxu0
  %v3994 = vadd.f32 %v2070, %v3993
  %v3995 = vpop.f32.mrb[0].mxu0
  %3996 = vmatprep.mubr.bf16.mxu0 %v1782
  %3997 = vmatmul.mubr.bf16.gmra.mrb[0].mxu0 %v1781
  %v3998 = vpop.f32.mrb[0].mxu0
  %v3999 = vadd.f32 %v2070, %v3998
  %v4000 = vpop.f32.mrb[0].mxu0
  %v4001 = vpop.f32.mrb[0].mxu0
  %v4002 = vadd.f32 %v2070, %v4001
  %v4003 = vpop.f32.mrb[0].mxu0
  %4004 = vdwg.mxu0
  %4005 = vmatprep.subr.bf16.mxu0 0
  %4006 = vmatpush1.bf16.msra.mxu0 %v2900
  %4007 = vmatprep.subr.bf16.mxu0 0
  %4008 = vmatpush1.bf16.msra.mxu0 %v2907
  %4009 = vmatprep.subr.bf16.mxu0 0
  %4010 = vmatpush1.bf16.msra.mxu0 %v2914
  %4011 = vmatprep.subr.bf16.mxu0 0
  %4012 = vmatpush1.bf16.msra.mxu0 %v2921
  %4013 = vmatprep.subr.bf16.mxu0 0
  %4014 = vmatpush1.bf16.msra.mxu0 %v2928
  %4015 = vmatprep.subr.bf16.mxu0 0
  %4016 = vmatpush1.bf16.msra.mxu0 %v2935
  %4017 = vmatprep.subr.bf16.mxu0 0
  %4018 = vmatpush1.bf16.msra.mxu0 %v2942
  %4019 = vmatprep.subr.bf16.mxu0 0
  %4020 = vmatpush1.bf16.msra.mxu0 %v2949
  %4021 = vmatprep.subr.bf16.mxu0 0
  %4022 = vmatpush1.bf16.msra.mxu0 %v2956
  %4023 = vmatprep.subr.bf16.mxu0 0
  %4024 = vmatpush1.bf16.msra.mxu0 %v2963
  %4025 = vmatprep.subr.bf16.mxu0 0
  %4026 = vmatpush1.bf16.msra.mxu0 %v2970
  %4027 = vmatprep.subr.bf16.mxu0 0
  %4028 = vmatpush1.bf16.msra.mxu0 %v2977
  %4029 = vmatprep.subr.bf16.mxu0 0
  %4030 = vmatpush1.bf16.msra.mxu0 %v2984
  %4031 = vmatprep.subr.bf16.mxu0 0
  %4032 = vmatpush1.bf16.msra.mxu0 %v2991
  %4033 = vmatprep.subr.bf16.mxu0 0
  %4034 = vmatpush1.bf16.msra.mxu0 %v2998
  %4035 = vmatprep.subr.bf16.mxu0 0
  %4036 = vmatpush1.bf16.msra.mxu0 %v3005
  %4037 = vmatprep.mubr.bf16.mxu0 %v1756
  %4038 = vmatmul.mubr.bf16.gmra.mrb[0].mxu0 %v1755
  %v4039 = vpop.f32.mrb[0].mxu0
  %v4040 = vadd.f32 %v3943, %v4039
  %v4041 = vpop.f32.mrb[0].mxu0
  %v4042 = vpop.f32.mrb[0].mxu0
  %v4043 = vadd.f32 %v3946, %v4042
  %v4044 = vpop.f32.mrb[0].mxu0
  %4045 = vmatprep.mubr.bf16.mxu0 %v1760
  %4046 = vmatmul.mubr.bf16.gmra.mrb[0].mxu0 %v1759
  %v4047 = vpop.f32.mrb[0].mxu0
  %v4048 = vadd.f32 %v3951, %v4047
  %v4049 = vpop.f32.mrb[0].mxu0
  %v4050 = vpop.f32.mrb[0].mxu0
  %v4051 = vadd.f32 %v3954, %v4050
  %v4052 = vpop.f32.mrb[0].mxu0
  %4053 = vmatprep.mubr.bf16.mxu0 %v1764
  %4054 = vmatmul.mubr.bf16.gmra.mrb[0].mxu0 %v1763
  %v4055 = vpop.f32.mrb[0].mxu0
  %v4056 = vadd.f32 %v3959, %v4055
  %v4057 = vpop.f32.mrb[0].mxu0
  %v4058 = vpop.f32.mrb[0].mxu0
  %v4059 = vadd.f32 %v3962, %v4058
  %v4060 = vpop.f32.mrb[0].mxu0
  %4061 = vmatprep.mubr.bf16.mxu0 %v1768
  %4062 = vmatmul.mubr.bf16.gmra.mrb[0].mxu0 %v1767
  %v4063 = vpop.f32.mrb[0].mxu0
  %v4064 = vadd.f32 %v3967, %v4063
  %v4065 = vpop.f32.mrb[0].mxu0
  %v4066 = vpop.f32.mrb[0].mxu0
  %v4067 = vadd.f32 %v3970, %v4066
  %v4068 = vpop.f32.mrb[0].mxu0
  %4069 = vmatprep.mubr.bf16.mxu0 %v1772
  %4070 = vmatmul.mubr.bf16.gmra.mrb[0].mxu0 %v1771
  %v4071 = vpop.f32.mrb[0].mxu0
  %v4072 = vadd.f32 %v3975, %v4071
  %v4073 = vpop.f32.mrb[0].mxu0
  %v4074 = vpop.f32.mrb[0].mxu0
  %v4075 = vadd.f32 %v3978, %v4074
  %v4076 = vpop.f32.mrb[0].mxu0
  %4077 = vmatprep.mubr.bf16.mxu0 %v1776
  %4078 = vmatmul.mubr.bf16.gmra.mrb[0].mxu0 %v1775
  %v4079 = vpop.f32.mrb[0].mxu0
  %v4080 = vadd.f32 %v3983, %v4079
  %v4081 = vpop.f32.mrb[0].mxu0
  %v4082 = vpop.f32.mrb[0].mxu0
  %v4083 = vadd.f32 %v3986, %v4082
  %v4084 = vpop.f32.mrb[0].mxu0
  %4085 = vmatprep.mubr.bf16.mxu0 %v1780
  %4086 = vmatmul.mubr.bf16.gmra.mrb[0].mxu0 %v1779
  %v4087 = vpop.f32.mrb[0].mxu0
  %v4088 = vadd.f32 %v3991, %v4087
  %v4089 = vpop.f32.mrb[0].mxu0
  %v4090 = vpop.f32.mrb[0].mxu0
  %v4091 = vadd.f32 %v3994, %v4090
  %v4092 = vpop.f32.mrb[0].mxu0
  %4093 = vmatprep.mubr.bf16.mxu0 %v1784
  %4094 = vmatmul.mubr.bf16.gmra.mrb[0].mxu0 %v1783
  %v4095 = vpop.f32.mrb[0].mxu0
  %v4096 = vadd.f32 %v3999, %v4095
  %v4097 = vpop.f32.mrb[0].mxu0
  %v4098 = vpop.f32.mrb[0].mxu0
  %v4099 = vadd.f32 %v4002, %v4098
  %v4100 = vpop.f32.mrb[0].mxu0
  %4101 = vdwg.mxu0
  %v4102 = vxor.u32 %v3378, 2147483648
  %v4103 = vxor.u32 %v3380, 2147483648
  %v4104 = vxor.u32 %v3604, 2147483648
  %v4105 = vxor.u32 %v3606, 2147483648
  %v4106 = vxor.u32 %v3830, 2147483648
  %v4107 = vxor.u32 %v3832, 2147483648
  %v4108 = vxor.u32 %v4040, 2147483648
  %v4109 = vxor.u32 %v3382, 2147483648
  %v4110 = vxor.u32 %v3384, 2147483648
  %v4111 = vxor.u32 %v3608, 2147483648
  %v4112 = vxor.u32 %v3610, 2147483648
  %v4113 = vxor.u32 %v3834, 2147483648
  %v4114 = vxor.u32 %v3836, 2147483648
  %v4115 = vxor.u32 %v4043, 2147483648
  %v4116 = vxor.u32 %v3388, 2147483648
  %v4117 = vxor.u32 %v3390, 2147483648
  %v4118 = vxor.u32 %v3614, 2147483648
  %v4119 = vxor.u32 %v3616, 2147483648
  %v4120 = vxor.u32 %v3840, 2147483648
  %v4121 = vxor.u32 %v3842, 2147483648
  %v4122 = vxor.u32 %v4048, 2147483648
  %v4123 = vxor.u32 %v3392, 2147483648
  %v4124 = vxor.u32 %v3394, 2147483648
  %v4125 = vxor.u32 %v3618, 2147483648
  %v4126 = vxor.u32 %v3620, 2147483648
  %v4127 = vxor.u32 %v3844, 2147483648
  %v4128 = vxor.u32 %v3846, 2147483648
  %v4129 = vxor.u32 %v4051, 2147483648
  %v4130 = vxor.u32 %v3398, 2147483648
  %v4131 = vxor.u32 %v3400, 2147483648
  %v4132 = vxor.u32 %v3624, 2147483648
  %v4133 = vxor.u32 %v3626, 2147483648
  %v4134 = vxor.u32 %v3850, 2147483648
  %v4135 = vxor.u32 %v3852, 2147483648
  %v4136 = vxor.u32 %v4056, 2147483648
  %v4137 = vxor.u32 %v3402, 2147483648
  %v4138 = vxor.u32 %v3404, 2147483648
  %v4139 = vxor.u32 %v3628, 2147483648
  %v4140 = vxor.u32 %v3630, 2147483648
  %v4141 = vxor.u32 %v3854, 2147483648
  %v4142 = vxor.u32 %v3856, 2147483648
  %v4143 = vxor.u32 %v4059, 2147483648
  %v4144 = vxor.u32 %v3408, 2147483648
  %v4145 = vxor.u32 %v3410, 2147483648
  %v4146 = vxor.u32 %v3634, 2147483648
  %v4147 = vxor.u32 %v3636, 2147483648
  %v4148 = vxor.u32 %v3860, 2147483648
  %v4149 = vxor.u32 %v3862, 2147483648
  %v4150 = vxor.u32 %v4064, 2147483648
  %v4151 = vxor.u32 %v3412, 2147483648
  %v4152 = vxor.u32 %v3414, 2147483648
  %v4153 = vxor.u32 %v3638, 2147483648
  %v4154 = vxor.u32 %v3640, 2147483648
  %v4155 = vxor.u32 %v3864, 2147483648
  %v4156 = vxor.u32 %v3866, 2147483648
  %v4157 = vxor.u32 %v4067, 2147483648
  %v4158 = vxor.u32 %v3418, 2147483648
  %v4159 = vxor.u32 %v3420, 2147483648
  %v4160 = vxor.u32 %v3644, 2147483648
  %v4161 = vxor.u32 %v3646, 2147483648
  %v4162 = vxor.u32 %v3870, 2147483648
  %v4163 = vxor.u32 %v3872, 2147483648
  %v4164 = vxor.u32 %v4072, 2147483648
  %v4165 = vxor.u32 %v3422, 2147483648
  %v4166 = vxor.u32 %v3424, 2147483648
  %v4167 = vxor.u32 %v3648, 2147483648
  %v4168 = vxor.u32 %v3650, 2147483648
  %v4169 = vxor.u32 %v3874, 2147483648
  %v4170 = vxor.u32 %v3876, 2147483648
  %v4171 = vxor.u32 %v4075, 2147483648
  %v4172 = vxor.u32 %v3428, 2147483648
  %v4173 = vxor.u32 %v3430, 2147483648
  %v4174 = vxor.u32 %v3654, 2147483648
  %v4175 = vxor.u32 %v3656, 2147483648
  %v4176 = vxor.u32 %v3880, 2147483648
  %v4177 = vxor.u32 %v3882, 2147483648
  %v4178 = vxor.u32 %v4080, 2147483648
  %v4179 = vxor.u32 %v3432, 2147483648
  %v4180 = vxor.u32 %v3434, 2147483648
  %v4181 = vxor.u32 %v3658, 2147483648
  %v4182 = vxor.u32 %v3660, 2147483648
  %v4183 = vxor.u32 %v3884, 2147483648
  %v4184 = vxor.u32 %v3886, 2147483648
  %v4185 = vxor.u32 %v4083, 2147483648
  %v4186 = vxor.u32 %v3438, 2147483648
  %v4187 = vxor.u32 %v3440, 2147483648
  %v4188 = vxor.u32 %v3664, 2147483648
  %v4189 = vxor.u32 %v3666, 2147483648
  %v4190 = vxor.u32 %v3890, 2147483648
  %v4191 = vxor.u32 %v3892, 2147483648
  %v4192 = vxor.u32 %v4088, 2147483648
  %v4193 = vxor.u32 %v3442, 2147483648
  %v4194 = vxor.u32 %v3444, 2147483648
  %v4195 = vxor.u32 %v3668, 2147483648
  %v4196 = vxor.u32 %v3670, 2147483648
  %v4197 = vxor.u32 %v3894, 2147483648
  %v4198 = vxor.u32 %v3896, 2147483648
  %v4199 = vxor.u32 %v4091, 2147483648
  %v4200 = vxor.u32 %v3448, 2147483648
  %v4201 = vxor.u32 %v3450, 2147483648
  %v4202 = vxor.u32 %v3674, 2147483648
  %v4203 = vxor.u32 %v3676, 2147483648
  %v4204 = vxor.u32 %v3900, 2147483648
  %v4205 = vxor.u32 %v3902, 2147483648
  %v4206 = vxor.u32 %v4096, 2147483648
  %v4207 = vxor.u32 %v3452, 2147483648
  %v4208 = vxor.u32 %v3454, 2147483648
  %v4209 = vxor.u32 %v3678, 2147483648
  %v4210 = vxor.u32 %v3680, 2147483648
  %v4211 = vxor.u32 %v3904, 2147483648
  %v4212 = vxor.u32 %v3906, 2147483648
  %v4213 = vxor.u32 %v4099, 2147483648
  %v4214 = vmul.f32 %v4102, 1.442695
  %v4215 = vpow.pop %v4214
  %v4216 = vmul.f32 %v4103, 1.442695
  %v4217 = vpow.pop %v4216
  %v4218 = vmul.f32 %v4104, 1.442695
  %v4219 = vpow.pop %v4218
  %v4220 = vmul.f32 %v4105, 1.442695
  %v4221 = vpow.pop %v4220
  %v4222 = vmul.f32 %v4106, 1.442695
  %v4223 = vpow.pop %v4222
  %v4224 = vmul.f32 %v4107, 1.442695
  %v4225 = vpow.pop %v4224
  %v4226 = vmul.f32 %v4108, 1.442695
  %v4227 = vpow.pop %v4226
  %v4228 = vmul.f32 %v4109, 1.442695
  %v4229 = vpow.pop %v4228
  %v4230 = vmul.f32 %v4110, 1.442695
  %v4231 = vpow.pop %v4230
  %v4232 = vmul.f32 %v4111, 1.442695
  %v4233 = vpow.pop %v4232
  %v4234 = vmul.f32 %v4112, 1.442695
  %v4235 = vpow.pop %v4234
  %v4236 = vmul.f32 %v4113, 1.442695
  %v4237 = vpow.pop %v4236
  %v4238 = vmul.f32 %v4114, 1.442695
  %v4239 = vpow.pop %v4238
  %v4240 = vmul.f32 %v4115, 1.442695
  %v4241 = vpow.pop %v4240
  %v4242 = vmul.f32 %v4116, 1.442695
  %v4243 = vpow.pop %v4242
  %v4244 = vmul.f32 %v4117, 1.442695
  %v4245 = vpow.pop %v4244
  %v4246 = vmul.f32 %v4118, 1.442695
  %v4247 = vpow.pop %v4246
  %v4248 = vmul.f32 %v4119, 1.442695
  %v4249 = vpow.pop %v4248
  %v4250 = vmul.f32 %v4120, 1.442695
  %v4251 = vpow.pop %v4250
  %v4252 = vmul.f32 %v4121, 1.442695
  %v4253 = vpow.pop %v4252
  %v4254 = vmul.f32 %v4122, 1.442695
  %v4255 = vpow.pop %v4254
  %v4256 = vmul.f32 %v4123, 1.442695
  %v4257 = vpow.pop %v4256
  %v4258 = vmul.f32 %v4124, 1.442695
  %v4259 = vpow.pop %v4258
  %v4260 = vmul.f32 %v4125, 1.442695
  %v4261 = vpow.pop %v4260
  %v4262 = vmul.f32 %v4126, 1.442695
  %v4263 = vpow.pop %v4262
  %v4264 = vmul.f32 %v4127, 1.442695
  %v4265 = vpow.pop %v4264
  %v4266 = vmul.f32 %v4128, 1.442695
  %v4267 = vpow.pop %v4266
  %v4268 = vmul.f32 %v4129, 1.442695
  %v4269 = vpow.pop %v4268
  %v4270 = vmul.f32 %v4130, 1.442695
  %v4271 = vpow.pop %v4270
  %v4272 = vmul.f32 %v4131, 1.442695
  %v4273 = vpow.pop %v4272
  %v4274 = vmul.f32 %v4132, 1.442695
  %v4275 = vpow.pop %v4274
  %v4276 = vmul.f32 %v4133, 1.442695
  %v4277 = vpow.pop %v4276
  %v4278 = vmul.f32 %v4134, 1.442695
  %v4279 = vpow.pop %v4278
  %v4280 = vmul.f32 %v4135, 1.442695
  %v4281 = vpow.pop %v4280
  %v4282 = vmul.f32 %v4136, 1.442695
  %v4283 = vpow.pop %v4282
  %v4284 = vmul.f32 %v4137, 1.442695
  %v4285 = vpow.pop %v4284
  %v4286 = vmul.f32 %v4138, 1.442695
  %v4287 = vpow.pop %v4286
  %v4288 = vmul.f32 %v4139, 1.442695
  %v4289 = vpow.pop %v4288
  %v4290 = vmul.f32 %v4140, 1.442695
  %v4291 = vpow.pop %v4290
  %v4292 = vmul.f32 %v4141, 1.442695
  %v4293 = vpow.pop %v4292
  %v4294 = vmul.f32 %v4142, 1.442695
  %v4295 = vpow.pop %v4294
  %v4296 = vmul.f32 %v4143, 1.442695
  %v4297 = vpow.pop %v4296
  %v4298 = vmul.f32 %v4144, 1.442695
  %v4299 = vpow.pop %v4298
  %v4300 = vmul.f32 %v4145, 1.442695
  %v4301 = vpow.pop %v4300
  %v4302 = vmul.f32 %v4146, 1.442695
  %v4303 = vpow.pop %v4302
  %v4304 = vmul.f32 %v4147, 1.442695
  %v4305 = vpow.pop %v4304
  %v4306 = vmul.f32 %v4148, 1.442695
  %v4307 = vpow.pop %v4306
  %v4308 = vmul.f32 %v4149, 1.442695
  %v4309 = vpow.pop %v4308
  %v4310 = vmul.f32 %v4150, 1.442695
  %v4311 = vpow.pop %v4310
  %v4312 = vmul.f32 %v4151, 1.442695
  %v4313 = vpow.pop %v4312
  %v4314 = vmul.f32 %v4152, 1.442695
  %v4315 = vpow.pop %v4314
  %v4316 = vmul.f32 %v4153, 1.442695
  %v4317 = vpow.pop %v4316
  %v4318 = vmul.f32 %v4154, 1.442695
  %v4319 = vpow.pop %v4318
  %v4320 = vmul.f32 %v4155, 1.442695
  %v4321 = vpow.pop %v4320
  %v4322 = vmul.f32 %v4156, 1.442695
  %v4323 = vpow.pop %v4322
  %v4324 = vmul.f32 %v4157, 1.442695
  %v4325 = vpow.pop %v4324
  %v4326 = vmul.f32 %v4158, 1.442695
  %v4327 = vpow.pop %v4326
  %v4328 = vmul.f32 %v4159, 1.442695
  %v4329 = vpow.pop %v4328
  %v4330 = vmul.f32 %v4160, 1.442695
  %v4331 = vpow.pop %v4330
  %v4332 = vmul.f32 %v4161, 1.442695
  %v4333 = vpow.pop %v4332
  %v4334 = vmul.f32 %v4162, 1.442695
  %v4335 = vpow.pop %v4334
  %v4336 = vmul.f32 %v4163, 1.442695
  %v4337 = vpow.pop %v4336
  %v4338 = vmul.f32 %v4164, 1.442695
  %v4339 = vpow.pop %v4338
  %v4340 = vmul.f32 %v4165, 1.442695
  %v4341 = vpow.pop %v4340
  %v4342 = vmul.f32 %v4166, 1.442695
  %v4343 = vpow.pop %v4342
  %v4344 = vmul.f32 %v4167, 1.442695
  %v4345 = vpow.pop %v4344
  %v4346 = vmul.f32 %v4168, 1.442695
  %v4347 = vpow.pop %v4346
  %v4348 = vmul.f32 %v4169, 1.442695
  %v4349 = vpow.pop %v4348
  %v4350 = vmul.f32 %v4170, 1.442695
  %v4351 = vpow.pop %v4350
  %v4352 = vmul.f32 %v4171, 1.442695
  %v4353 = vpow.pop %v4352
  %v4354 = vmul.f32 %v4172, 1.442695
  %v4355 = vpow.pop %v4354
  %v4356 = vmul.f32 %v4173, 1.442695
  %v4357 = vpow.pop %v4356
  %v4358 = vmul.f32 %v4174, 1.442695
  %v4359 = vpow.pop %v4358
  %v4360 = vmul.f32 %v4175, 1.442695
  %v4361 = vpow.pop %v4360
  %v4362 = vmul.f32 %v4176, 1.442695
  %v4363 = vpow.pop %v4362
  %v4364 = vmul.f32 %v4177, 1.442695
  %v4365 = vpow.pop %v4364
  %v4366 = vmul.f32 %v4178, 1.442695
  %v4367 = vpow.pop %v4366
  %v4368 = vmul.f32 %v4179, 1.442695
  %v4369 = vpow.pop %v4368
  %v4370 = vmul.f32 %v4180, 1.442695
  %v4371 = vpow.pop %v4370
  %v4372 = vmul.f32 %v4181, 1.442695
  %v4373 = vpow.pop %v4372
  %v4374 = vmul.f32 %v4182, 1.442695
  %v4375 = vpow.pop %v4374
  %v4376 = vmul.f32 %v4183, 1.442695
  %v4377 = vpow.pop %v4376
  %v4378 = vmul.f32 %v4184, 1.442695
  %v4379 = vpow.pop %v4378
  %v4380 = vmul.f32 %v4185, 1.442695
  %v4381 = vpow.pop %v4380
  %v4382 = vmul.f32 %v4186, 1.442695
  %v4383 = vpow.pop %v4382
  %v4384 = vmul.f32 %v4187, 1.442695
  %v4385 = vpow.pop %v4384
  %v4386 = vmul.f32 %v4188, 1.442695
  %v4387 = vpow.pop %v4386
  %v4388 = vmul.f32 %v4189, 1.442695
  %v4389 = vpow.pop %v4388
  %v4390 = vmul.f32 %v4190, 1.442695
  %v4391 = vpow.pop %v4390
  %v4392 = vmul.f32 %v4191, 1.442695
  %v4393 = vpow.pop %v4392
  %v4394 = vmul.f32 %v4192, 1.442695
  %v4395 = vpow.pop %v4394
  %v4396 = vmul.f32 %v4193, 1.442695
  %v4397 = vpow.pop %v4396
  %v4398 = vmul.f32 %v4194, 1.442695
  %v4399 = vpow.pop %v4398
  %v4400 = vmul.f32 %v4195, 1.442695
  %v4401 = vpow.pop %v4400
  %v4402 = vmul.f32 %v4196, 1.442695
  %v4403 = vpow.pop %v4402
  %v4404 = vmul.f32 %v4197, 1.442695
  %v4405 = vpow.pop %v4404
  %v4406 = vmul.f32 %v4198, 1.442695
  %v4407 = vpow.pop %v4406
  %v4408 = vmul.f32 %v4199, 1.442695
  %v4409 = vpow.pop %v4408
  %v4410 = vmul.f32 %v4200, 1.442695
  %v4411 = vpow.pop %v4410
  %v4412 = vmul.f32 %v4201, 1.442695
  %v4413 = vpow.pop %v4412
  %v4414 = vmul.f32 %v4202, 1.442695
  %v4415 = vpow.pop %v4414
  %v4416 = vmul.f32 %v4203, 1.442695
  %v4417 = vpow.pop %v4416
  %v4418 = vmul.f32 %v4204, 1.442695
  %v4419 = vpow.pop %v4418
  %v4420 = vmul.f32 %v4205, 1.442695
  %v4421 = vpow.pop %v4420
  %v4422 = vmul.f32 %v4206, 1.442695
  %v4423 = vpow.pop %v4422
  %v4424 = vmul.f32 %v4207, 1.442695
  %v4425 = vpow.pop %v4424
  %v4426 = vmul.f32 %v4208, 1.442695
  %v4427 = vpow.pop %v4426
  %v4428 = vmul.f32 %v4209, 1.442695
  %v4429 = vpow.pop %v4428
  %v4430 = vmul.f32 %v4210, 1.442695
  %v4431 = vpow.pop %v4430
  %v4432 = vmul.f32 %v4211, 1.442695
  %v4433 = vpow.pop %v4432
  %v4434 = vmul.f32 %v4212, 1.442695
  %v4435 = vpow.pop %v4434
  %v4436 = vmul.f32 %v4213, 1.442695
  %v4437 = vpow.pop %v4436
  %v4438 = vadd.f32 %v4215, 1.0
  %v4439 = vadd.f32 %v4217, 1.0
  %v4440 = vadd.f32 %v4219, 1.0
  %v4441 = vadd.f32 %v4221, 1.0
  %v4442 = vadd.f32 %v4223, 1.0
  %v4443 = vadd.f32 %v4225, 1.0
  %v4444 = vadd.f32 %v4227, 1.0
  %v4445 = vadd.f32 %v4229, 1.0
  %v4446 = vadd.f32 %v4231, 1.0
  %v4447 = vadd.f32 %v4233, 1.0
  %v4448 = vadd.f32 %v4235, 1.0
  %v4449 = vadd.f32 %v4237, 1.0
  %v4450 = vadd.f32 %v4239, 1.0
  %v4451 = vadd.f32 %v4241, 1.0
  %v4452 = vadd.f32 %v4243, 1.0
  %v4453 = vadd.f32 %v4245, 1.0
  %v4454 = vadd.f32 %v4247, 1.0
  %v4455 = vadd.f32 %v4249, 1.0
  %v4456 = vadd.f32 %v4251, 1.0
  %v4457 = vadd.f32 %v4253, 1.0
  %v4458 = vadd.f32 %v4255, 1.0
  %v4459 = vadd.f32 %v4257, 1.0
  %v4460 = vadd.f32 %v4259, 1.0
  %v4461 = vadd.f32 %v4261, 1.0
  %v4462 = vadd.f32 %v4263, 1.0
  %v4463 = vadd.f32 %v4265, 1.0
  %v4464 = vadd.f32 %v4267, 1.0
  %v4465 = vadd.f32 %v4269, 1.0
  %v4466 = vadd.f32 %v4271, 1.0
  %v4467 = vadd.f32 %v4273, 1.0
  %v4468 = vadd.f32 %v4275, 1.0
  %v4469 = vadd.f32 %v4277, 1.0
  %v4470 = vadd.f32 %v4279, 1.0
  %v4471 = vadd.f32 %v4281, 1.0
  %v4472 = vadd.f32 %v4283, 1.0
  %v4473 = vadd.f32 %v4285, 1.0
  %v4474 = vadd.f32 %v4287, 1.0
  %v4475 = vadd.f32 %v4289, 1.0
  %v4476 = vadd.f32 %v4291, 1.0
  %v4477 = vadd.f32 %v4293, 1.0
  %v4478 = vadd.f32 %v4295, 1.0
  %v4479 = vadd.f32 %v4297, 1.0
  %v4480 = vadd.f32 %v4299, 1.0
  %v4481 = vadd.f32 %v4301, 1.0
  %v4482 = vadd.f32 %v4303, 1.0
  %v4483 = vadd.f32 %v4305, 1.0
  %v4484 = vadd.f32 %v4307, 1.0
  %v4485 = vadd.f32 %v4309, 1.0
  %v4486 = vadd.f32 %v4311, 1.0
  %v4487 = vadd.f32 %v4313, 1.0
  %v4488 = vadd.f32 %v4315, 1.0
  %v4489 = vadd.f32 %v4317, 1.0
  %v4490 = vadd.f32 %v4319, 1.0
  %v4491 = vadd.f32 %v4321, 1.0
  %v4492 = vadd.f32 %v4323, 1.0
  %v4493 = vadd.f32 %v4325, 1.0
  %v4494 = vadd.f32 %v4327, 1.0
  %v4495 = vadd.f32 %v4329, 1.0
  %v4496 = vadd.f32 %v4331, 1.0
  %v4497 = vadd.f32 %v4333, 1.0
  %v4498 = vadd.f32 %v4335, 1.0
  %v4499 = vadd.f32 %v4337, 1.0
  %v4500 = vadd.f32 %v4339, 1.0
  %v4501 = vadd.f32 %v4341, 1.0
  %v4502 = vadd.f32 %v4343, 1.0
  %v4503 = vadd.f32 %v4345, 1.0
  %v4504 = vadd.f32 %v4347, 1.0
  %v4505 = vadd.f32 %v4349, 1.0
  %v4506 = vadd.f32 %v4351, 1.0
  %v4507 = vadd.f32 %v4353, 1.0
  %v4508 = vadd.f32 %v4355, 1.0
  %v4509 = vadd.f32 %v4357, 1.0
  %v4510 = vadd.f32 %v4359, 1.0
  %v4511 = vadd.f32 %v4361, 1.0
  %v4512 = vadd.f32 %v4363, 1.0
  %v4513 = vadd.f32 %v4365, 1.0
  %v4514 = vadd.f32 %v4367, 1.0
  %v4515 = vadd.f32 %v4369, 1.0
  %v4516 = vadd.f32 %v4371, 1.0
  %v4517 = vadd.f32 %v4373, 1.0
  %v4518 = vadd.f32 %v4375, 1.0
  %v4519 = vadd.f32 %v4377, 1.0
  %v4520 = vadd.f32 %v4379, 1.0
  %v4521 = vadd.f32 %v4381, 1.0
  %v4522 = vadd.f32 %v4383, 1.0
  %v4523 = vadd.f32 %v4385, 1.0
  %v4524 = vadd.f32 %v4387, 1.0
  %v4525 = vadd.f32 %v4389, 1.0
  %v4526 = vadd.f32 %v4391, 1.0
  %v4527 = vadd.f32 %v4393, 1.0
  %v4528 = vadd.f32 %v4395, 1.0
  %v4529 = vadd.f32 %v4397, 1.0
  %v4530 = vadd.f32 %v4399, 1.0
  %v4531 = vadd.f32 %v4401, 1.0
  %v4532 = vadd.f32 %v4403, 1.0
  %v4533 = vadd.f32 %v4405, 1.0
  %v4534 = vadd.f32 %v4407, 1.0
  %v4535 = vadd.f32 %v4409, 1.0
  %v4536 = vadd.f32 %v4411, 1.0
  %v4537 = vadd.f32 %v4413, 1.0
  %v4538 = vadd.f32 %v4415, 1.0
  %v4539 = vadd.f32 %v4417, 1.0
  %v4540 = vadd.f32 %v4419, 1.0
  %v4541 = vadd.f32 %v4421, 1.0
  %v4542 = vadd.f32 %v4423, 1.0
  %v4543 = vadd.f32 %v4425, 1.0
  %v4544 = vadd.f32 %v4427, 1.0
  %v4545 = vadd.f32 %v4429, 1.0
  %v4546 = vadd.f32 %v4431, 1.0
  %v4547 = vadd.f32 %v4433, 1.0
  %v4548 = vadd.f32 %v4435, 1.0
  %v4549 = vadd.f32 %v4437, 1.0
  %v4550 = vrcp.pop %v4438
  %v4551 = vmul.f32 1.0, %v4550
  %v4552 = vrcp.pop %v4439
  %v4553 = vmul.f32 1.0, %v4552
  %v4554 = vrcp.pop %v4440
  %v4555 = vmul.f32 1.0, %v4554
  %v4556 = vrcp.pop %v4441
  %v4557 = vmul.f32 1.0, %v4556
  %v4558 = vrcp.pop %v4442
  %v4559 = vmul.f32 1.0, %v4558
  %v4560 = vrcp.pop %v4443
  %v4561 = vmul.f32 1.0, %v4560
  %v4562 = vrcp.pop %v4444
  %v4563 = vmul.f32 1.0, %v4562
  %v4564 = vrcp.pop %v4445
  %v4565 = vmul.f32 1.0, %v4564
  %v4566 = vrcp.pop %v4446
  %v4567 = vmul.f32 1.0, %v4566
  %v4568 = vrcp.pop %v4447
  %v4569 = vmul.f32 1.0, %v4568
  %v4570 = vrcp.pop %v4448
  %v4571 = vmul.f32 1.0, %v4570
  %v4572 = vrcp.pop %v4449
  %v4573 = vmul.f32 1.0, %v4572
  %v4574 = vrcp.pop %v4450
  %v4575 = vmul.f32 1.0, %v4574
  %v4576 = vrcp.pop %v4451
  %v4577 = vmul.f32 1.0, %v4576
  %v4578 = vrcp.pop %v4452
  %v4579 = vmul.f32 1.0, %v4578
  %v4580 = vrcp.pop %v4453
  %v4581 = vmul.f32 1.0, %v4580
  %v4582 = vrcp.pop %v4454
  %v4583 = vmul.f32 1.0, %v4582
  %v4584 = vrcp.pop %v4455
  %v4585 = vmul.f32 1.0, %v4584
  %v4586 = vrcp.pop %v4456
  %v4587 = vmul.f32 1.0, %v4586
  %v4588 = vrcp.pop %v4457
  %v4589 = vmul.f32 1.0, %v4588
  %v4590 = vrcp.pop %v4458
  %v4591 = vmul.f32 1.0, %v4590
  %v4592 = vrcp.pop %v4459
  %v4593 = vmul.f32 1.0, %v4592
  %v4594 = vrcp.pop %v4460
  %v4595 = vmul.f32 1.0, %v4594
  %v4596 = vrcp.pop %v4461
  %v4597 = vmul.f32 1.0, %v4596
  %v4598 = vrcp.pop %v4462
  %v4599 = vmul.f32 1.0, %v4598
  %v4600 = vrcp.pop %v4463
  %v4601 = vmul.f32 1.0, %v4600
  %v4602 = vrcp.pop %v4464
  %v4603 = vmul.f32 1.0, %v4602
  %v4604 = vrcp.pop %v4465
  %v4605 = vmul.f32 1.0, %v4604
  %v4606 = vrcp.pop %v4466
  %v4607 = vmul.f32 1.0, %v4606
  %v4608 = vrcp.pop %v4467
  %v4609 = vmul.f32 1.0, %v4608
  %v4610 = vrcp.pop %v4468
  %v4611 = vmul.f32 1.0, %v4610
  %v4612 = vrcp.pop %v4469
  %v4613 = vmul.f32 1.0, %v4612
  %v4614 = vrcp.pop %v4470
  %v4615 = vmul.f32 1.0, %v4614
  %v4616 = vrcp.pop %v4471
  %v4617 = vmul.f32 1.0, %v4616
  %v4618 = vrcp.pop %v4472
  %v4619 = vmul.f32 1.0, %v4618
  %v4620 = vrcp.pop %v4473
  %v4621 = vmul.f32 1.0, %v4620
  %v4622 = vrcp.pop %v4474
  %v4623 = vmul.f32 1.0, %v4622
  %v4624 = vrcp.pop %v4475
  %v4625 = vmul.f32 1.0, %v4624
  %v4626 = vrcp.pop %v4476
  %v4627 = vmul.f32 1.0, %v4626
  %v4628 = vrcp.pop %v4477
  %v4629 = vmul.f32 1.0, %v4628
  %v4630 = vrcp.pop %v4478
  %v4631 = vmul.f32 1.0, %v4630
  %v4632 = vrcp.pop %v4479
  %v4633 = vmul.f32 1.0, %v4632
  %v4634 = vrcp.pop %v4480
  %v4635 = vmul.f32 1.0, %v4634
  %v4636 = vrcp.pop %v4481
  %v4637 = vmul.f32 1.0, %v4636
  %v4638 = vrcp.pop %v4482
  %v4639 = vmul.f32 1.0, %v4638
  %v4640 = vrcp.pop %v4483
  %v4641 = vmul.f32 1.0, %v4640
  %v4642 = vrcp.pop %v4484
  %v4643 = vmul.f32 1.0, %v4642
  %v4644 = vrcp.pop %v4485
  %v4645 = vmul.f32 1.0, %v4644
  %v4646 = vrcp.pop %v4486
  %v4647 = vmul.f32 1.0, %v4646
  %v4648 = vrcp.pop %v4487
  %v4649 = vmul.f32 1.0, %v4648
  %v4650 = vrcp.pop %v4488
  %v4651 = vmul.f32 1.0, %v4650
  %v4652 = vrcp.pop %v4489
  %v4653 = vmul.f32 1.0, %v4652
  %v4654 = vrcp.pop %v4490
  %v4655 = vmul.f32 1.0, %v4654
  %v4656 = vrcp.pop %v4491
  %v4657 = vmul.f32 1.0, %v4656
  %v4658 = vrcp.pop %v4492
  %v4659 = vmul.f32 1.0, %v4658
  %v4660 = vrcp.pop %v4493
  %v4661 = vmul.f32 1.0, %v4660
  %v4662 = vrcp.pop %v4494
  %v4663 = vmul.f32 1.0, %v4662
  %v4664 = vrcp.pop %v4495
  %v4665 = vmul.f32 1.0, %v4664
  %v4666 = vrcp.pop %v4496
  %v4667 = vmul.f32 1.0, %v4666
  %v4668 = vrcp.pop %v4497
  %v4669 = vmul.f32 1.0, %v4668
  %v4670 = vrcp.pop %v4498
  %v4671 = vmul.f32 1.0, %v4670
  %v4672 = vrcp.pop %v4499
  %v4673 = vmul.f32 1.0, %v4672
  %v4674 = vrcp.pop %v4500
  %v4675 = vmul.f32 1.0, %v4674
  %v4676 = vrcp.pop %v4501
  %v4677 = vmul.f32 1.0, %v4676
  %v4678 = vrcp.pop %v4502
  %v4679 = vmul.f32 1.0, %v4678
  %v4680 = vrcp.pop %v4503
  %v4681 = vmul.f32 1.0, %v4680
  %v4682 = vrcp.pop %v4504
  %v4683 = vmul.f32 1.0, %v4682
  %v4684 = vrcp.pop %v4505
  %v4685 = vmul.f32 1.0, %v4684
  %v4686 = vrcp.pop %v4506
  %v4687 = vmul.f32 1.0, %v4686
  %v4688 = vrcp.pop %v4507
  %v4689 = vmul.f32 1.0, %v4688
  %v4690 = vrcp.pop %v4508
  %v4691 = vmul.f32 1.0, %v4690
  %v4692 = vrcp.pop %v4509
  %v4693 = vmul.f32 1.0, %v4692
  %v4694 = vrcp.pop %v4510
  %v4695 = vmul.f32 1.0, %v4694
  %v4696 = vrcp.pop %v4511
  %v4697 = vmul.f32 1.0, %v4696
  %v4698 = vrcp.pop %v4512
  %v4699 = vmul.f32 1.0, %v4698
  %v4700 = vrcp.pop %v4513
  %v4701 = vmul.f32 1.0, %v4700
  %v4702 = vrcp.pop %v4514
  %v4703 = vmul.f32 1.0, %v4702
  %v4704 = vrcp.pop %v4515
  %v4705 = vmul.f32 1.0, %v4704
  %v4706 = vrcp.pop %v4516
  %v4707 = vmul.f32 1.0, %v4706
  %v4708 = vrcp.pop %v4517
  %v4709 = vmul.f32 1.0, %v4708
  %v4710 = vrcp.pop %v4518
  %v4711 = vmul.f32 1.0, %v4710
  %v4712 = vrcp.pop %v4519
  %v4713 = vmul.f32 1.0, %v4712
  %v4714 = vrcp.pop %v4520
  %v4715 = vmul.f32 1.0, %v4714
  %v4716 = vrcp.pop %v4521
  %v4717 = vmul.f32 1.0, %v4716
  %v4718 = vrcp.pop %v4522
  %v4719 = vmul.f32 1.0, %v4718
  %v4720 = vrcp.pop %v4523
  %v4721 = vmul.f32 1.0, %v4720
  %v4722 = vrcp.pop %v4524
  %v4723 = vmul.f32 1.0, %v4722
  %v4724 = vrcp.pop %v4525
  %v4725 = vmul.f32 1.0, %v4724
  %v4726 = vrcp.pop %v4526
  %v4727 = vmul.f32 1.0, %v4726
  %v4728 = vrcp.pop %v4527
  %v4729 = vmul.f32 1.0, %v4728
  %v4730 = vrcp.pop %v4528
  %v4731 = vmul.f32 1.0, %v4730
  %v4732 = vrcp.pop %v4529
  %v4733 = vmul.f32 1.0, %v4732
  %v4734 = vrcp.pop %v4530
  %v4735 = vmul.f32 1.0, %v4734
  %v4736 = vrcp.pop %v4531
  %v4737 = vmul.f32 1.0, %v4736
  %v4738 = vrcp.pop %v4532
  %v4739 = vmul.f32 1.0, %v4738
  %v4740 = vrcp.pop %v4533
  %v4741 = vmul.f32 1.0, %v4740
  %v4742 = vrcp.pop %v4534
  %v4743 = vmul.f32 1.0, %v4742
  %v4744 = vrcp.pop %v4535
  %v4745 = vmul.f32 1.0, %v4744
  %v4746 = vrcp.pop %v4536
  %v4747 = vmul.f32 1.0, %v4746
  %v4748 = vrcp.pop %v4537
  %v4749 = vmul.f32 1.0, %v4748
  %v4750 = vrcp.pop %v4538
  %v4751 = vmul.f32 1.0, %v4750
  %v4752 = vrcp.pop %v4539
  %v4753 = vmul.f32 1.0, %v4752
  %v4754 = vrcp.pop %v4540
  %v4755 = vmul.f32 1.0, %v4754
  %v4756 = vrcp.pop %v4541
  %v4757 = vmul.f32 1.0, %v4756
  %v4758 = vrcp.pop %v4542
  %v4759 = vmul.f32 1.0, %v4758
  %v4760 = vrcp.pop %v4543
  %v4761 = vmul.f32 1.0, %v4760
  %v4762 = vrcp.pop %v4544
  %v4763 = vmul.f32 1.0, %v4762
  %v4764 = vrcp.pop %v4545
  %v4765 = vmul.f32 1.0, %v4764
  %v4766 = vrcp.pop %v4546
  %v4767 = vmul.f32 1.0, %v4766
  %v4768 = vrcp.pop %v4547
  %v4769 = vmul.f32 1.0, %v4768
  %v4770 = vrcp.pop %v4548
  %v4771 = vmul.f32 1.0, %v4770
  %v4772 = vrcp.pop %v4549
  %v4773 = vmul.f32 1.0, %v4772
  %4774 = vst [vmem:[%s7] sm:$0xff] %v4551
  %4775 = vst [vmem:[%s7 + $0x8] sm:$0xff] %v4553
  %4776 = vst [vmem:[%s7 + $0x10] sm:$0xff] %v4555
  %4777 = vst [vmem:[%s7 + $0x18] sm:$0xff] %v4557
  %4778 = vst [vmem:[%s7 + $0x20] sm:$0xff] %v4559
  %4779 = vst [vmem:[%s7 + $0x28] sm:$0xff] %v4561
  %vm4780 = vcmask 130048
  %4781 = vst.msk [vmem:[%s7 + $0x30] sm:$0xff] %vm4780, %v4563
  %4782 = vst [vmem:[%s7 + $0x38] sm:$0xff] %v4565
  %4783 = vst [vmem:[%s7 + $0x40] sm:$0xff] %v4567
  %4784 = vst [vmem:[%s7 + $0x48] sm:$0xff] %v4569
  %4785 = vst [vmem:[%s7 + $0x50] sm:$0xff] %v4571
  %4786 = vst [vmem:[%s7 + $0x58] sm:$0xff] %v4573
  %4787 = vst [vmem:[%s7 + $0x60] sm:$0xff] %v4575
  %4788 = vst.msk [vmem:[%s7 + $0x68] sm:$0xff] %vm4780, %v4577
  %4789 = vst [vmem:[%s7 + $0x70] sm:$0xff] %v4579
  %4790 = vst [vmem:[%s7 + $0x78] sm:$0xff] %v4581
  %4791 = vst [vmem:[%s7 + $0x80] sm:$0xff] %v4583
  %4792 = vst [vmem:[%s7 + $0x88] sm:$0xff] %v4585
  %4793 = vst [vmem:[%s7 + $0x90] sm:$0xff] %v4587
  %4794 = vst [vmem:[%s7 + $0x98] sm:$0xff] %v4589
  %4795 = vst.msk [vmem:[%s7 + $0xa0] sm:$0xff] %vm4780, %v4591
  %4796 = vst [vmem:[%s7 + $0xa8] sm:$0xff] %v4593
  %4797 = vst [vmem:[%s7 + $0xb0] sm:$0xff] %v4595
  %4798 = vst [vmem:[%s7 + $0xb8] sm:$0xff] %v4597
  %4799 = vst [vmem:[%s7 + $0xc0] sm:$0xff] %v4599
  %4800 = vst [vmem:[%s7 + $0xc8] sm:$0xff] %v4601
  %4801 = vst [vmem:[%s7 + $0xd0] sm:$0xff] %v4603
  %4802 = vst.msk [vmem:[%s7 + $0xd8] sm:$0xff] %vm4780, %v4605
  %4803 = vst [vmem:[%s7 + $0xe0] sm:$0xff] %v4607
  %4804 = vst [vmem:[%s7 + $0xe8] sm:$0xff] %v4609
  %4805 = vst [vmem:[%s7 + $0xf0] sm:$0xff] %v4611
  %4806 = vst [vmem:[%s7 + $0xf8] sm:$0xff] %v4613
  %4807 = vst [vmem:[%s7 + $0x100] sm:$0xff] %v4615
  %4808 = vst [vmem:[%s7 + $0x108] sm:$0xff] %v4617
  %4809 = vst.msk [vmem:[%s7 + $0x110] sm:$0xff] %vm4780, %v4619
  %4810 = vst [vmem:[%s7 + $0x118] sm:$0xff] %v4621
  %4811 = vst [vmem:[%s7 + $0x120] sm:$0xff] %v4623
  %4812 = vst [vmem:[%s7 + $0x128] sm:$0xff] %v4625
  %4813 = vst [vmem:[%s7 + $0x130] sm:$0xff] %v4627
  %4814 = vst [vmem:[%s7 + $0x138] sm:$0xff] %v4629
  %4815 = vst [vmem:[%s7 + $0x140] sm:$0xff] %v4631
  %4816 = vst.msk [vmem:[%s7 + $0x148] sm:$0xff] %vm4780, %v4633
  %4817 = vst [vmem:[%s7 + $0x150] sm:$0xff] %v4635
  %4818 = vst [vmem:[%s7 + $0x158] sm:$0xff] %v4637
  %4819 = vst [vmem:[%s7 + $0x160] sm:$0xff] %v4639
  %4820 = vst [vmem:[%s7 + $0x168] sm:$0xff] %v4641
  %4821 = vst [vmem:[%s7 + $0x170] sm:$0xff] %v4643
  %4822 = vst [vmem:[%s7 + $0x178] sm:$0xff] %v4645
  %4823 = vst.msk [vmem:[%s7 + $0x180] sm:$0xff] %vm4780, %v4647
  %4824 = vst [vmem:[%s7 + $0x188] sm:$0xff] %v4649
  %4825 = vst [vmem:[%s7 + $0x190] sm:$0xff] %v4651
  %4826 = vst [vmem:[%s7 + $0x198] sm:$0xff] %v4653
  %4827 = vst [vmem:[%s7 + $0x1a0] sm:$0xff] %v4655
  %4828 = vst [vmem:[%s7 + $0x1a8] sm:$0xff] %v4657
  %4829 = vst [vmem:[%s7 + $0x1b0] sm:$0xff] %v4659
  %4830 = vst.msk [vmem:[%s7 + $0x1b8] sm:$0xff] %vm4780, %v4661
  %4831 = vst [vmem:[%s7 + $0x1c0] sm:$0xff] %v4663
  %4832 = vst [vmem:[%s7 + $0x1c8] sm:$0xff] %v4665
  %4833 = vst [vmem:[%s7 + $0x1d0] sm:$0xff] %v4667
  %4834 = vst [vmem:[%s7 + $0x1d8] sm:$0xff] %v4669
  %4835 = vst [vmem:[%s7 + $0x1e0] sm:$0xff] %v4671
  %4836 = vst [vmem:[%s7 + $0x1e8] sm:$0xff] %v4673
  %4837 = vst.msk [vmem:[%s7 + $0x1f0] sm:$0xff] %vm4780, %v4675
  %4838 = vst [vmem:[%s7 + $0x1f8] sm:$0xff] %v4677
  %4839 = vst [vmem:[%s7 + $0x200] sm:$0xff] %v4679
  %4840 = vst [vmem:[%s7 + $0x208] sm:$0xff] %v4681
  %4841 = vst [vmem:[%s7 + $0x210] sm:$0xff] %v4683
  %4842 = vst [vmem:[%s7 + $0x218] sm:$0xff] %v4685
  %4843 = vst [vmem:[%s7 + $0x220] sm:$0xff] %v4687
  %4844 = vst.msk [vmem:[%s7 + $0x228] sm:$0xff] %vm4780, %v4689
  %4845 = vst [vmem:[%s7 + $0x230] sm:$0xff] %v4691
  %4846 = vst [vmem:[%s7 + $0x238] sm:$0xff] %v4693
  %4847 = vst [vmem:[%s7 + $0x240] sm:$0xff] %v4695
  %4848 = vst [vmem:[%s7 + $0x248] sm:$0xff] %v4697
  %4849 = vst [vmem:[%s7 + $0x250] sm:$0xff] %v4699
  %4850 = vst [vmem:[%s7 + $0x258] sm:$0xff] %v4701
  %4851 = vst.msk [vmem:[%s7 + $0x260] sm:$0xff] %vm4780, %v4703
  %4852 = vst [vmem:[%s7 + $0x268] sm:$0xff] %v4705
  %4853 = vst [vmem:[%s7 + $0x270] sm:$0xff] %v4707
  %4854 = vst [vmem:[%s7 + $0x278] sm:$0xff] %v4709
  %4855 = vst [vmem:[%s7 + $0x280] sm:$0xff] %v4711
  %4856 = vst [vmem:[%s7 + $0x288] sm:$0xff] %v4713
  %4857 = vst [vmem:[%s7 + $0x290] sm:$0xff] %v4715
  %4858 = vst.msk [vmem:[%s7 + $0x298] sm:$0xff] %vm4780, %v4717
  %4859 = vst [vmem:[%s7 + $0x2a0] sm:$0xff] %v4719
  %4860 = vst [vmem:[%s7 + $0x2a8] sm:$0xff] %v4721
  %4861 = vst [vmem:[%s7 + $0x2b0] sm:$0xff] %v4723
  %4862 = vst [vmem:[%s7 + $0x2b8] sm:$0xff] %v4725
  %4863 = vst [vmem:[%s7 + $0x2c0] sm:$0xff] %v4727
  %4864 = vst [vmem:[%s7 + $0x2c8] sm:$0xff] %v4729
  %4865 = vst.msk [vmem:[%s7 + $0x2d0] sm:$0xff] %vm4780, %v4731
  %4866 = vst [vmem:[%s7 + $0x2d8] sm:$0xff] %v4733
  %4867 = vst [vmem:[%s7 + $0x2e0] sm:$0xff] %v4735
  %4868 = vst [vmem:[%s7 + $0x2e8] sm:$0xff] %v4737
  %4869 = vst [vmem:[%s7 + $0x2f0] sm:$0xff] %v4739
  %4870 = vst [vmem:[%s7 + $0x2f8] sm:$0xff] %v4741
  %4871 = vst [vmem:[%s7 + $0x300] sm:$0xff] %v4743
  %4872 = vst.msk [vmem:[%s7 + $0x308] sm:$0xff] %vm4780, %v4745
  %4873 = vst [vmem:[%s7 + $0x310] sm:$0xff] %v4747
  %4874 = vst [vmem:[%s7 + $0x318] sm:$0xff] %v4749
  %4875 = vst [vmem:[%s7 + $0x320] sm:$0xff] %v4751
  %4876 = vst [vmem:[%s7 + $0x328] sm:$0xff] %v4753
  %4877 = vst [vmem:[%s7 + $0x330] sm:$0xff] %v4755
  %4878 = vst [vmem:[%s7 + $0x338] sm:$0xff] %v4757
  %4879 = vst.msk [vmem:[%s7 + $0x340] sm:$0xff] %vm4780, %v4759
  %4880 = vst [vmem:[%s7 + $0x348] sm:$0xff] %v4761
  %4881 = vst [vmem:[%s7 + $0x350] sm:$0xff] %v4763
  %4882 = vst [vmem:[%s7 + $0x358] sm:$0xff] %v4765
  %4883 = vst [vmem:[%s7 + $0x360] sm:$0xff] %v4767
  %4884 = vst [vmem:[%s7 + $0x368] sm:$0xff] %v4769
  %4885 = vst [vmem:[%s7 + $0x370] sm:$0xff] %v4771
  %4886 = vst.msk [vmem:[%s7 + $0x378] sm:$0xff] %vm4780, %v4773
  // Predicated region
  $region30: #{tpu_custom_call.1} parent=0 // pred_check
    _
  $region31: #{tpu_custom_call.1} parent=0 // pred_check_branch
    %4888 = sbr.rel (0) target = $region33
  $region32: #{tpu_custom_call.1} parent=0 // pred_region
    _
  $region33: #{tpu_custom_call.1} parent=0 // pred_fallthru
    _
  // Predicated region
  $region34: #{tpu_custom_call.1} parent=0 // pred_check
    _
  $region35: #{tpu_custom_call.1} parent=0 // pred_check_branch
    %4890 = sbr.rel (0) target = $region37
  $region36: #{tpu_custom_call.1} parent=0 // pred_region
    _
  $region37: #{tpu_custom_call.1} parent=0 // pred_fallthru
    _

</llo_original>
